<compile_context>
chip_gen: v5e
topology: v5e:2x2
jax: 0.10.0
libtpu: 0.0.40
codegen_flags: <defaults>
</compile_context>

<pallas_src>
import functools

import jax
import jax.numpy as jnp
from jax.experimental import pallas as pl
from jax.experimental.pallas import tpu as pltpu

LANE = 128  # lane width used by the punish-map elementwise kernel


# ----------------------------------------------------------------------------
# shared in-kernel helper
# ----------------------------------------------------------------------------
def _accum_s2_taps(x_ref, w_ref, acc_ref, *, wpp, m):
    """acc += sum over the 9 taps of a 3x3 stride-2 conv, as whole-slab matmuls.

    x_ref: (1, 4, Lp, Cin) -- 2x2 parity planes of the zero-padded input, spatial
           dims flattened (plane row stride == wpp).
    For tap (dy, dx) the slab covering every output pixel is the contiguous slice
    plane[2*(dy%2)+(dx%2)][(dy//2)*wpp + dx//2 : ... + m], so each tap is ONE
    (m, Cin) x (Cin, Cout) matmul.  Only one tap weight is live at a time.
    """
    for dy in range(3):
        for dx in range(3):
            plane = 2 * (dy % 2) + (dx % 2)
            off = (dy // 2) * wpp + (dx // 2)
            acc_ref[...] += jnp.dot(
                x_ref[0, plane, off:off + m, :],
                w_ref[3 * dy + dx],
                preferred_element_type=jnp.float32)


# ----------------------------------------------------------------------------
# Pallas kernels
# ----------------------------------------------------------------------------
def _conv3x3_s2_relu_kernel(x_ref, w_ref, b_ref, o_ref, acc_ref, *, wpp, m):
    """3x3 / stride-2 / pad-1 conv + bias + ReLU for one batch element."""
    acc_ref[...] = jnp.zeros_like(acc_ref)
    _accum_s2_taps(x_ref, w_ref, acc_ref, wpp=wpp, m=m)
    out = jnp.maximum(acc_ref[...] + b_ref[...].astype(jnp.float32), 0.0)
    o_ref[0] = out.astype(o_ref.dtype)


def _bb2_dec_head_kernel(x_ref, w2_ref, b2_ref, wd_ref, bd_ref, wh_ref, bh_ref,
                         o_ref, acc2_ref, pad_ref, accd_ref, *, wpd, m, wo):
    """Fused: backbone conv2 (3x3/s2 + ReLU) -> decoder conv (3x3/s1 + ReLU)
    -> 1x1 binarize head -> exact sigmoid, for one batch element.

    wpd : flattened row stride (== parity-plane width == decoder padded width)
    m   : number of flat output positions per image (out_h * wpd)
    wo  : valid output columns per row (columns [wo, wpd) are masked garbage)
    """
    # ---- stage 1: backbone conv2 (stride-2) as 9 whole-slab matmuls ----------
    acc2_ref[...] = jnp.zeros_like(acc2_ref)
    _accum_s2_taps(x_ref, w2_ref, acc2_ref, wpp=wpd, m=m)
    f = jnp.maximum(acc2_ref[...] + b2_ref[...].astype(jnp.float32), 0.0)

    # zero the per-row garbage columns; they land exactly on the decoder's W halo
    row = jax.lax.broadcasted_iota(jnp.int32, f.shape, 0)
    f = jnp.where(row % wpd < wo, f, 0.0).astype(wd_ref.dtype)

    # ---- build the decoder's zero-padded flat input in VMEM ------------------
    # one aligned bulk store at offset `base` (top halo row + left halo column);
    # no per-row scatter, no HBM round trip for the bb2 feature map.
    base = ((wpd + 1 + 7) // 8) * 8           # sublane-aligned store offset
    shift = base - (wpd + 1)
    pad_ref[...] = jnp.zeros_like(pad_ref)
    pad_ref[base:base + m, :] = f

    # ---- stage 2: decoder conv (stride-1) as 9 whole-slab matmuls ------------
    accd_ref[...] = jnp.zeros_like(accd_ref)
    for dy in range(3):
        for dx in range(3):
            off = shift + dy * wpd + dx
            accd_ref[...] += jnp.dot(pad_ref[off:off + m, :], wd_ref[3 * dy + dx],
                                     preferred_element_type=jnp.float32)
    d = jnp.maximum(accd_ref[...] + bd_ref[...].astype(jnp.float32), 0.0)

    # ---- stage 3: 1x1 binarize head + exact sigmoid; store only live channel --
    logits = jnp.dot(d.astype(wh_ref.dtype), wh_ref[...],
                     preferred_element_type=jnp.float32)
    logits = logits + bh_ref[...].astype(jnp.float32)
    prob = 1.0 / (1.0 + jnp.exp(-logits))        # exact sigmoid (exp on EUP)
    o_ref[0] = prob[:, :1].astype(o_ref.dtype)


def _punish_kernel(p_ref, o_ref):
    p = p_ref[...]
    out = jnp.zeros(p.shape, jnp.float32)
    out = jnp.where(p == 2, 1.0, out)
    out = jnp.where(p == 1, 1.25, out)
    out = jnp.where(p == 3, 0.75, out)
    o_ref[...] = out


# ----------------------------------------------------------------------------
# Wrappers (pallas_call setup)
# ----------------------------------------------------------------------------
_COMPILER_PARAMS = pltpu.CompilerParams(
    dimension_semantics=("parallel",),
    vmem_limit_bytes=32 * 1024 * 1024,
)


def _pad_s2d_flatten(x_nhwc, extra_right_w=0):
    """Zero-pad by 1 (plus `extra_right_w` extra cols on the right), split into
    2x2 H/W parity planes (space-to-depth), flatten spatial dims, and pad rows so
    every tap's slab slice stays in bounds.  Returns (planes, wpp, m_out)."""
    n, h, w, c = x_nhwc.shape
    assert h % 2 == 0 and w % 2 == 0 and extra_right_w % 2 == 0
    hp, wp = h + 2, w + 2 + extra_right_w
    xp = jnp.pad(x_nhwc, ((0, 0), (1, 1), (1, 1 + extra_right_w), (0, 0)))
    hpp, wpp = hp // 2, wp // 2
    planes = xp.reshape(n, hpp, 2, wpp, 2, c).transpose(0, 2, 4, 1, 3, 5)
    flat = planes.reshape(n, 4, hpp * wpp, c)
    m_out = (h // 2) * wpp
    need = m_out + wpp + 1                       # worst-case tap offset (dy=2,dx=2)
    lp = ((max(need, hpp * wpp) + 7) // 8) * 8
    flat = jnp.pad(flat, ((0, 0), (0, 0), (0, lp - hpp * wpp), (0, 0)))
    return flat, wpp, m_out


def conv3x3_s2_relu(x_nhwc, w_taps, bias, out_dtype=jnp.bfloat16):
    """3x3 / stride-2 / pad-1 conv + bias + ReLU.

    x: (N, H, W, Cin) bf16; w_taps: (9, Cin, Cout) bf16; bias: (1, Cout) f32.
    Returns (N, H/2, W/2, Cout)."""
    n, h, w, c = x_nhwc.shape
    cout = w_taps.shape[-1]
    flat, wpp, m = _pad_s2d_flatten(x_nhwc, extra_right_w=0)
    lp = flat.shape[2]

    kernel = functools.partial(_conv3x3_s2_relu_kernel, wpp=wpp, m=m)
    out = pl.pallas_call(
        kernel,
        out_shape=jax.ShapeDtypeStruct((n, m, cout), out_dtype),
        grid_spec=pltpu.PrefetchScalarGridSpec(
            num_scalar_prefetch=0,
            grid=(n,),
            in_specs=[
                pl.BlockSpec((1, 4, lp, c), lambda i: (i, 0, 0, 0)),
                pl.BlockSpec(w_taps.shape, lambda i: (0, 0, 0)),
                pl.BlockSpec(bias.shape, lambda i: (0, 0)),
            ],
            out_specs=pl.BlockSpec((1, m, cout), lambda i: (i, 0, 0)),
            scratch_shapes=[pltpu.VMEM((m, cout), jnp.float32)],
        ),
        compiler_params=_COMPILER_PARAMS,
    )(flat, w_taps, bias)
    # unflatten and drop the one per-row garbage column (ow == W/2)
    return out.reshape(n, h // 2, wpp, cout)[:, :, :w // 2, :]


def bb2_dec_head_sigmoid(f_nhwc, w2, b2, wd, bd, wh, bh):
    """Fused backbone conv2 (3x3/s2) + decoder conv (3x3/s1) + 1x1 head + sigmoid.

    f: (N, H, W, C) bf16 backbone-stage-1 features.  Returns the low-resolution
    probability map (N, H/2, W/2) float32 in [0, 1]."""
    n, h, w, c = f_nhwc.shape
    ho, wo = h // 2, w // 2
    # extra_right_w=2 makes the parity-plane width equal the decoder's padded
    # row stride (wo + 2), so bb2's output can be dropped into the decoder's
    # zero-halo layout with a single shifted store inside the kernel.
    flat, wpd, m = _pad_s2d_flatten(f_nhwc, extra_right_w=2)
    lp = flat.shape[2]
    c2, cd = w2.shape[-1], wd.shape[-1]
    base = ((wpd + 1 + 7) // 8) * 8
    lpd = ((max(base + m, (base - wpd - 1) + m + 2 * wpd + 2) + 7) // 8) * 8

    kernel = functools.partial(_bb2_dec_head_kernel, wpd=wpd, m=m, wo=wo)
    out = pl.pallas_call(
        kernel,
        out_shape=jax.ShapeDtypeStruct((n, m, 1), jnp.float32),
        grid_spec=pltpu.PrefetchScalarGridSpec(
            num_scalar_prefetch=0,
            grid=(n,),
            in_specs=[
                pl.BlockSpec((1, 4, lp, c), lambda i: (i, 0, 0, 0)),
                pl.BlockSpec(w2.shape, lambda i: (0, 0, 0)),
                pl.BlockSpec(b2.shape, lambda i: (0, 0)),
                pl.BlockSpec(wd.shape, lambda i: (0, 0, 0)),
                pl.BlockSpec(bd.shape, lambda i: (0, 0)),
                pl.BlockSpec(wh.shape, lambda i: (0, 0)),
                pl.BlockSpec(bh.shape, lambda i: (0, 0)),
            ],
            out_specs=pl.BlockSpec((1, m, 1), lambda i: (i, 0, 0)),
            scratch_shapes=[
                pltpu.VMEM((m, c2), jnp.float32),       # conv2 accumulator
                pltpu.VMEM((lpd, c2), jnp.bfloat16),    # zero-padded decoder input
                pltpu.VMEM((m, cd), jnp.float32),       # decoder accumulator
            ],
        ),
        compiler_params=_COMPILER_PARAMS,
    )(flat, w2, b2, wd, bd, wh, bh)
    # unflatten and drop the two per-row garbage columns
    return out.reshape(n, ho, wpd)[:, :, :wo]


def set_punish_thresh_map(punish, tile_rows=2048):
    """Exact port of SegDetectorModel.set_punish_thresh_map (lane-dense, tiled).

    punish: (b, c, h, w) int -> float32 map with {2->1, 1->1.25, 3->0.75, else 0}.
    """
    b, c, h, w = punish.shape
    total = b * c * h * w
    rows = (total + LANE - 1) // LANE
    rows8 = ((rows + 7) // 8) * 8
    tr = min(tile_rows, rows8)
    rows_p = ((rows8 + tr - 1) // tr) * tr

    flat = punish.reshape(-1).astype(jnp.int32)
    flat = jnp.pad(flat, (0, rows_p * LANE - total))
    p2d = flat.reshape(rows_p, LANE)

    out = pl.pallas_call(
        _punish_kernel,
        out_shape=jax.ShapeDtypeStruct((rows_p, LANE), jnp.float32),
        grid_spec=pltpu.PrefetchScalarGridSpec(
            num_scalar_prefetch=0,
            grid=(rows_p // tr,),
            in_specs=[pl.BlockSpec((tr, LANE), lambda i: (i, 0))],
            out_specs=pl.BlockSpec((tr, LANE), lambda i: (i, 0)),
        ),
        compiler_params=_COMPILER_PARAMS,
    )(p2d)
    return out.reshape(-1)[:total].reshape(b, c, h, w)


# ----------------------------------------------------------------------------
# Plain-JAX glue: upsample / parameter init / forward
# ----------------------------------------------------------------------------
def upsample_nearest_2d(x, factor):
    """Single broadcast+reshape nearest-neighbor upsample of a (N, H, W) map."""
    n, h, w = x.shape
    y = jnp.broadcast_to(x[:, :, None, :, None], (n, h, factor, w, factor))
    return y.reshape(n, h * factor, w * factor)


def init_params(key, cin=4):
    """Deterministic synthetic weights (logical net 4->8->16->8->1, NO 128-padding)."""
    def conv_init(k, kh, kw, ci, co):
        scale = 1.0 / jnp.sqrt(jnp.float32(kh * kw * ci))
        kw_, kb_ = jax.random.split(k)
        wgt = jax.random.normal(kw_, (kh, kw, ci, co), jnp.float32) * scale
        b = jax.random.normal(kb_, (co,), jnp.float32) * 0.01
        return wgt, b

    def as_taps(wgt, b):
        kh, kw, ci, co = wgt.shape
        return (wgt.reshape(kh * kw, ci, co).astype(jnp.bfloat16),
                b.reshape(1, co).astype(jnp.float32))

    keys = jax.random.split(key, 4)
    p = {}
    p["bb1_w"], p["bb1_b"] = as_taps(*conv_init(keys[0], 3, 3, cin, 8))   # /2
    p["bb2_w"], p["bb2_b"] = as_taps(*conv_init(keys[1], 3, 3, 8, 16))    # /4
    p["dec_w"], p["dec_b"] = as_taps(*conv_init(keys[2], 3, 3, 16, 8))    # decoder
    wgt, b = conv_init(keys[3], 1, 1, 8, 1)                               # 1x1 head
    wh = jnp.zeros((8, 8), jnp.float32).at[:, :1].set(wgt.reshape(8, 1))
    bh = jnp.zeros((1, 8), jnp.float32).at[0, 0].set(b[0])
    p["out_w"], p["out_b"] = wh.astype(jnp.bfloat16), bh
    return p


def seg_detector_forward(x_nchw, params):
    """Eval-mode SegDetectorModel.forward: pred = decoder(backbone(image)).

    x: (N, C, H, W) float32 -> prob map (N, 1, H, W) float32 in [0, 1]."""
    x = jnp.transpose(x_nchw, (0, 2, 3, 1)).astype(jnp.bfloat16)           # NHWC bf16

    # backbone stage 1
    f = conv3x3_s2_relu(x, params["bb1_w"], params["bb1_b"])               # (N, H/2, W/2, 8)

    # backbone stage 2 + decoder conv + 1x1 head + sigmoid, fused (low resolution;
    # 1x1 conv + sigmoid commute exactly with nearest upsampling)
    prob_lo = bb2_dec_head_sigmoid(f, params["bb2_w"], params["bb2_b"],
                                   params["dec_w"], params["dec_b"],
                                   params["out_w"], params["out_b"])       # (N, H/4, W/4)

    prob = upsample_nearest_2d(prob_lo, 4)                                 # (N, H, W)
    return prob[:, None, :, :].astype(jnp.float32)                         # NCHW


# ----------------------------------------------------------------------------
# main
# ----------------------------------------------------------------------------
if __name__ == "__main__":
    key = jax.random.PRNGKey(0)
    k_img, k_par, k_pun = jax.random.split(key, 3)

    # small shapes consistent with the module: batch=2, channels=4, spatial=16
    x = jax.random.normal(k_img, (2, 4, 16, 16), jnp.float32)              # NCHW image
    params = init_params(k_par, cin=4)

    fwd = jax.jit(seg_detector_forward)
    pred = jax.block_until_ready(fwd(x, params))
    assert pred.shape == (2, 1, 16, 16)
    assert bool(jnp.all((pred >= 0.0) & (pred <= 1.0)))
    assert bool(jnp.all(jnp.isfinite(pred)))

    # exercise the exactly-specified helper (training-path utility)
    punish = jax.random.randint(k_pun, (2, 1, 16, 16), 0, 4, jnp.int32)
    punish_map = jax.block_until_ready(set_punish_thresh_map(punish))
    assert punish_map.shape == (2, 1, 16, 16)
    expected = jnp.zeros(punish.shape, jnp.float32)
    expected = jnp.where(punish == 2, 1.0, expected)
    expected = jnp.where(punish == 1, 1.25, expected)
    expected = jnp.where(punish == 3, 0.75, expected)
    assert bool(jnp.all(punish_map == expected))

    print("KERNEL_OK")
</pallas_src>

<mosaic_0001>
module attributes {stable_mosaic.version = 11 : i64} {
  func.func @_conv3x3_s2_relu_kernel(%arg0: i32, %arg1: memref<1x4x88x4xbf16, #tpu.memory_space<vmem>>, %arg2: memref<9x4x8xbf16, #tpu.memory_space<vmem>>, %arg3: memref<1x8xf32, #tpu.memory_space<vmem>>, %arg4: memref<1x72x8xbf16, #tpu.memory_space<vmem>>, %arg5: memref<72x8xf32, #tpu.memory_space<vmem>>) attributes {dimension_semantics = [#tpu.dimension_semantics<parallel>], iteration_bounds = array<i64: 2>, scalar_prefetch = 0 : i64, scratch_operands = 1 : i64, tpu.core_type = #tpu.core_type<tc>, window_params = [{transform_indices = @transform_0, window_bounds = array<i64: 1, 4, 88, 4>}, {pipeline_mode = #tpu.pipeline_mode<synchronous>, transform_indices = @transform_1, window_bounds = array<i64: 9, 4, 8>}, {pipeline_mode = #tpu.pipeline_mode<synchronous>, transform_indices = @transform_2, window_bounds = array<i64: 1, 8>}, {transform_indices = @transform_3, window_bounds = array<i64: 1, 72, 8>}]} {
    %cst = arith.constant 0.000000e+00 : f32
    %0 = vector.broadcast %cst : f32 to vector<72x8xf32>
    %c0 = arith.constant 0 : index
    %c0_0 = arith.constant 0 : index
    %1 = vector.load %arg5[%c0, %c0_0] : memref<72x8xf32, #tpu.memory_space<vmem>>, vector<72x8xf32>
    tpu.vector_store %arg5[%c0, %c0_0], %0 {strides = array<i32>} : memref<72x8xf32, #tpu.memory_space<vmem>>, vector<72x8xf32>,
    %c0_1 = arith.constant 0 : index
    %c0_2 = arith.constant 0 : index
    %2 = vector.load %arg5[%c0_1, %c0_2] : memref<72x8xf32, #tpu.memory_space<vmem>>, vector<72x8xf32>
    %c0_3 = arith.constant 0 : index
    %c0_4 = arith.constant 0 : index
    %c0_5 = arith.constant 0 : index
    %c0_6 = arith.constant 0 : index
    %3 = vector.load %arg1[%c0_3, %c0_4, %c0_5, %c0_6] : memref<1x4x88x4xbf16, #tpu.memory_space<vmem>>, vector<1x1x72x4xbf16>
    %4 = vector.shape_cast %3 : vector<1x1x72x4xbf16> to vector<72x4xbf16>
    %c0_7 = arith.constant 0 : index
    %c0_8 = arith.constant 0 : index
    %c0_9 = arith.constant 0 : index
    %5 = vector.load %arg2[%c0_7, %c0_8, %c0_9] : memref<9x4x8xbf16, #tpu.memory_space<vmem>>, vector<1x4x8xbf16>
    %6 = vector.shape_cast %5 : vector<1x4x8xbf16> to vector<4x8xbf16>
    %cst_10 = arith.constant dense<0.000000e+00> : vector<72x8xf32>
    %7 = tpu.matmul %4, %6, %cst_10 {dimension_numbers = #tpu.dot_dimension_numbers<[1], [0], [0], [1], [0, 0, 1, 1], [], []>} : vector<72x4xbf16>, vector<4x8xbf16>, vector<72x8xf32> -> vector<72x8xf32>
    %8 = arith.addf %2, %7 : vector<72x8xf32>
    %c0_11 = arith.constant 0 : index
    %c0_12 = arith.constant 0 : index
    %9 = vector.load %arg5[%c0_11, %c0_12] : memref<72x8xf32, #tpu.memory_space<vmem>>, vector<72x8xf32>
    tpu.vector_store %arg5[%c0_11, %c0_12], %8 {strides = array<i32>} : memref<72x8xf32, #tpu.memory_space<vmem>>, vector<72x8xf32>,
    %c0_13 = arith.constant 0 : index
    %c0_14 = arith.constant 0 : index
    %10 = vector.load %arg5[%c0_13, %c0_14] : memref<72x8xf32, #tpu.memory_space<vmem>>, vector<72x8xf32>
    %c0_15 = arith.constant 0 : index
    %c1 = arith.constant 1 : index
    %c0_16 = arith.constant 0 : index
    %c0_17 = arith.constant 0 : index
    %11 = vector.load %arg1[%c0_15, %c1, %c0_16, %c0_17] : memref<1x4x88x4xbf16, #tpu.memory_space<vmem>>, vector<1x1x72x4xbf16>
    %12 = vector.shape_cast %11 : vector<1x1x72x4xbf16> to vector<72x4xbf16>
    %c1_18 = arith.constant 1 : index
    %c0_19 = arith.constant 0 : index
    %c0_20 = arith.constant 0 : index
    %13 = vector.load %arg2[%c1_18, %c0_19, %c0_20] : memref<9x4x8xbf16, #tpu.memory_space<vmem>>, vector<1x4x8xbf16>
    %14 = vector.shape_cast %13 : vector<1x4x8xbf16> to vector<4x8xbf16>
    %cst_21 = arith.constant dense<0.000000e+00> : vector<72x8xf32>
    %15 = tpu.matmul %12, %14, %cst_21 {dimension_numbers = #tpu.dot_dimension_numbers<[1], [0], [0], [1], [0, 0, 1, 1], [], []>} : vector<72x4xbf16>, vector<4x8xbf16>, vector<72x8xf32> -> vector<72x8xf32>
    %16 = arith.addf %10, %15 : vector<72x8xf32>
    %c0_22 = arith.constant 0 : index
    %c0_23 = arith.constant 0 : index
    %17 = vector.load %arg5[%c0_22, %c0_23] : memref<72x8xf32, #tpu.memory_space<vmem>>, vector<72x8xf32>
    tpu.vector_store %arg5[%c0_22, %c0_23], %16 {strides = array<i32>} : memref<72x8xf32, #tpu.memory_space<vmem>>, vector<72x8xf32>,
    %c0_24 = arith.constant 0 : index
    %c0_25 = arith.constant 0 : index
    %18 = vector.load %arg5[%c0_24, %c0_25] : memref<72x8xf32, #tpu.memory_space<vmem>>, vector<72x8xf32>
    %c0_26 = arith.constant 0 : index
    %c0_27 = arith.constant 0 : index
    %c1_28 = arith.constant 1 : index
    %c0_29 = arith.constant 0 : index
    %19 = vector.load %arg1[%c0_26, %c0_27, %c1_28, %c0_29] : memref<1x4x88x4xbf16, #tpu.memory_space<vmem>>, vector<1x1x72x4xbf16>
    %20 = vector.shape_cast %19 : vector<1x1x72x4xbf16> to vector<72x4xbf16>
    %c2 = arith.constant 2 : index
    %c0_30 = arith.constant 0 : index
    %c0_31 = arith.constant 0 : index
    %21 = vector.load %arg2[%c2, %c0_30, %c0_31] : memref<9x4x8xbf16, #tpu.memory_space<vmem>>, vector<1x4x8xbf16>
    %22 = vector.shape_cast %21 : vector<1x4x8xbf16> to vector<4x8xbf16>
    %cst_32 = arith.constant dense<0.000000e+00> : vector<72x8xf32>
    %23 = tpu.matmul %20, %22, %cst_32 {dimension_numbers = #tpu.dot_dimension_numbers<[1], [0], [0], [1], [0, 0, 1, 1], [], []>} : vector<72x4xbf16>, vector<4x8xbf16>, vector<72x8xf32> -> vector<72x8xf32>
    %24 = arith.addf %18, %23 : vector<72x8xf32>
    %c0_33 = arith.constant 0 : index
    %c0_34 = arith.constant 0 : index
    %25 = vector.load %arg5[%c0_33, %c0_34] : memref<72x8xf32, #tpu.memory_space<vmem>>, vector<72x8xf32>
    tpu.vector_store %arg5[%c0_33, %c0_34], %24 {strides = array<i32>} : memref<72x8xf32, #tpu.memory_space<vmem>>, vector<72x8xf32>,
    %c0_35 = arith.constant 0 : index
    %c0_36 = arith.constant 0 : index
    %26 = vector.load %arg5[%c0_35, %c0_36] : memref<72x8xf32, #tpu.memory_space<vmem>>, vector<72x8xf32>
    %c0_37 = arith.constant 0 : index
    %c2_38 = arith.constant 2 : index
    %c0_39 = arith.constant 0 : index
    %c0_40 = arith.constant 0 : index
    %27 = vector.load %arg1[%c0_37, %c2_38, %c0_39, %c0_40] : memref<1x4x88x4xbf16, #tpu.memory_space<vmem>>, vector<1x1x72x4xbf16>
    %28 = vector.shape_cast %27 : vector<1x1x72x4xbf16> to vector<72x4xbf16>
    %c3 = arith.constant 3 : index
    %c0_41 = arith.constant 0 : index
    %c0_42 = arith.constant 0 : index
    %29 = vector.load %arg2[%c3, %c0_41, %c0_42] : memref<9x4x8xbf16, #tpu.memory_space<vmem>>, vector<1x4x8xbf16>
    %30 = vector.shape_cast %29 : vector<1x4x8xbf16> to vector<4x8xbf16>
    %cst_43 = arith.constant dense<0.000000e+00> : vector<72x8xf32>
    %31 = tpu.matmul %28, %30, %cst_43 {dimension_numbers = #tpu.dot_dimension_numbers<[1], [0], [0], [1], [0, 0, 1, 1], [], []>} : vector<72x4xbf16>, vector<4x8xbf16>, vector<72x8xf32> -> vector<72x8xf32>
    %32 = arith.addf %26, %31 : vector<72x8xf32>
    %c0_44 = arith.constant 0 : index
    %c0_45 = arith.constant 0 : index
    %33 = vector.load %arg5[%c0_44, %c0_45] : memref<72x8xf32, #tpu.memory_space<vmem>>, vector<72x8xf32>
    tpu.vector_store %arg5[%c0_44, %c0_45], %32 {strides = array<i32>} : memref<72x8xf32, #tpu.memory_space<vmem>>, vector<72x8xf32>,
    %c0_46 = arith.constant 0 : index
    %c0_47 = arith.constant 0 : index
    %34 = vector.load %arg5[%c0_46, %c0_47] : memref<72x8xf32, #tpu.memory_space<vmem>>, vector<72x8xf32>
    %c0_48 = arith.constant 0 : index
    %c3_49 = arith.constant 3 : index
    %c0_50 = arith.constant 0 : index
    %c0_51 = arith.constant 0 : index
    %35 = vector.load %arg1[%c0_48, %c3_49, %c0_50, %c0_51] : memref<1x4x88x4xbf16, #tpu.memory_space<vmem>>, vector<1x1x72x4xbf16>
    %36 = vector.shape_cast %35 : vector<1x1x72x4xbf16> to vector<72x4xbf16>
    %c4 = arith.constant 4 : index
    %c0_52 = arith.constant 0 : index
    %c0_53 = arith.constant 0 : index
    %37 = vector.load %arg2[%c4, %c0_52, %c0_53] : memref<9x4x8xbf16, #tpu.memory_space<vmem>>, vector<1x4x8xbf16>
    %38 = vector.shape_cast %37 : vector<1x4x8xbf16> to vector<4x8xbf16>
    %cst_54 = arith.constant dense<0.000000e+00> : vector<72x8xf32>
    %39 = tpu.matmul %36, %38, %cst_54 {dimension_numbers = #tpu.dot_dimension_numbers<[1], [0], [0], [1], [0, 0, 1, 1], [], []>} : vector<72x4xbf16>, vector<4x8xbf16>, vector<72x8xf32> -> vector<72x8xf32>
    %40 = arith.addf %34, %39 : vector<72x8xf32>
    %c0_55 = arith.constant 0 : index
    %c0_56 = arith.constant 0 : index
    %41 = vector.load %arg5[%c0_55, %c0_56] : memref<72x8xf32, #tpu.memory_space<vmem>>, vector<72x8xf32>
    tpu.vector_store %arg5[%c0_55, %c0_56], %40 {strides = array<i32>} : memref<72x8xf32, #tpu.memory_space<vmem>>, vector<72x8xf32>,
    %c0_57 = arith.constant 0 : index
    %c0_58 = arith.constant 0 : index
    %42 = vector.load %arg5[%c0_57, %c0_58] : memref<72x8xf32, #tpu.memory_space<vmem>>, vector<72x8xf32>
    %c0_59 = arith.constant 0 : index
    %c2_60 = arith.constant 2 : index
    %c1_61 = arith.constant 1 : index
    %c0_62 = arith.constant 0 : index
    %43 = vector.load %arg1[%c0_59, %c2_60, %c1_61, %c0_62] : memref<1x4x88x4xbf16, #tpu.memory_space<vmem>>, vector<1x1x72x4xbf16>
    %44 = vector.shape_cast %43 : vector<1x1x72x4xbf16> to vector<72x4xbf16>
    %c5 = arith.constant 5 : index
    %c0_63 = arith.constant 0 : index
    %c0_64 = arith.constant 0 : index
    %45 = vector.load %arg2[%c5, %c0_63, %c0_64] : memref<9x4x8xbf16, #tpu.memory_space<vmem>>, vector<1x4x8xbf16>
    %46 = vector.shape_cast %45 : vector<1x4x8xbf16> to vector<4x8xbf16>
    %cst_65 = arith.constant dense<0.000000e+00> : vector<72x8xf32>
    %47 = tpu.matmul %44, %46, %cst_65 {dimension_numbers = #tpu.dot_dimension_numbers<[1], [0], [0], [1], [0, 0, 1, 1], [], []>} : vector<72x4xbf16>, vector<4x8xbf16>, vector<72x8xf32> -> vector<72x8xf32>
    %48 = arith.addf %42, %47 : vector<72x8xf32>
    %c0_66 = arith.constant 0 : index
    %c0_67 = arith.constant 0 : index
    %49 = vector.load %arg5[%c0_66, %c0_67] : memref<72x8xf32, #tpu.memory_space<vmem>>, vector<72x8xf32>
    tpu.vector_store %arg5[%c0_66, %c0_67], %48 {strides = array<i32>} : memref<72x8xf32, #tpu.memory_space<vmem>>, vector<72x8xf32>,
    %c0_68 = arith.constant 0 : index
    %c0_69 = arith.constant 0 : index
    %50 = vector.load %arg5[%c0_68, %c0_69] : memref<72x8xf32, #tpu.memory_space<vmem>>, vector<72x8xf32>
    %c0_70 = arith.constant 0 : index
    %c0_71 = arith.constant 0 : index
    %c9 = arith.constant 9 : index
    %c0_72 = arith.constant 0 : index
    %51 = vector.load %arg1[%c0_70, %c0_71, %c9, %c0_72] : memref<1x4x88x4xbf16, #tpu.memory_space<vmem>>, vector<1x1x72x4xbf16>
    %52 = vector.shape_cast %51 : vector<1x1x72x4xbf16> to vector<72x4xbf16>
    %c6 = arith.constant 6 : index
    %c0_73 = arith.constant 0 : index
    %c0_74 = arith.constant 0 : index
    %53 = vector.load %arg2[%c6, %c0_73, %c0_74] : memref<9x4x8xbf16, #tpu.memory_space<vmem>>, vector<1x4x8xbf16>
    %54 = vector.shape_cast %53 : vector<1x4x8xbf16> to vector<4x8xbf16>
    %cst_75 = arith.constant dense<0.000000e+00> : vector<72x8xf32>
    %55 = tpu.matmul %52, %54, %cst_75 {dimension_numbers = #tpu.dot_dimension_numbers<[1], [0], [0], [1], [0, 0, 1, 1], [], []>} : vector<72x4xbf16>, vector<4x8xbf16>, vector<72x8xf32> -> vector<72x8xf32>
    %56 = arith.addf %50, %55 : vector<72x8xf32>
    %c0_76 = arith.constant 0 : index
    %c0_77 = arith.constant 0 : index
    %57 = vector.load %arg5[%c0_76, %c0_77] : memref<72x8xf32, #tpu.memory_space<vmem>>, vector<72x8xf32>
    tpu.vector_store %arg5[%c0_76, %c0_77], %56 {strides = array<i32>} : memref<72x8xf32, #tpu.memory_space<vmem>>, vector<72x8xf32>,
    %c0_78 = arith.constant 0 : index
    %c0_79 = arith.constant 0 : index
    %58 = vector.load %arg5[%c0_78, %c0_79] : memref<72x8xf32, #tpu.memory_space<vmem>>, vector<72x8xf32>
    %c0_80 = arith.constant 0 : index
    %c1_81 = arith.constant 1 : index
    %c9_82 = arith.constant 9 : index
    %c0_83 = arith.constant 0 : index
    %59 = vector.load %arg1[%c0_80, %c1_81, %c9_82, %c0_83] : memref<1x4x88x4xbf16, #tpu.memory_space<vmem>>, vector<1x1x72x4xbf16>
    %60 = vector.shape_cast %59 : vector<1x1x72x4xbf16> to vector<72x4xbf16>
    %c7 = arith.constant 7 : index
    %c0_84 = arith.constant 0 : index
    %c0_85 = arith.constant 0 : index
    %61 = vector.load %arg2[%c7, %c0_84, %c0_85] : memref<9x4x8xbf16, #tpu.memory_space<vmem>>, vector<1x4x8xbf16>
    %62 = vector.shape_cast %61 : vector<1x4x8xbf16> to vector<4x8xbf16>
    %cst_86 = arith.constant dense<0.000000e+00> : vector<72x8xf32>
    %63 = tpu.matmul %60, %62, %cst_86 {dimension_numbers = #tpu.dot_dimension_numbers<[1], [0], [0], [1], [0, 0, 1, 1], [], []>} : vector<72x4xbf16>, vector<4x8xbf16>, vector<72x8xf32> -> vector<72x8xf32>
    %64 = arith.addf %58, %63 : vector<72x8xf32>
    %c0_87 = arith.constant 0 : index
    %c0_88 = arith.constant 0 : index
    %65 = vector.load %arg5[%c0_87, %c0_88] : memref<72x8xf32, #tpu.memory_space<vmem>>, vector<72x8xf32>
    tpu.vector_store %arg5[%c0_87, %c0_88], %64 {strides = array<i32>} : memref<72x8xf32, #tpu.memory_space<vmem>>, vector<72x8xf32>,
    %c0_89 = arith.constant 0 : index
    %c0_90 = arith.constant 0 : index
    %66 = vector.load %arg5[%c0_89, %c0_90] : memref<72x8xf32, #tpu.memory_space<vmem>>, vector<72x8xf32>
    %c0_91 = arith.constant 0 : index
    %c0_92 = arith.constant 0 : index
    %c10 = arith.constant 10 : index
    %c0_93 = arith.constant 0 : index
    %67 = vector.load %arg1[%c0_91, %c0_92, %c10, %c0_93] : memref<1x4x88x4xbf16, #tpu.memory_space<vmem>>, vector<1x1x72x4xbf16>
    %68 = vector.shape_cast %67 : vector<1x1x72x4xbf16> to vector<72x4xbf16>
    %c8 = arith.constant 8 : index
    %c0_94 = arith.constant 0 : index
    %c0_95 = arith.constant 0 : index
    %69 = vector.load %arg2[%c8, %c0_94, %c0_95] : memref<9x4x8xbf16, #tpu.memory_space<vmem>>, vector<1x4x8xbf16>
    %70 = vector.shape_cast %69 : vector<1x4x8xbf16> to vector<4x8xbf16>
    %cst_96 = arith.constant dense<0.000000e+00> : vector<72x8xf32>
    %71 = tpu.matmul %68, %70, %cst_96 {dimension_numbers = #tpu.dot_dimension_numbers<[1], [0], [0], [1], [0, 0, 1, 1], [], []>} : vector<72x4xbf16>, vector<4x8xbf16>, vector<72x8xf32> -> vector<72x8xf32>
    %72 = arith.addf %66, %71 : vector<72x8xf32>
    %c0_97 = arith.constant 0 : index
    %c0_98 = arith.constant 0 : index
    %73 = vector.load %arg5[%c0_97, %c0_98] : memref<72x8xf32, #tpu.memory_space<vmem>>, vector<72x8xf32>
    tpu.vector_store %arg5[%c0_97, %c0_98], %72 {strides = array<i32>} : memref<72x8xf32, #tpu.memory_space<vmem>>, vector<72x8xf32>,
    %c0_99 = arith.constant 0 : index
    %c0_100 = arith.constant 0 : index
    %74 = vector.load %arg5[%c0_99, %c0_100] : memref<72x8xf32, #tpu.memory_space<vmem>>, vector<72x8xf32>
    %c0_101 = arith.constant 0 : index
    %c0_102 = arith.constant 0 : index
    %75 = vector.load %arg3[%c0_101, %c0_102] : memref<1x8xf32, #tpu.memory_space<vmem>>, vector<1x8xf32>
    %76 = vector.broadcast %75 : vector<1x8xf32> to vector<72x8xf32>
    %77 = arith.addf %74, %76 : vector<72x8xf32>
    %cst_103 = arith.constant 0.000000e+00 : f32
    %78 = vector.broadcast %cst_103 : f32 to vector<72x8xf32>
    %79 = arith.maximumf %77, %78 : vector<72x8xf32>
    %80 = arith.truncf %79 : vector<72x8xf32> to vector<72x8xbf16>
    %c0_104 = arith.constant 0 : index
    %c0_105 = arith.constant 0 : index
    %c0_106 = arith.constant 0 : index
    %81 = vector.load %arg4[%c0_104, %c0_105, %c0_106] : memref<1x72x8xbf16, #tpu.memory_space<vmem>>, vector<1x72x8xbf16>
    %82 = vector.shape_cast %81 : vector<1x72x8xbf16> to vector<72x8xbf16>
    %83 = vector.shape_cast %80 : vector<72x8xbf16> to vector<1x72x8xbf16>
    tpu.vector_store %arg4[%c0_104, %c0_105, %c0_106], %83 {strides = array<i32>} : memref<1x72x8xbf16, #tpu.memory_space<vmem>>, vector<1x72x8xbf16>,
    return
  }
  func.func @transform_0(%arg0: i32) -> (i32, i32, i32, i32) {
    %c0_i32 = arith.constant 0 : i32
    %c0_i32_0 = arith.constant 0 : i32
    %c0_i32_1 = arith.constant 0 : i32
    %c0_i32_2 = arith.constant 0 : i32
    return %arg0, %c0_i32, %c0_i32_0, %c0_i32_1 : i32, i32, i32, i32
  }
  func.func @transform_1(%arg0: i32) -> (i32, i32, i32) {
    %c0_i32 = arith.constant 0 : i32
    %c0_i32_0 = arith.constant 0 : i32
    %c0_i32_1 = arith.constant 0 : i32
    %c0_i32_2 = arith.constant 0 : i32
    return %c0_i32, %c0_i32_0, %c0_i32_1 : i32, i32, i32
  }
  func.func @transform_2(%arg0: i32) -> (i32, i32) {
    %c0_i32 = arith.constant 0 : i32
    %c0_i32_0 = arith.constant 0 : i32
    %c0_i32_1 = arith.constant 0 : i32
    return %c0_i32, %c0_i32_0 : i32, i32
  }
  func.func @transform_3(%arg0: i32) -> (i32, i32, i32) {
    %c0_i32 = arith.constant 0 : i32
    %c0_i32_0 = arith.constant 0 : i32
    %c0_i32_1 = arith.constant 0 : i32
    return %arg0, %c0_i32, %c0_i32_0 : i32, i32, i32
  }
}

module attributes {stable_mosaic.version = 11 : i64} {
  func.func @_bb2_dec_head_kernel(%arg0: i32, %arg1: memref<1x4x32x8xbf16, #tpu.memory_space<vmem>>, %arg2: memref<9x8x16xbf16, #tpu.memory_space<vmem>>, %arg3: memref<1x16xf32, #tpu.memory_space<vmem>>, %arg4: memref<9x16x8xbf16, #tpu.memory_space<vmem>>, %arg5: memref<1x8xf32, #tpu.memory_space<vmem>>, %arg6: memref<8x8xbf16, #tpu.memory_space<vmem>>, %arg7: memref<1x8xf32, #tpu.memory_space<vmem>>, %arg8: memref<1x24x1xf32, #tpu.memory_space<vmem>>, %arg9: memref<24x16xf32, #tpu.memory_space<vmem>>, %arg10: memref<40x16xbf16, #tpu.memory_space<vmem>>, %arg11: memref<24x8xf32, #tpu.memory_space<vmem>>) attributes {dimension_semantics = [#tpu.dimension_semantics<parallel>], iteration_bounds = array<i64: 2>, scalar_prefetch = 0 : i64, scratch_operands = 3 : i64, tpu.core_type = #tpu.core_type<tc>, window_params = [{transform_indices = @transform_0, window_bounds = array<i64: 1, 4, 32, 8>}, {pipeline_mode = #tpu.pipeline_mode<synchronous>, transform_indices = @transform_1, window_bounds = array<i64: 9, 8, 16>}, {pipeline_mode = #tpu.pipeline_mode<synchronous>, transform_indices = @transform_2, window_bounds = array<i64: 1, 16>}, {pipeline_mode = #tpu.pipeline_mode<synchronous>, transform_indices = @transform_3, window_bounds = array<i64: 9, 16, 8>}, {pipeline_mode = #tpu.pipeline_mode<synchronous>, transform_indices = @transform_4, window_bounds = array<i64: 1, 8>}, {pipeline_mode = #tpu.pipeline_mode<synchronous>, transform_indices = @transform_5, window_bounds = array<i64: 8, 8>}, {pipeline_mode = #tpu.pipeline_mode<synchronous>, transform_indices = @transform_6, window_bounds = array<i64: 1, 8>}, {transform_indices = @transform_7, window_bounds = array<i64: 1, 24, 1>}]} {
    %cst = arith.constant 0.000000e+00 : f32
    %0 = vector.broadcast %cst : f32 to vector<24x16xf32>
    %c0 = arith.constant 0 : index
    %c0_0 = arith.constant 0 : index
    %1 = vector.load %arg9[%c0, %c0_0] : memref<24x16xf32, #tpu.memory_space<vmem>>, vector<24x16xf32>
    tpu.vector_store %arg9[%c0, %c0_0], %0 {strides = array<i32>} : memref<24x16xf32, #tpu.memory_space<vmem>>, vector<24x16xf32>,
    %c0_1 = arith.constant 0 : index
    %c0_2 = arith.constant 0 : index
    %2 = vector.load %arg9[%c0_1, %c0_2] : memref<24x16xf32, #tpu.memory_space<vmem>>, vector<24x16xf32>
    %c0_3 = arith.constant 0 : index
    %c0_4 = arith.constant 0 : index
    %c0_5 = arith.constant 0 : index
    %c0_6 = arith.constant 0 : index
    %3 = vector.load %arg1[%c0_3, %c0_4, %c0_5, %c0_6] : memref<1x4x32x8xbf16, #tpu.memory_space<vmem>>, vector<1x1x24x8xbf16>
    %4 = vector.shape_cast %3 : vector<1x1x24x8xbf16> to vector<24x8xbf16>
    %c0_7 = arith.constant 0 : index
    %c0_8 = arith.constant 0 : index
    %c0_9 = arith.constant 0 : index
    %5 = vector.load %arg2[%c0_7, %c0_8, %c0_9] : memref<9x8x16xbf16, #tpu.memory_space<vmem>>, vector<1x8x16xbf16>
    %6 = vector.shape_cast %5 : vector<1x8x16xbf16> to vector<8x16xbf16>
    %cst_10 = arith.constant dense<0.000000e+00> : vector<24x16xf32>
    %7 = tpu.matmul %4, %6, %cst_10 {dimension_numbers = #tpu.dot_dimension_numbers<[1], [0], [0], [1], [0, 0, 1, 1], [], []>} : vector<24x8xbf16>, vector<8x16xbf16>, vector<24x16xf32> -> vector<24x16xf32>
    %8 = arith.addf %2, %7 : vector<24x16xf32>
    %c0_11 = arith.constant 0 : index
    %c0_12 = arith.constant 0 : index
    %9 = vector.load %arg9[%c0_11, %c0_12] : memref<24x16xf32, #tpu.memory_space<vmem>>, vector<24x16xf32>
    tpu.vector_store %arg9[%c0_11, %c0_12], %8 {strides = array<i32>} : memref<24x16xf32, #tpu.memory_space<vmem>>, vector<24x16xf32>,
    %c0_13 = arith.constant 0 : index
    %c0_14 = arith.constant 0 : index
    %10 = vector.load %arg9[%c0_13, %c0_14] : memref<24x16xf32, #tpu.memory_space<vmem>>, vector<24x16xf32>
    %c0_15 = arith.constant 0 : index
    %c1 = arith.constant 1 : index
    %c0_16 = arith.constant 0 : index
    %c0_17 = arith.constant 0 : index
    %11 = vector.load %arg1[%c0_15, %c1, %c0_16, %c0_17] : memref<1x4x32x8xbf16, #tpu.memory_space<vmem>>, vector<1x1x24x8xbf16>
    %12 = vector.shape_cast %11 : vector<1x1x24x8xbf16> to vector<24x8xbf16>
    %c1_18 = arith.constant 1 : index
    %c0_19 = arith.constant 0 : index
    %c0_20 = arith.constant 0 : index
    %13 = vector.load %arg2[%c1_18, %c0_19, %c0_20] : memref<9x8x16xbf16, #tpu.memory_space<vmem>>, vector<1x8x16xbf16>
    %14 = vector.shape_cast %13 : vector<1x8x16xbf16> to vector<8x16xbf16>
    %cst_21 = arith.constant dense<0.000000e+00> : vector<24x16xf32>
    %15 = tpu.matmul %12, %14, %cst_21 {dimension_numbers = #tpu.dot_dimension_numbers<[1], [0], [0], [1], [0, 0, 1, 1], [], []>} : vector<24x8xbf16>, vector<8x16xbf16>, vector<24x16xf32> -> vector<24x16xf32>
    %16 = arith.addf %10, %15 : vector<24x16xf32>
    %c0_22 = arith.constant 0 : index
    %c0_23 = arith.constant 0 : index
    %17 = vector.load %arg9[%c0_22, %c0_23] : memref<24x16xf32, #tpu.memory_space<vmem>>, vector<24x16xf32>
    tpu.vector_store %arg9[%c0_22, %c0_23], %16 {strides = array<i32>} : memref<24x16xf32, #tpu.memory_space<vmem>>, vector<24x16xf32>,
    %c0_24 = arith.constant 0 : index
    %c0_25 = arith.constant 0 : index
    %18 = vector.load %arg9[%c0_24, %c0_25] : memref<24x16xf32, #tpu.memory_space<vmem>>, vector<24x16xf32>
    %c0_26 = arith.constant 0 : index
    %c0_27 = arith.constant 0 : index
    %c1_28 = arith.constant 1 : index
    %c0_29 = arith.constant 0 : index
    %19 = vector.load %arg1[%c0_26, %c0_27, %c1_28, %c0_29] : memref<1x4x32x8xbf16, #tpu.memory_space<vmem>>, vector<1x1x24x8xbf16>
    %20 = vector.shape_cast %19 : vector<1x1x24x8xbf16> to vector<24x8xbf16>
    %c2 = arith.constant 2 : index
    %c0_30 = arith.constant 0 : index
    %c0_31 = arith.constant 0 : index
    %21 = vector.load %arg2[%c2, %c0_30, %c0_31] : memref<9x8x16xbf16, #tpu.memory_space<vmem>>, vector<1x8x16xbf16>
    %22 = vector.shape_cast %21 : vector<1x8x16xbf16> to vector<8x16xbf16>
    %cst_32 = arith.constant dense<0.000000e+00> : vector<24x16xf32>
    %23 = tpu.matmul %20, %22, %cst_32 {dimension_numbers = #tpu.dot_dimension_numbers<[1], [0], [0], [1], [0, 0, 1, 1], [], []>} : vector<24x8xbf16>, vector<8x16xbf16>, vector<24x16xf32> -> vector<24x16xf32>
    %24 = arith.addf %18, %23 : vector<24x16xf32>
    %c0_33 = arith.constant 0 : index
    %c0_34 = arith.constant 0 : index
    %25 = vector.load %arg9[%c0_33, %c0_34] : memref<24x16xf32, #tpu.memory_space<vmem>>, vector<24x16xf32>
    tpu.vector_store %arg9[%c0_33, %c0_34], %24 {strides = array<i32>} : memref<24x16xf32, #tpu.memory_space<vmem>>, vector<24x16xf32>,
    %c0_35 = arith.constant 0 : index
    %c0_36 = arith.constant 0 : index
    %26 = vector.load %arg9[%c0_35, %c0_36] : memref<24x16xf32, #tpu.memory_space<vmem>>, vector<24x16xf32>
    %c0_37 = arith.constant 0 : index
    %c2_38 = arith.constant 2 : index
    %c0_39 = arith.constant 0 : index
    %c0_40 = arith.constant 0 : index
    %27 = vector.load %arg1[%c0_37, %c2_38, %c0_39, %c0_40] : memref<1x4x32x8xbf16, #tpu.memory_space<vmem>>, vector<1x1x24x8xbf16>
    %28 = vector.shape_cast %27 : vector<1x1x24x8xbf16> to vector<24x8xbf16>
    %c3 = arith.constant 3 : index
    %c0_41 = arith.constant 0 : index
    %c0_42 = arith.constant 0 : index
    %29 = vector.load %arg2[%c3, %c0_41, %c0_42] : memref<9x8x16xbf16, #tpu.memory_space<vmem>>, vector<1x8x16xbf16>
    %30 = vector.shape_cast %29 : vector<1x8x16xbf16> to vector<8x16xbf16>
    %cst_43 = arith.constant dense<0.000000e+00> : vector<24x16xf32>
    %31 = tpu.matmul %28, %30, %cst_43 {dimension_numbers = #tpu.dot_dimension_numbers<[1], [0], [0], [1], [0, 0, 1, 1], [], []>} : vector<24x8xbf16>, vector<8x16xbf16>, vector<24x16xf32> -> vector<24x16xf32>
    %32 = arith.addf %26, %31 : vector<24x16xf32>
    %c0_44 = arith.constant 0 : index
    %c0_45 = arith.constant 0 : index
    %33 = vector.load %arg9[%c0_44, %c0_45] : memref<24x16xf32, #tpu.memory_space<vmem>>, vector<24x16xf32>
    tpu.vector_store %arg9[%c0_44, %c0_45], %32 {strides = array<i32>} : memref<24x16xf32, #tpu.memory_space<vmem>>, vector<24x16xf32>,
    %c0_46 = arith.constant 0 : index
    %c0_47 = arith.constant 0 : index
    %34 = vector.load %arg9[%c0_46, %c0_47] : memref<24x16xf32, #tpu.memory_space<vmem>>, vector<24x16xf32>
    %c0_48 = arith.constant 0 : index
    %c3_49 = arith.constant 3 : index
    %c0_50 = arith.constant 0 : index
    %c0_51 = arith.constant 0 : index
    %35 = vector.load %arg1[%c0_48, %c3_49, %c0_50, %c0_51] : memref<1x4x32x8xbf16, #tpu.memory_space<vmem>>, vector<1x1x24x8xbf16>
    %36 = vector.shape_cast %35 : vector<1x1x24x8xbf16> to vector<24x8xbf16>
    %c4 = arith.constant 4 : index
    %c0_52 = arith.constant 0 : index
    %c0_53 = arith.constant 0 : index
    %37 = vector.load %arg2[%c4, %c0_52, %c0_53] : memref<9x8x16xbf16, #tpu.memory_space<vmem>>, vector<1x8x16xbf16>
    %38 = vector.shape_cast %37 : vector<1x8x16xbf16> to vector<8x16xbf16>
    %cst_54 = arith.constant dense<0.000000e+00> : vector<24x16xf32>
    %39 = tpu.matmul %36, %38, %cst_54 {dimension_numbers = #tpu.dot_dimension_numbers<[1], [0], [0], [1], [0, 0, 1, 1], [], []>} : vector<24x8xbf16>, vector<8x16xbf16>, vector<24x16xf32> -> vector<24x16xf32>
    %40 = arith.addf %34, %39 : vector<24x16xf32>
    %c0_55 = arith.constant 0 : index
    %c0_56 = arith.constant 0 : index
    %41 = vector.load %arg9[%c0_55, %c0_56] : memref<24x16xf32, #tpu.memory_space<vmem>>, vector<24x16xf32>
    tpu.vector_store %arg9[%c0_55, %c0_56], %40 {strides = array<i32>} : memref<24x16xf32, #tpu.memory_space<vmem>>, vector<24x16xf32>,
    %c0_57 = arith.constant 0 : index
    %c0_58 = arith.constant 0 : index
    %42 = vector.load %arg9[%c0_57, %c0_58] : memref<24x16xf32, #tpu.memory_space<vmem>>, vector<24x16xf32>
    %c0_59 = arith.constant 0 : index
    %c2_60 = arith.constant 2 : index
    %c1_61 = arith.constant 1 : index
    %c0_62 = arith.constant 0 : index
    %43 = vector.load %arg1[%c0_59, %c2_60, %c1_61, %c0_62] : memref<1x4x32x8xbf16, #tpu.memory_space<vmem>>, vector<1x1x24x8xbf16>
    %44 = vector.shape_cast %43 : vector<1x1x24x8xbf16> to vector<24x8xbf16>
    %c5 = arith.constant 5 : index
    %c0_63 = arith.constant 0 : index
    %c0_64 = arith.constant 0 : index
    %45 = vector.load %arg2[%c5, %c0_63, %c0_64] : memref<9x8x16xbf16, #tpu.memory_space<vmem>>, vector<1x8x16xbf16>
    %46 = vector.shape_cast %45 : vector<1x8x16xbf16> to vector<8x16xbf16>
    %cst_65 = arith.constant dense<0.000000e+00> : vector<24x16xf32>
    %47 = tpu.matmul %44, %46, %cst_65 {dimension_numbers = #tpu.dot_dimension_numbers<[1], [0], [0], [1], [0, 0, 1, 1], [], []>} : vector<24x8xbf16>, vector<8x16xbf16>, vector<24x16xf32> -> vector<24x16xf32>
    %48 = arith.addf %42, %47 : vector<24x16xf32>
    %c0_66 = arith.constant 0 : index
    %c0_67 = arith.constant 0 : index
    %49 = vector.load %arg9[%c0_66, %c0_67] : memref<24x16xf32, #tpu.memory_space<vmem>>, vector<24x16xf32>
    tpu.vector_store %arg9[%c0_66, %c0_67], %48 {strides = array<i32>} : memref<24x16xf32, #tpu.memory_space<vmem>>, vector<24x16xf32>,
    %c0_68 = arith.constant 0 : index
    %c0_69 = arith.constant 0 : index
    %50 = vector.load %arg9[%c0_68, %c0_69] : memref<24x16xf32, #tpu.memory_space<vmem>>, vector<24x16xf32>
    %c0_70 = arith.constant 0 : index
    %c0_71 = arith.constant 0 : index
    %c6 = arith.constant 6 : index
    %c0_72 = arith.constant 0 : index
    %51 = vector.load %arg1[%c0_70, %c0_71, %c6, %c0_72] : memref<1x4x32x8xbf16, #tpu.memory_space<vmem>>, vector<1x1x24x8xbf16>
    %52 = vector.shape_cast %51 : vector<1x1x24x8xbf16> to vector<24x8xbf16>
    %c6_73 = arith.constant 6 : index
    %c0_74 = arith.constant 0 : index
    %c0_75 = arith.constant 0 : index
    %53 = vector.load %arg2[%c6_73, %c0_74, %c0_75] : memref<9x8x16xbf16, #tpu.memory_space<vmem>>, vector<1x8x16xbf16>
    %54 = vector.shape_cast %53 : vector<1x8x16xbf16> to vector<8x16xbf16>
    %cst_76 = arith.constant dense<0.000000e+00> : vector<24x16xf32>
    %55 = tpu.matmul %52, %54, %cst_76 {dimension_numbers = #tpu.dot_dimension_numbers<[1], [0], [0], [1], [0, 0, 1, 1], [], []>} : vector<24x8xbf16>, vector<8x16xbf16>, vector<24x16xf32> -> vector<24x16xf32>
    %56 = arith.addf %50, %55 : vector<24x16xf32>
    %c0_77 = arith.constant 0 : index
    %c0_78 = arith.constant 0 : index
    %57 = vector.load %arg9[%c0_77, %c0_78] : memref<24x16xf32, #tpu.memory_space<vmem>>, vector<24x16xf32>
    tpu.vector_store %arg9[%c0_77, %c0_78], %56 {strides = array<i32>} : memref<24x16xf32, #tpu.memory_space<vmem>>, vector<24x16xf32>,
    %c0_79 = arith.constant 0 : index
    %c0_80 = arith.constant 0 : index
    %58 = vector.load %arg9[%c0_79, %c0_80] : memref<24x16xf32, #tpu.memory_space<vmem>>, vector<24x16xf32>
    %c0_81 = arith.constant 0 : index
    %c1_82 = arith.constant 1 : index
    %c6_83 = arith.constant 6 : index
    %c0_84 = arith.constant 0 : index
    %59 = vector.load %arg1[%c0_81, %c1_82, %c6_83, %c0_84] : memref<1x4x32x8xbf16, #tpu.memory_space<vmem>>, vector<1x1x24x8xbf16>
    %60 = vector.shape_cast %59 : vector<1x1x24x8xbf16> to vector<24x8xbf16>
    %c7 = arith.constant 7 : index
    %c0_85 = arith.constant 0 : index
    %c0_86 = arith.constant 0 : index
    %61 = vector.load %arg2[%c7, %c0_85, %c0_86] : memref<9x8x16xbf16, #tpu.memory_space<vmem>>, vector<1x8x16xbf16>
    %62 = vector.shape_cast %61 : vector<1x8x16xbf16> to vector<8x16xbf16>
    %cst_87 = arith.constant dense<0.000000e+00> : vector<24x16xf32>
    %63 = tpu.matmul %60, %62, %cst_87 {dimension_numbers = #tpu.dot_dimension_numbers<[1], [0], [0], [1], [0, 0, 1, 1], [], []>} : vector<24x8xbf16>, vector<8x16xbf16>, vector<24x16xf32> -> vector<24x16xf32>
    %64 = arith.addf %58, %63 : vector<24x16xf32>
    %c0_88 = arith.constant 0 : index
    %c0_89 = arith.constant 0 : index
    %65 = vector.load %arg9[%c0_88, %c0_89] : memref<24x16xf32, #tpu.memory_space<vmem>>, vector<24x16xf32>
    tpu.vector_store %arg9[%c0_88, %c0_89], %64 {strides = array<i32>} : memref<24x16xf32, #tpu.memory_space<vmem>>, vector<24x16xf32>,
    %c0_90 = arith.constant 0 : index
    %c0_91 = arith.constant 0 : index
    %66 = vector.load %arg9[%c0_90, %c0_91] : memref<24x16xf32, #tpu.memory_space<vmem>>, vector<24x16xf32>
    %c0_92 = arith.constant 0 : index
    %c0_93 = arith.constant 0 : index
    %c7_94 = arith.constant 7 : index
    %c0_95 = arith.constant 0 : index
    %67 = vector.load %arg1[%c0_92, %c0_93, %c7_94, %c0_95] : memref<1x4x32x8xbf16, #tpu.memory_space<vmem>>, vector<1x1x24x8xbf16>
    %68 = vector.shape_cast %67 : vector<1x1x24x8xbf16> to vector<24x8xbf16>
    %c8 = arith.constant 8 : index
    %c0_96 = arith.constant 0 : index
    %c0_97 = arith.constant 0 : index
    %69 = vector.load %arg2[%c8, %c0_96, %c0_97] : memref<9x8x16xbf16, #tpu.memory_space<vmem>>, vector<1x8x16xbf16>
    %70 = vector.shape_cast %69 : vector<1x8x16xbf16> to vector<8x16xbf16>
    %cst_98 = arith.constant dense<0.000000e+00> : vector<24x16xf32>
    %71 = tpu.matmul %68, %70, %cst_98 {dimension_numbers = #tpu.dot_dimension_numbers<[1], [0], [0], [1], [0, 0, 1, 1], [], []>} : vector<24x8xbf16>, vector<8x16xbf16>, vector<24x16xf32> -> vector<24x16xf32>
    %72 = arith.addf %66, %71 : vector<24x16xf32>
    %c0_99 = arith.constant 0 : index
    %c0_100 = arith.constant 0 : index
    %73 = vector.load %arg9[%c0_99, %c0_100] : memref<24x16xf32, #tpu.memory_space<vmem>>, vector<24x16xf32>
    tpu.vector_store %arg9[%c0_99, %c0_100], %72 {strides = array<i32>} : memref<24x16xf32, #tpu.memory_space<vmem>>, vector<24x16xf32>,
    %c0_101 = arith.constant 0 : index
    %c0_102 = arith.constant 0 : index
    %74 = vector.load %arg9[%c0_101, %c0_102] : memref<24x16xf32, #tpu.memory_space<vmem>>, vector<24x16xf32>
    %c0_103 = arith.constant 0 : index
    %c0_104 = arith.constant 0 : index
    %75 = vector.load %arg3[%c0_103, %c0_104] : memref<1x16xf32, #tpu.memory_space<vmem>>, vector<1x16xf32>
    %76 = vector.broadcast %75 : vector<1x16xf32> to vector<24x16xf32>
    %77 = arith.addf %74, %76 : vector<24x16xf32>
    %cst_105 = arith.constant 0.000000e+00 : f32
    %78 = vector.broadcast %cst_105 : f32 to vector<24x16xf32>
    %79 = arith.maximumf %77, %78 : vector<24x16xf32>
    %80 = tpu.iota {dimensions = array<i32: 0>} : vector<24x16xi32>
    %c6_i32 = arith.constant 6 : i32
    %c0_i32 = arith.constant 0 : i32
    %81 = arith.cmpi eq, %c6_i32, %c0_i32 : i32
    %c1_i32 = arith.constant 1 : i32
    %82 = arith.select %81, %c1_i32, %c6_i32 : i32
    %83 = vector.broadcast %82 : i32 to vector<24x16xi32>
    %84 = arith.remsi %80, %83 : vector<24x16xi32>
    %c0_i32_106 = arith.constant 0 : i32
    %85 = vector.broadcast %c0_i32_106 : i32 to vector<24x16xi32>
    %86 = arith.cmpi ne, %84, %85 : vector<24x16xi32>
    %c0_i32_107 = arith.constant 0 : i32
    %87 = vector.broadcast %c0_i32_107 : i32 to vector<24x16xi32>
    %88 = arith.cmpi slt, %84, %87 : vector<24x16xi32>
    %c0_i32_108 = arith.constant 0 : i32
    %89 = arith.cmpi slt, %82, %c0_i32_108 : i32
    %90 = vector.broadcast %89 : i1 to vector<24x16xi1>
    %91 = vector.broadcast %90 : vector<24x16xi1> to vector<24x16xi1>
    %92 = arith.xori %88, %91 : vector<24x16xi1>
    %93 = arith.andi %92, %86 : vector<24x16xi1>
    %94 = vector.broadcast %82 : i32 to vector<24x16xi32>
    %95 = arith.addi %84, %94 : vector<24x16xi32>
    %96 = arith.select %93, %95, %84 : vector<24x16xi1>, vector<24x16xi32>
    %c4_i32 = arith.constant 4 : i32
    %97 = vector.broadcast %c4_i32 : i32 to vector<24x16xi32>
    %98 = arith.cmpi slt, %96, %97 : vector<24x16xi32>
    %cst_109 = arith.constant 0.000000e+00 : f32
    %99 = vector.broadcast %cst_109 : f32 to vector<24x16xf32>
    %100 = arith.select %98, %79, %99 : vector<24x16xi1>, vector<24x16xf32>
    %101 = arith.truncf %100 : vector<24x16xf32> to vector<24x16xbf16>
    %cst_110 = arith.constant 0.000000e+00 : bf16
    %102 = vector.broadcast %cst_110 : bf16 to vector<40x16xbf16>
    %c0_111 = arith.constant 0 : index
    %c0_112 = arith.constant 0 : index
    %103 = vector.load %arg10[%c0_111, %c0_112] : memref<40x16xbf16, #tpu.memory_space<vmem>>, vector<40x16xbf16>
    tpu.vector_store %arg10[%c0_111, %c0_112], %102 {strides = array<i32>} : memref<40x16xbf16, #tpu.memory_space<vmem>>, vector<40x16xbf16>,
    %c8_113 = arith.constant 8 : index
    %c0_114 = arith.constant 0 : index
    %104 = vector.load %arg10[%c8_113, %c0_114] : memref<40x16xbf16, #tpu.memory_space<vmem>>, vector<24x16xbf16>
    tpu.vector_store %arg10[%c8_113, %c0_114], %101 {strides = array<i32>} : memref<40x16xbf16, #tpu.memory_space<vmem>>, vector<24x16xbf16>,
    %cst_115 = arith.constant 0.000000e+00 : f32
    %105 = vector.broadcast %cst_115 : f32 to vector<24x8xf32>
    %c0_116 = arith.constant 0 : index
    %c0_117 = arith.constant 0 : index
    %106 = vector.load %arg11[%c0_116, %c0_117] : memref<24x8xf32, #tpu.memory_space<vmem>>, vector<24x8xf32>
    tpu.vector_store %arg11[%c0_116, %c0_117], %105 {strides = array<i32>} : memref<24x8xf32, #tpu.memory_space<vmem>>, vector<24x8xf32>,
    %c0_118 = arith.constant 0 : index
    %c0_119 = arith.constant 0 : index
    %107 = vector.load %arg11[%c0_118, %c0_119] : memref<24x8xf32, #tpu.memory_space<vmem>>, vector<24x8xf32>
    %c1_120 = arith.constant 1 : index
    %c0_121 = arith.constant 0 : index
    %108 = vector.load %arg10[%c1_120, %c0_121] : memref<40x16xbf16, #tpu.memory_space<vmem>>, vector<24x16xbf16>
    %c0_122 = arith.constant 0 : index
    %c0_123 = arith.constant 0 : index
    %c0_124 = arith.constant 0 : index
    %109 = vector.load %arg4[%c0_122, %c0_123, %c0_124] : memref<9x16x8xbf16, #tpu.memory_space<vmem>>, vector<1x16x8xbf16>
    %110 = vector.shape_cast %109 : vector<1x16x8xbf16> to vector<16x8xbf16>
    %cst_125 = arith.constant dense<0.000000e+00> : vector<24x8xf32>
    %111 = tpu.matmul %108, %110, %cst_125 {dimension_numbers = #tpu.dot_dimension_numbers<[1], [0], [0], [1], [0, 0, 1, 1], [], []>} : vector<24x16xbf16>, vector<16x8xbf16>, vector<24x8xf32> -> vector<24x8xf32>
    %112 = arith.addf %107, %111 : vector<24x8xf32>
    %c0_126 = arith.constant 0 : index
    %c0_127 = arith.constant 0 : index
    %113 = vector.load %arg11[%c0_126, %c0_127] : memref<24x8xf32, #tpu.memory_space<vmem>>, vector<24x8xf32>
    tpu.vector_store %arg11[%c0_126, %c0_127], %112 {strides = array<i32>} : memref<24x8xf32, #tpu.memory_space<vmem>>, vector<24x8xf32>,
    %c0_128 = arith.constant 0 : index
    %c0_129 = arith.constant 0 : index
    %114 = vector.load %arg11[%c0_128, %c0_129] : memref<24x8xf32, #tpu.memory_space<vmem>>, vector<24x8xf32>
    %c2_130 = arith.constant 2 : index
    %c0_131 = arith.constant 0 : index
    %115 = vector.load %arg10[%c2_130, %c0_131] : memref<40x16xbf16, #tpu.memory_space<vmem>>, vector<24x16xbf16>
    %c1_132 = arith.constant 1 : index
    %c0_133 = arith.constant 0 : index
    %c0_134 = arith.constant 0 : index
    %116 = vector.load %arg4[%c1_132, %c0_133, %c0_134] : memref<9x16x8xbf16, #tpu.memory_space<vmem>>, vector<1x16x8xbf16>
    %117 = vector.shape_cast %116 : vector<1x16x8xbf16> to vector<16x8xbf16>
    %cst_135 = arith.constant dense<0.000000e+00> : vector<24x8xf32>
    %118 = tpu.matmul %115, %117, %cst_135 {dimension_numbers = #tpu.dot_dimension_numbers<[1], [0], [0], [1], [0, 0, 1, 1], [], []>} : vector<24x16xbf16>, vector<16x8xbf16>, vector<24x8xf32> -> vector<24x8xf32>
    %119 = arith.addf %114, %118 : vector<24x8xf32>
    %c0_136 = arith.constant 0 : index
    %c0_137 = arith.constant 0 : index
    %120 = vector.load %arg11[%c0_136, %c0_137] : memref<24x8xf32, #tpu.memory_space<vmem>>, vector<24x8xf32>
    tpu.vector_store %arg11[%c0_136, %c0_137], %119 {strides = array<i32>} : memref<24x8xf32, #tpu.memory_space<vmem>>, vector<24x8xf32>,
    %c0_138 = arith.constant 0 : index
    %c0_139 = arith.constant 0 : index
    %121 = vector.load %arg11[%c0_138, %c0_139] : memref<24x8xf32, #tpu.memory_space<vmem>>, vector<24x8xf32>
    %c3_140 = arith.constant 3 : index
    %c0_141 = arith.constant 0 : index
    %122 = vector.load %arg10[%c3_140, %c0_141] : memref<40x16xbf16, #tpu.memory_space<vmem>>, vector<24x16xbf16>
    %c2_142 = arith.constant 2 : index
    %c0_143 = arith.constant 0 : index
    %c0_144 = arith.constant 0 : index
    %123 = vector.load %arg4[%c2_142, %c0_143, %c0_144] : memref<9x16x8xbf16, #tpu.memory_space<vmem>>, vector<1x16x8xbf16>
    %124 = vector.shape_cast %123 : vector<1x16x8xbf16> to vector<16x8xbf16>
    %cst_145 = arith.constant dense<0.000000e+00> : vector<24x8xf32>
    %125 = tpu.matmul %122, %124, %cst_145 {dimension_numbers = #tpu.dot_dimension_numbers<[1], [0], [0], [1], [0, 0, 1, 1], [], []>} : vector<24x16xbf16>, vector<16x8xbf16>, vector<24x8xf32> -> vector<24x8xf32>
    %126 = arith.addf %121, %125 : vector<24x8xf32>
    %c0_146 = arith.constant 0 : index
    %c0_147 = arith.constant 0 : index
    %127 = vector.load %arg11[%c0_146, %c0_147] : memref<24x8xf32, #tpu.memory_space<vmem>>, vector<24x8xf32>
    tpu.vector_store %arg11[%c0_146, %c0_147], %126 {strides = array<i32>} : memref<24x8xf32, #tpu.memory_space<vmem>>, vector<24x8xf32>,
    %c0_148 = arith.constant 0 : index
    %c0_149 = arith.constant 0 : index
    %128 = vector.load %arg11[%c0_148, %c0_149] : memref<24x8xf32, #tpu.memory_space<vmem>>, vector<24x8xf32>
    %c7_150 = arith.constant 7 : index
    %c0_151 = arith.constant 0 : index
    %129 = vector.load %arg10[%c7_150, %c0_151] : memref<40x16xbf16, #tpu.memory_space<vmem>>, vector<24x16xbf16>
    %c3_152 = arith.constant 3 : index
    %c0_153 = arith.constant 0 : index
    %c0_154 = arith.constant 0 : index
    %130 = vector.load %arg4[%c3_152, %c0_153, %c0_154] : memref<9x16x8xbf16, #tpu.memory_space<vmem>>, vector<1x16x8xbf16>
    %131 = vector.shape_cast %130 : vector<1x16x8xbf16> to vector<16x8xbf16>
    %cst_155 = arith.constant dense<0.000000e+00> : vector<24x8xf32>
    %132 = tpu.matmul %129, %131, %cst_155 {dimension_numbers = #tpu.dot_dimension_numbers<[1], [0], [0], [1], [0, 0, 1, 1], [], []>} : vector<24x16xbf16>, vector<16x8xbf16>, vector<24x8xf32> -> vector<24x8xf32>
    %133 = arith.addf %128, %132 : vector<24x8xf32>
    %c0_156 = arith.constant 0 : index
    %c0_157 = arith.constant 0 : index
    %134 = vector.load %arg11[%c0_156, %c0_157] : memref<24x8xf32, #tpu.memory_space<vmem>>, vector<24x8xf32>
    tpu.vector_store %arg11[%c0_156, %c0_157], %133 {strides = array<i32>} : memref<24x8xf32, #tpu.memory_space<vmem>>, vector<24x8xf32>,
    %c0_158 = arith.constant 0 : index
    %c0_159 = arith.constant 0 : index
    %135 = vector.load %arg11[%c0_158, %c0_159] : memref<24x8xf32, #tpu.memory_space<vmem>>, vector<24x8xf32>
    %c8_160 = arith.constant 8 : index
    %c0_161 = arith.constant 0 : index
    %136 = vector.load %arg10[%c8_160, %c0_161] : memref<40x16xbf16, #tpu.memory_space<vmem>>, vector<24x16xbf16>
    %c4_162 = arith.constant 4 : index
    %c0_163 = arith.constant 0 : index
    %c0_164 = arith.constant 0 : index
    %137 = vector.load %arg4[%c4_162, %c0_163, %c0_164] : memref<9x16x8xbf16, #tpu.memory_space<vmem>>, vector<1x16x8xbf16>
    %138 = vector.shape_cast %137 : vector<1x16x8xbf16> to vector<16x8xbf16>
    %cst_165 = arith.constant dense<0.000000e+00> : vector<24x8xf32>
    %139 = tpu.matmul %136, %138, %cst_165 {dimension_numbers = #tpu.dot_dimension_numbers<[1], [0], [0], [1], [0, 0, 1, 1], [], []>} : vector<24x16xbf16>, vector<16x8xbf16>, vector<24x8xf32> -> vector<24x8xf32>
    %140 = arith.addf %135, %139 : vector<24x8xf32>
    %c0_166 = arith.constant 0 : index
    %c0_167 = arith.constant 0 : index
    %141 = vector.load %arg11[%c0_166, %c0_167] : memref<24x8xf32, #tpu.memory_space<vmem>>, vector<24x8xf32>
    tpu.vector_store %arg11[%c0_166, %c0_167], %140 {strides = array<i32>} : memref<24x8xf32, #tpu.memory_space<vmem>>, vector<24x8xf32>,
    %c0_168 = arith.constant 0 : index
    %c0_169 = arith.constant 0 : index
    %142 = vector.load %arg11[%c0_168, %c0_169] : memref<24x8xf32, #tpu.memory_space<vmem>>, vector<24x8xf32>
    %c9 = arith.constant 9 : index
    %c0_170 = arith.constant 0 : index
    %143 = vector.load %arg10[%c9, %c0_170] : memref<40x16xbf16, #tpu.memory_space<vmem>>, vector<24x16xbf16>
    %c5_171 = arith.constant 5 : index
    %c0_172 = arith.constant 0 : index
    %c0_173 = arith.constant 0 : index
    %144 = vector.load %arg4[%c5_171, %c0_172, %c0_173] : memref<9x16x8xbf16, #tpu.memory_space<vmem>>, vector<1x16x8xbf16>
    %145 = vector.shape_cast %144 : vector<1x16x8xbf16> to vector<16x8xbf16>
    %cst_174 = arith.constant dense<0.000000e+00> : vector<24x8xf32>
    %146 = tpu.matmul %143, %145, %cst_174 {dimension_numbers = #tpu.dot_dimension_numbers<[1], [0], [0], [1], [0, 0, 1, 1], [], []>} : vector<24x16xbf16>, vector<16x8xbf16>, vector<24x8xf32> -> vector<24x8xf32>
    %147 = arith.addf %142, %146 : vector<24x8xf32>
    %c0_175 = arith.constant 0 : index
    %c0_176 = arith.constant 0 : index
    %148 = vector.load %arg11[%c0_175, %c0_176] : memref<24x8xf32, #tpu.memory_space<vmem>>, vector<24x8xf32>
    tpu.vector_store %arg11[%c0_175, %c0_176], %147 {strides = array<i32>} : memref<24x8xf32, #tpu.memory_space<vmem>>, vector<24x8xf32>,
    %c0_177 = arith.constant 0 : index
    %c0_178 = arith.constant 0 : index
    %149 = vector.load %arg11[%c0_177, %c0_178] : memref<24x8xf32, #tpu.memory_space<vmem>>, vector<24x8xf32>
    %c13 = arith.constant 13 : index
    %c0_179 = arith.constant 0 : index
    %150 = vector.load %arg10[%c13, %c0_179] : memref<40x16xbf16, #tpu.memory_space<vmem>>, vector<24x16xbf16>
    %c6_180 = arith.constant 6 : index
    %c0_181 = arith.constant 0 : index
    %c0_182 = arith.constant 0 : index
    %151 = vector.load %arg4[%c6_180, %c0_181, %c0_182] : memref<9x16x8xbf16, #tpu.memory_space<vmem>>, vector<1x16x8xbf16>
    %152 = vector.shape_cast %151 : vector<1x16x8xbf16> to vector<16x8xbf16>
    %cst_183 = arith.constant dense<0.000000e+00> : vector<24x8xf32>
    %153 = tpu.matmul %150, %152, %cst_183 {dimension_numbers = #tpu.dot_dimension_numbers<[1], [0], [0], [1], [0, 0, 1, 1], [], []>} : vector<24x16xbf16>, vector<16x8xbf16>, vector<24x8xf32> -> vector<24x8xf32>
    %154 = arith.addf %149, %153 : vector<24x8xf32>
    %c0_184 = arith.constant 0 : index
    %c0_185 = arith.constant 0 : index
    %155 = vector.load %arg11[%c0_184, %c0_185] : memref<24x8xf32, #tpu.memory_space<vmem>>, vector<24x8xf32>
    tpu.vector_store %arg11[%c0_184, %c0_185], %154 {strides = array<i32>} : memref<24x8xf32, #tpu.memory_space<vmem>>, vector<24x8xf32>,
    %c0_186 = arith.constant 0 : index
    %c0_187 = arith.constant 0 : index
    %156 = vector.load %arg11[%c0_186, %c0_187] : memref<24x8xf32, #tpu.memory_space<vmem>>, vector<24x8xf32>
    %c14 = arith.constant 14 : index
    %c0_188 = arith.constant 0 : index
    %157 = vector.load %arg10[%c14, %c0_188] : memref<40x16xbf16, #tpu.memory_space<vmem>>, vector<24x16xbf16>
    %c7_189 = arith.constant 7 : index
    %c0_190 = arith.constant 0 : index
    %c0_191 = arith.constant 0 : index
    %158 = vector.load %arg4[%c7_189, %c0_190, %c0_191] : memref<9x16x8xbf16, #tpu.memory_space<vmem>>, vector<1x16x8xbf16>
    %159 = vector.shape_cast %158 : vector<1x16x8xbf16> to vector<16x8xbf16>
    %cst_192 = arith.constant dense<0.000000e+00> : vector<24x8xf32>
    %160 = tpu.matmul %157, %159, %cst_192 {dimension_numbers = #tpu.dot_dimension_numbers<[1], [0], [0], [1], [0, 0, 1, 1], [], []>} : vector<24x16xbf16>, vector<16x8xbf16>, vector<24x8xf32> -> vector<24x8xf32>
    %161 = arith.addf %156, %160 : vector<24x8xf32>
    %c0_193 = arith.constant 0 : index
    %c0_194 = arith.constant 0 : index
    %162 = vector.load %arg11[%c0_193, %c0_194] : memref<24x8xf32, #tpu.memory_space<vmem>>, vector<24x8xf32>
    tpu.vector_store %arg11[%c0_193, %c0_194], %161 {strides = array<i32>} : memref<24x8xf32, #tpu.memory_space<vmem>>, vector<24x8xf32>,
    %c0_195 = arith.constant 0 : index
    %c0_196 = arith.constant 0 : index
    %163 = vector.load %arg11[%c0_195, %c0_196] : memref<24x8xf32, #tpu.memory_space<vmem>>, vector<24x8xf32>
    %c15 = arith.constant 15 : index
    %c0_197 = arith.constant 0 : index
    %164 = vector.load %arg10[%c15, %c0_197] : memref<40x16xbf16, #tpu.memory_space<vmem>>, vector<24x16xbf16>
    %c8_198 = arith.constant 8 : index
    %c0_199 = arith.constant 0 : index
    %c0_200 = arith.constant 0 : index
    %165 = vector.load %arg4[%c8_198, %c0_199, %c0_200] : memref<9x16x8xbf16, #tpu.memory_space<vmem>>, vector<1x16x8xbf16>
    %166 = vector.shape_cast %165 : vector<1x16x8xbf16> to vector<16x8xbf16>
    %cst_201 = arith.constant dense<0.000000e+00> : vector<24x8xf32>
    %167 = tpu.matmul %164, %166, %cst_201 {dimension_numbers = #tpu.dot_dimension_numbers<[1], [0], [0], [1], [0, 0, 1, 1], [], []>} : vector<24x16xbf16>, vector<16x8xbf16>, vector<24x8xf32> -> vector<24x8xf32>
    %168 = arith.addf %163, %167 : vector<24x8xf32>
    %c0_202 = arith.constant 0 : index
    %c0_203 = arith.constant 0 : index
    %169 = vector.load %arg11[%c0_202, %c0_203] : memref<24x8xf32, #tpu.memory_space<vmem>>, vector<24x8xf32>
    tpu.vector_store %arg11[%c0_202, %c0_203], %168 {strides = array<i32>} : memref<24x8xf32, #tpu.memory_space<vmem>>, vector<24x8xf32>,
    %c0_204 = arith.constant 0 : index
    %c0_205 = arith.constant 0 : index
    %170 = vector.load %arg11[%c0_204, %c0_205] : memref<24x8xf32, #tpu.memory_space<vmem>>, vector<24x8xf32>
    %c0_206 = arith.constant 0 : index
    %c0_207 = arith.constant 0 : index
    %171 = vector.load %arg5[%c0_206, %c0_207] : memref<1x8xf32, #tpu.memory_space<vmem>>, vector<1x8xf32>
    %172 = vector.broadcast %171 : vector<1x8xf32> to vector<24x8xf32>
    %173 = arith.addf %170, %172 : vector<24x8xf32>
    %cst_208 = arith.constant 0.000000e+00 : f32
    %174 = vector.broadcast %cst_208 : f32 to vector<24x8xf32>
    %175 = arith.maximumf %173, %174 : vector<24x8xf32>
    %176 = arith.truncf %175 : vector<24x8xf32> to vector<24x8xbf16>
    %c0_209 = arith.constant 0 : index
    %c0_210 = arith.constant 0 : index
    %177 = vector.load %arg6[%c0_209, %c0_210] : memref<8x8xbf16, #tpu.memory_space<vmem>>, vector<8x8xbf16>
    %cst_211 = arith.constant dense<0.000000e+00> : vector<24x8xf32>
    %178 = tpu.matmul %176, %177, %cst_211 {dimension_numbers = #tpu.dot_dimension_numbers<[1], [0], [0], [1], [0, 0, 1, 1], [], []>} : vector<24x8xbf16>, vector<8x8xbf16>, vector<24x8xf32> -> vector<24x8xf32>
    %c0_212 = arith.constant 0 : index
    %c0_213 = arith.constant 0 : index
    %179 = vector.load %arg7[%c0_212, %c0_213] : memref<1x8xf32, #tpu.memory_space<vmem>>, vector<1x8xf32>
    %180 = vector.broadcast %179 : vector<1x8xf32> to vector<24x8xf32>
    %181 = arith.addf %178, %180 : vector<24x8xf32>
    %cst_214 = arith.constant 0.000000e+00 : f32
    %182 = vector.broadcast %cst_214 : f32 to vector<24x8xf32>
    %183 = arith.subf %182, %181 : vector<24x8xf32>
    %184 = math.exp %183 : vector<24x8xf32>
    %cst_215 = arith.constant 1.000000e+00 : f32
    %185 = vector.broadcast %cst_215 : f32 to vector<24x8xf32>
    %186 = arith.addf %185, %184 : vector<24x8xf32>
    %cst_216 = arith.constant 1.000000e+00 : f32
    %187 = vector.broadcast %cst_216 : f32 to vector<24x8xf32>
    %188 = arith.divf %187, %186 : vector<24x8xf32>
    %189 = vector.extract_strided_slice %188 {offsets = [0, 0], sizes = [24, 1], strides = [1, 1]} : vector<24x8xf32> to vector<24x1xf32>
    %c0_217 = arith.constant 0 : index
    %c0_218 = arith.constant 0 : index
    %c0_219 = arith.constant 0 : index
    %190 = vector.load %arg8[%c0_217, %c0_218, %c0_219] : memref<1x24x1xf32, #tpu.memory_space<vmem>>, vector<1x24x1xf32>
    %191 = vector.shape_cast %190 : vector<1x24x1xf32> to vector<24x1xf32>
    %192 = vector.shape_cast %189 : vector<24x1xf32> to vector<1x24x1xf32>
    tpu.vector_store %arg8[%c0_217, %c0_218, %c0_219], %192 {strides = array<i32>} : memref<1x24x1xf32, #tpu.memory_space<vmem>>, vector<1x24x1xf32>,
    return
  }
  func.func @transform_0(%arg0: i32) -> (i32, i32, i32, i32) {
    %c0_i32 = arith.constant 0 : i32
    %c0_i32_0 = arith.constant 0 : i32
    %c0_i32_1 = arith.constant 0 : i32
    %c0_i32_2 = arith.constant 0 : i32
    return %arg0, %c0_i32, %c0_i32_0, %c0_i32_1 : i32, i32, i32, i32
  }
  func.func @transform_1(%arg0: i32) -> (i32, i32, i32) {
    %c0_i32 = arith.constant 0 : i32
    %c0_i32_0 = arith.constant 0 : i32
    %c0_i32_1 = arith.constant 0 : i32
    %c0_i32_2 = arith.constant 0 : i32
    return %c0_i32, %c0_i32_0, %c0_i32_1 : i32, i32, i32
  }
  func.func @transform_2(%arg0: i32) -> (i32, i32) {
    %c0_i32 = arith.constant 0 : i32
    %c0_i32_0 = arith.constant 0 : i32
    %c0_i32_1 = arith.constant 0 : i32
    return %c0_i32, %c0_i32_0 : i32, i32
  }
  func.func @transform_3(%arg0: i32) -> (i32, i32, i32) {
    %c0_i32 = arith.constant 0 : i32
    %c0_i32_0 = arith.constant 0 : i32
    %c0_i32_1 = arith.constant 0 : i32
    %c0_i32_2 = arith.constant 0 : i32
    return %c0_i32, %c0_i32_0, %c0_i32_1 : i32, i32, i32
  }
  func.func @transform_4(%arg0: i32) -> (i32, i32) {
    %c0_i32 = arith.constant 0 : i32
    %c0_i32_0 = arith.constant 0 : i32
    %c0_i32_1 = arith.constant 0 : i32
    return %c0_i32, %c0_i32_0 : i32, i32
  }
  func.func @transform_5(%arg0: i32) -> (i32, i32) {
    %c0_i32 = arith.constant 0 : i32
    %c0_i32_0 = arith.constant 0 : i32
    %c0_i32_1 = arith.constant 0 : i32
    return %c0_i32, %c0_i32_0 : i32, i32
  }
  func.func @transform_6(%arg0: i32) -> (i32, i32) {
    %c0_i32 = arith.constant 0 : i32
    %c0_i32_0 = arith.constant 0 : i32
    %c0_i32_1 = arith.constant 0 : i32
    return %c0_i32, %c0_i32_0 : i32, i32
  }
  func.func @transform_7(%arg0: i32) -> (i32, i32, i32) {
    %c0_i32 = arith.constant 0 : i32
    %c0_i32_0 = arith.constant 0 : i32
    %c0_i32_1 = arith.constant 0 : i32
    return %arg0, %c0_i32, %c0_i32_0 : i32, i32, i32
  }
}

</mosaic_0001>

<llo_original>
// kernel: seg_detector_forward.2
$region0: #{seg_detector_forward.2}
  #allocation0 [shape = 'u32[]', space=smem, size = 0x4, offset = 0x4, fixed_abs, tag = 'smem constant byte address 0x4 - core index']
  #allocation1 [shape = 'u32[72,128]{1,0:T(1,128)}', space=vmem, size = 0x9000, scoped, tag = 'internal scratch']
  #allocation2 [shape = 'f32[72,8]{1,0:T(8,128)}', space=vmem, size = 0x9000, scoped, tag = 'scratch operand']
  %s0 = inlined_call_operand.vmem [shape: bf16[2,4,88,4], index: 0, kind: input, shape index: {}]
  %s1 = inlined_call_operand.vmem [shape: bf16[9,4,8], index: 1, kind: input, shape index: {}]
  %s2 = inlined_call_operand.vmem [shape: f32[1,8], index: 2, kind: input, shape index: {}]
  %s3 = inlined_call_operand.vmem [shape: bf16[2,72,8], index: 3, kind: output, shape index: {}]
  %s4 = sld [smem:[#allocation0]]
  $region45: #{seg_detector_forward.2} parent=0
    _
  %s6 = ssub.s32 1, %s4
  %s7 = scalar_select 0, %s6, %s4
  loop: start=0, step=1, limit=4
  $region2: #{seg_detector_forward.2} parent=0 // loop_pre_header
    _
  $region3: #{seg_detector_forward.2} parent=0 // loop_header
    %s9 = sphi 0, %s13
    %p10 = scmp.ge.s32.totalorder %s9, 4
    %s19 = sphi 0, %s21
    %s22 = sphi 0, %s19
    %s23 = sphi 0, %s22
    %s39 = sphi 0, %s23
    %s43 = sphi 0, %s43
    %s45 = sphi 0, %s43
    %s46 = sphi 0, %s45
    %s60 = sphi 0, %s46
    %s64 = sphi 0, %s64
    %s66 = sphi 0, %s64
    %s67 = sphi 0, %s66
    %s81 = sphi 0, %s67
    %s87 = sphi 0, %s89
    %s90 = sphi 0, %s87
    %s91 = sphi 0, %s90
    %s107 = sphi 0, %s91
  $region4: #{seg_detector_forward.2} parent=0 // loop_header_branch
    %12 = sbr.rel (%p10) target = $region8
  $region5: #{seg_detector_forward.2} parent=0 // loop_body
    %s14 = ssub.s32 %s9, 1
    %s15 = ssub.s32 %s9, 2
    %s16 = sadd.s32 %s9, 1
    %s17 = ssub.s32 %s9, %s16
    %p18 = scmp.eq.s32.totalorder %s17, 0
    %s20 = sadd.s32 %s19, 1
    %s21 = scalar_select %p18, %s19, %s20
    %p24 = pneg %p18
    %p25 = scmp.eq.s32.totalorder %s9, 1
    %p26 = por %p24, %p25
    %p27 = scmp.ne.s32.totalorder %s19, %s22
    %p28 = scmp.eq.s32.totalorder %s9, 0
    %p29 = por %p27, %p28
    %p30 = scmp.ne.s32.totalorder %s19, %s22
    %p31 = scmp.eq.s32.totalorder %s14, 1
    %p32 = por %p30, %p31
    %p33 = scmp.ne.s32.totalorder %s22, %s23
    %p34 = scmp.eq.s32.totalorder %s14, 0
    %p35 = por %p33, %p34
    %p36 = scmp.ne.s32.totalorder %s22, %s23
    %p37 = scmp.eq.s32.totalorder %s15, 1
    %p38 = por %p36, %p37
    %p40 = scmp.ne.s32.totalorder %s23, %s39
    %p41 = scmp.eq.s32.totalorder %s15, 0
    %p42 = por %p40, %p41
    %s44 = sadd.s32 %s43, 1
    %p47 = scmp.eq.s32.totalorder %s9, 1
    %p48 = scmp.ne.s32.totalorder %s43, %s45
    %p49 = scmp.eq.s32.totalorder %s9, 0
    %p50 = por %p48, %p49
    %p51 = scmp.ne.s32.totalorder %s43, %s45
    %p52 = scmp.eq.s32.totalorder %s14, 1
    %p53 = por %p51, %p52
    %p54 = scmp.ne.s32.totalorder %s45, %s46
    %p55 = scmp.eq.s32.totalorder %s14, 0
    %p56 = por %p54, %p55
    %p57 = scmp.ne.s32.totalorder %s45, %s46
    %p58 = scmp.eq.s32.totalorder %s15, 1
    %p59 = por %p57, %p58
    %p61 = scmp.ne.s32.totalorder %s46, %s60
    %p62 = scmp.eq.s32.totalorder %s15, 0
    %p63 = por %p61, %p62
    %s65 = sadd.s32 %s64, 1
    %p68 = scmp.eq.s32.totalorder %s9, 1
    %p69 = scmp.ne.s32.totalorder %s64, %s66
    %p70 = scmp.eq.s32.totalorder %s9, 0
    %p71 = por %p69, %p70
    %p72 = scmp.ne.s32.totalorder %s64, %s66
    %p73 = scmp.eq.s32.totalorder %s14, 1
    %p74 = por %p72, %p73
    %p75 = scmp.ne.s32.totalorder %s66, %s67
    %p76 = scmp.eq.s32.totalorder %s14, 0
    %p77 = por %p75, %p76
    %p78 = scmp.ne.s32.totalorder %s66, %s67
    %p79 = scmp.eq.s32.totalorder %s15, 1
    %p80 = por %p78, %p79
    %p82 = scmp.ne.s32.totalorder %s67, %s81
    %p83 = scmp.eq.s32.totalorder %s15, 0
    %p84 = por %p82, %p83
    %s85 = ssub.s32 %s9, %s16
    %p86 = scmp.eq.s32.totalorder %s85, 0
    %s88 = sadd.s32 %s87, 1
    %s89 = scalar_select %p86, %s87, %s88
    %p92 = pneg %p86
    %p93 = scmp.eq.s32.totalorder %s9, 1
    %p94 = por %p92, %p93
    %p95 = scmp.ne.s32.totalorder %s87, %s90
    %p96 = scmp.eq.s32.totalorder %s9, 0
    %p97 = por %p95, %p96
    %p98 = scmp.ne.s32.totalorder %s87, %s90
    %p99 = scmp.eq.s32.totalorder %s14, 1
    %p100 = por %p98, %p99
    %p101 = scmp.ne.s32.totalorder %s90, %s91
    %p102 = scmp.eq.s32.totalorder %s14, 0
    %p103 = por %p101, %p102
    %p104 = scmp.ne.s32.totalorder %s90, %s91
    %p105 = scmp.eq.s32.totalorder %s15, 1
    %p106 = por %p104, %p105
    %p108 = scmp.ne.s32.totalorder %s91, %s107
    %p109 = scmp.eq.s32.totalorder %s15, 0
    %p110 = por %p108, %p109
    %p111 = scmp.le.s32.totalorder 1, %s9
    %p112 = scmp.lt.s32.totalorder %s9, 3
    %p113 = pnand %p111, %p112
    %p114 = pneg %p113
    // Predicated region
    $region9: #{seg_detector_forward.2} parent=5 // pred_check
      _
    $region10: #{seg_detector_forward.2} parent=5 // pred_check_branch
      %116 = sbr.rel (%p113) target = $region12
    $region11: #{seg_detector_forward.2} parent=5 // pred_region
      %s117 = ssub.s32 %s9, 1
      // Predicated region
      $region13: #{seg_detector_forward.2} parent=11 // pred_check
        %p118 = pneg %p56
      $region14: #{seg_detector_forward.2} parent=11 // pred_check_branch
        %120 = sbr.rel (%p118) target = $region16
      $region15: #{seg_detector_forward.2} parent=11 // pred_region
        _
      $region16: #{seg_detector_forward.2} parent=11 // pred_fallthru
        _
      // Predicated region
      $region17: #{seg_detector_forward.2} parent=11 // pred_check
        %p121 = pneg %p77
      $region18: #{seg_detector_forward.2} parent=11 // pred_check_branch
        %123 = sbr.rel (%p121) target = $region20
      $region19: #{seg_detector_forward.2} parent=11 // pred_region
        _
      $region20: #{seg_detector_forward.2} parent=11 // pred_fallthru
        _
    $region12: #{seg_detector_forward.2} parent=5 // pred_fallthru
      _
    %p124 = scmp.lt.s32.totalorder %s9, 2
    // Predicated region
    $region21: #{seg_detector_forward.2} parent=5 // pred_check
      %p125 = pneg %p124
    $region22: #{seg_detector_forward.2} parent=5 // pred_check_branch
      %127 = sbr.rel (%p125) target = $region24
    $region23: #{seg_detector_forward.2} parent=5 // pred_region
      // Predicated region
      $region25: #{seg_detector_forward.2} parent=23 // pred_check
        %p128 = pneg %p29
      $region26: #{seg_detector_forward.2} parent=23 // pred_check_branch
        %130 = sbr.rel (%p128) target = $region28
      $region27: #{seg_detector_forward.2} parent=23 // pred_region
        %p131 = scmp.lt.s32.totalorder %s9, 1
        %s132 = scalar_select %p131, %s9, 1
        %s133 = smul.addr %s132, 44
        %s134 = smul.addr %s133, 4
        %s135 = scalar_lea.vmem %s0, %s134
      $region28: #{seg_detector_forward.2} parent=23 // pred_fallthru
        _
    $region24: #{seg_detector_forward.2} parent=5 // pred_fallthru
      _
    %p136 = scmp.le.s32.totalorder 1, %s9
    %p137 = scmp.lt.s32.totalorder %s9, 3
    %p138 = pnand %p136, %p137
    %p139 = pneg %p138
    // Predicated region
    $region29: #{seg_detector_forward.2} parent=5 // pred_check
      _
    $region30: #{seg_detector_forward.2} parent=5 // pred_check_branch
      %141 = sbr.rel (%p138) target = $region32
    $region31: #{seg_detector_forward.2} parent=5 // pred_region
      %s142 = ssub.s32 %s9, 1
      %p143 = scmp.lt.s32.totalorder %s14, 1
      %s144 = scalar_select %p143, %s14, 1
      %s145 = smul.addr %s144, 44
      %s146 = smul.addr %s145, 4
      %s147 = scalar_lea.vmem %s0, %s146
      %p148 = pneg %p35
      %p149 = pneg %p32
      %p150 = pneg %p56
      %p151 = pneg %p53
      %p152 = pneg %p77
      %p153 = pneg %p74
      %p154 = pneg %p103
      %p155 = pneg %p100
      %p156 = scmp.lt.s32.totalorder %s14, 1
      %s157 = scalar_select %p156, %s14, 1
      %s158 = smul.addr %s157, 9
      %s159 = smul.addr %s158, 4
      %s160 = scalar_lea.vmem %s3, %s159
      %p161 = scmp.lt.s32.totalorder %s14, 1
      %s162 = scalar_select %p161, %s14, 1
      %s163 = smul.addr %s162, 44
      %s164 = smul.addr %s163, 4
      %s165 = scalar_lea.vmem %s0, %s164
      %p166 = scmp.lt.s32.totalorder %s14, 1
      %s167 = scalar_select %p166, %s14, 1
      %s168 = smul.addr %s167, 9
      %s169 = smul.addr %s168, 4
      %s170 = scalar_lea.vmem %s3, %s169
      %vm172 = vcmask 64512
      %173 = vst.msk [vmem:[#allocation2] sm:$0xff] %vm172, 0.0
      %174 = vst.msk [vmem:[#allocation2 + $0x8] sm:$0xff] %vm172, 0.0
      %175 = vst.msk [vmem:[#allocation2 + $0x10] sm:$0xff] %vm172, 0.0
      %176 = vst.msk [vmem:[#allocation2 + $0x18] sm:$0xff] %vm172, 0.0
      %177 = vst.msk [vmem:[#allocation2 + $0x20] sm:$0xff] %vm172, 0.0
      %178 = vst.msk [vmem:[#allocation2 + $0x28] sm:$0xff] %vm172, 0.0
      %179 = vst.msk [vmem:[#allocation2 + $0x30] sm:$0xff] %vm172, 0.0
      %180 = vst.msk [vmem:[#allocation2 + $0x38] sm:$0xff] %vm172, 0.0
      %181 = vst.msk [vmem:[#allocation2 + $0x40] sm:$0xff] %vm172, 0.0
      %v182 = vld [vmem:[#allocation2] sm:$0xff]
      %v183 = vld [vmem:[#allocation2 + $0x8] sm:$0xff]
      %v184 = vld [vmem:[#allocation2 + $0x10] sm:$0xff]
      %v185 = vld [vmem:[#allocation2 + $0x18] sm:$0xff]
      %v186 = vld [vmem:[#allocation2 + $0x20] sm:$0xff]
      %v187 = vld [vmem:[#allocation2 + $0x28] sm:$0xff]
      %v188 = vld [vmem:[#allocation2 + $0x30] sm:$0xff]
      %v189 = vld [vmem:[#allocation2 + $0x38] sm:$0xff]
      %v190 = vld [vmem:[#allocation2 + $0x40] sm:$0xff]
      %v191 = vld [vmem:[%s165] sm:$0xf]
      %v192 = vld [vmem:[%s165 + $0x4] sm:$0xf]
      %v193 = vld [vmem:[%s165 + $0x8] sm:$0xf]
      %v194 = vld [vmem:[%s165 + $0xc] sm:$0xf]
      %v195 = vld [vmem:[%s165 + $0x10] sm:$0xf]
      %v196 = vld [vmem:[%s165 + $0x14] sm:$0xf]
      %v197 = vld [vmem:[%s165 + $0x18] sm:$0xf]
      %v198 = vld [vmem:[%s165 + $0x1c] sm:$0xf]
      %v199 = vld [vmem:[%s165 + $0x20] sm:$0xf]
      %v200 = vld [vmem:[%s1] sm:$0x3]
      %v210 = vunpack.c.l.b16 %v191
      %v211 = vunpack.c.l.b16 %v192
      %v212 = vunpack.c.l.b16 %v193
      %v213 = vunpack.c.l.b16 %v194
      %v214 = vunpack.c.l.b16 %v195
      %v215 = vunpack.c.l.b16 %v196
      %v216 = vunpack.c.l.b16 %v197
      %v217 = vunpack.c.l.b16 %v198
      %v218 = vunpack.c.l.b16 %v199
      %v219 = vpack.c.b16 %v211, %v210
      %v220 = vpack.c.b16 %v213, %v212
      %v221 = vpack.c.b16 %v215, %v214
      %v222 = vpack.c.b16 %v217, %v216
      %v223 = vpack.c.b16 %v218, %v218
      %vm224 = vcmask 31744
      %v226 = vsel %vm224, %v219, 0
      %v229 = vsel %vm224, %v220, 0
      %v232 = vsel %vm224, %v221, 0
      %v235 = vsel %vm224, %v222, 0
      %v238 = vsel %vm224, %v223, 0
      %vm240 = vcmask 1041408
      %v242 = vsel %vm240, %v200, 0
      %244 = vmatpush.bf16.msra.mxu0 0
      %245 = vmatpush.bf16.msra.mxu0 0
      %246 = vmatpush.bf16.msra.mxu0 0
      %247 = vmatpush.bf16.msra.mxu0 0
      %248 = vmatpush.bf16.msra.mxu0 0
      %249 = vmatpush.bf16.msra.mxu0 0
      %250 = vmatpush.bf16.msra.mxu0 0
      %251 = vmatpush.bf16.msra.mxu0 %v242
      %252 = vmatmul.bf16.gmra.mxu0 %v226
      %v253 = vpop.f32.mrf.mxu0
      %v254 = vadd.f32 0.0, %v253
      %v255 = vpop.f32.mrf.mxu0
      %v256 = vadd.f32 0.0, %v255
      %257 = vmatmul.bf16.gmra.mxu0 %v229
      %v258 = vpop.f32.mrf.mxu0
      %v259 = vadd.f32 0.0, %v258
      %v260 = vpop.f32.mrf.mxu0
      %v261 = vadd.f32 0.0, %v260
      %262 = vmatmul.bf16.gmra.mxu0 %v232
      %v263 = vpop.f32.mrf.mxu0
      %v264 = vadd.f32 0.0, %v263
      %v265 = vpop.f32.mrf.mxu0
      %v266 = vadd.f32 0.0, %v265
      %267 = vmatmul.bf16.gmra.mxu0 %v235
      %v268 = vpop.f32.mrf.mxu0
      %v269 = vadd.f32 0.0, %v268
      %v270 = vpop.f32.mrf.mxu0
      %v271 = vadd.f32 0.0, %v270
      %272 = vmatmul.bf16.gmra.mxu0 %v238
      %v273 = vpop.f32.mrf.mxu0
      %v274 = vadd.f32 0.0, %v273
      %v275 = vpop.f32.mrf.mxu0
      %276 = vdwg.mxu0
      %v277 = vadd.f32 %v182, %v254
      %v278 = vadd.f32 %v183, %v256
      %v279 = vadd.f32 %v184, %v259
      %v280 = vadd.f32 %v185, %v261
      %v281 = vadd.f32 %v186, %v264
      %v282 = vadd.f32 %v187, %v266
      %v283 = vadd.f32 %v188, %v269
      %v284 = vadd.f32 %v189, %v271
      %v285 = vadd.f32 %v190, %v274
      %286 = vst.msk [vmem:[#allocation2] sm:$0xff] %vm172, %v277
      %287 = vst.msk [vmem:[#allocation2 + $0x8] sm:$0xff] %vm172, %v278
      %288 = vst.msk [vmem:[#allocation2 + $0x10] sm:$0xff] %vm172, %v279
      %289 = vst.msk [vmem:[#allocation2 + $0x18] sm:$0xff] %vm172, %v280
      %290 = vst.msk [vmem:[#allocation2 + $0x20] sm:$0xff] %vm172, %v281
      %291 = vst.msk [vmem:[#allocation2 + $0x28] sm:$0xff] %vm172, %v282
      %292 = vst.msk [vmem:[#allocation2 + $0x30] sm:$0xff] %vm172, %v283
      %293 = vst.msk [vmem:[#allocation2 + $0x38] sm:$0xff] %vm172, %v284
      %294 = vst.msk [vmem:[#allocation2 + $0x40] sm:$0xff] %vm172, %v285
      %v295 = vld [vmem:[#allocation2] sm:$0xff]
      %v296 = vld [vmem:[#allocation2 + $0x8] sm:$0xff]
      %v297 = vld [vmem:[#allocation2 + $0x10] sm:$0xff]
      %v298 = vld [vmem:[#allocation2 + $0x18] sm:$0xff]
      %v299 = vld [vmem:[#allocation2 + $0x20] sm:$0xff]
      %v300 = vld [vmem:[#allocation2 + $0x28] sm:$0xff]
      %v301 = vld [vmem:[#allocation2 + $0x30] sm:$0xff]
      %v302 = vld [vmem:[#allocation2 + $0x38] sm:$0xff]
      %v303 = vld [vmem:[#allocation2 + $0x40] sm:$0xff]
      %s304 = scalar_lea.vmem %s165, 44
      %v305 = vld [vmem:[%s304] sm:$0xf]
      %v306 = vld [vmem:[%s304 + $0x4] sm:$0xf]
      %v307 = vld [vmem:[%s304 + $0x8] sm:$0xf]
      %v308 = vld [vmem:[%s304 + $0xc] sm:$0xf]
      %v309 = vld [vmem:[%s304 + $0x10] sm:$0xf]
      %v310 = vld [vmem:[%s304 + $0x14] sm:$0xf]
      %v311 = vld [vmem:[%s304 + $0x18] sm:$0xf]
      %v312 = vld [vmem:[%s304 + $0x1c] sm:$0xf]
      %v313 = vld [vmem:[%s304 + $0x20] sm:$0xf]
      %s314 = scalar_lea.vmem %s1, 2
      %v315 = vld [vmem:[%s314] sm:$0x3]
      %v325 = vunpack.c.l.b16 %v305
      %v326 = vunpack.c.l.b16 %v306
      %v327 = vunpack.c.l.b16 %v307
      %v328 = vunpack.c.l.b16 %v308
      %v329 = vunpack.c.l.b16 %v309
      %v330 = vunpack.c.l.b16 %v310
      %v331 = vunpack.c.l.b16 %v311
      %v332 = vunpack.c.l.b16 %v312
      %v333 = vunpack.c.l.b16 %v313
      %v334 = vpack.c.b16 %v326, %v325
      %v335 = vpack.c.b16 %v328, %v327
      %v336 = vpack.c.b16 %v330, %v329
      %v337 = vpack.c.b16 %v332, %v331
      %v338 = vpack.c.b16 %v333, %v333
      %v340 = vsel %vm224, %v334, 0
      %v343 = vsel %vm224, %v335, 0
      %v346 = vsel %vm224, %v336, 0
      %v349 = vsel %vm224, %v337, 0
      %v352 = vsel %vm224, %v338, 0
      %v355 = vsel %vm240, %v315, 0
      %357 = vmatpush.bf16.msra.mxu0 0
      %358 = vmatpush.bf16.msra.mxu0 0
      %359 = vmatpush.bf16.msra.mxu0 0
      %360 = vmatpush.bf16.msra.mxu0 0
      %361 = vmatpush.bf16.msra.mxu0 0
      %362 = vmatpush.bf16.msra.mxu0 0
      %363 = vmatpush.bf16.msra.mxu0 0
      %364 = vmatpush.bf16.msra.mxu0 %v355
      %365 = vmatmul.bf16.gmra.mxu0 %v340
      %v366 = vpop.f32.mrf.mxu0
      %v367 = vadd.f32 0.0, %v366
      %v368 = vpop.f32.mrf.mxu0
      %v369 = vadd.f32 0.0, %v368
      %370 = vmatmul.bf16.gmra.mxu0 %v343
      %v371 = vpop.f32.mrf.mxu0
      %v372 = vadd.f32 0.0, %v371
      %v373 = vpop.f32.mrf.mxu0
      %v374 = vadd.f32 0.0, %v373
      %375 = vmatmul.bf16.gmra.mxu0 %v346
      %v376 = vpop.f32.mrf.mxu0
      %v377 = vadd.f32 0.0, %v376
      %v378 = vpop.f32.mrf.mxu0
      %v379 = vadd.f32 0.0, %v378
      %380 = vmatmul.bf16.gmra.mxu0 %v349
      %v381 = vpop.f32.mrf.mxu0
      %v382 = vadd.f32 0.0, %v381
      %v383 = vpop.f32.mrf.mxu0
      %v384 = vadd.f32 0.0, %v383
      %385 = vmatmul.bf16.gmra.mxu0 %v352
      %v386 = vpop.f32.mrf.mxu0
      %v387 = vadd.f32 0.0, %v386
      %v388 = vpop.f32.mrf.mxu0
      %389 = vdwg.mxu0
      %v390 = vadd.f32 %v295, %v367
      %v391 = vadd.f32 %v296, %v369
      %v392 = vadd.f32 %v297, %v372
      %v393 = vadd.f32 %v298, %v374
      %v394 = vadd.f32 %v299, %v377
      %v395 = vadd.f32 %v300, %v379
      %v396 = vadd.f32 %v301, %v382
      %v397 = vadd.f32 %v302, %v384
      %v398 = vadd.f32 %v303, %v387
      %399 = vst.msk [vmem:[#allocation2] sm:$0xff] %vm172, %v390
      %400 = vst.msk [vmem:[#allocation2 + $0x8] sm:$0xff] %vm172, %v391
      %401 = vst.msk [vmem:[#allocation2 + $0x10] sm:$0xff] %vm172, %v392
      %402 = vst.msk [vmem:[#allocation2 + $0x18] sm:$0xff] %vm172, %v393
      %403 = vst.msk [vmem:[#allocation2 + $0x20] sm:$0xff] %vm172, %v394
      %404 = vst.msk [vmem:[#allocation2 + $0x28] sm:$0xff] %vm172, %v395
      %405 = vst.msk [vmem:[#allocation2 + $0x30] sm:$0xff] %vm172, %v396
      %406 = vst.msk [vmem:[#allocation2 + $0x38] sm:$0xff] %vm172, %v397
      %407 = vst.msk [vmem:[#allocation2 + $0x40] sm:$0xff] %vm172, %v398
      %v408 = vld [vmem:[#allocation2] sm:$0xff]
      %v409 = vld [vmem:[#allocation2 + $0x8] sm:$0xff]
      %v410 = vld [vmem:[#allocation2 + $0x10] sm:$0xff]
      %v411 = vld [vmem:[#allocation2 + $0x18] sm:$0xff]
      %v412 = vld [vmem:[#allocation2 + $0x20] sm:$0xff]
      %v413 = vld [vmem:[#allocation2 + $0x28] sm:$0xff]
      %v414 = vld [vmem:[#allocation2 + $0x30] sm:$0xff]
      %v415 = vld [vmem:[#allocation2 + $0x38] sm:$0xff]
      %v416 = vld [vmem:[#allocation2 + $0x40] sm:$0xff]
      %v417 = vld [vmem:[%s165] sm:$0xf]
      %v418 = vld [vmem:[%s165 + $0x4] sm:$0xf]
      %v419 = vld [vmem:[%s165 + $0x8] sm:$0xf]
      %v420 = vld [vmem:[%s165 + $0xc] sm:$0xf]
      %v421 = vld [vmem:[%s165 + $0x10] sm:$0xf]
      %v422 = vld [vmem:[%s165 + $0x14] sm:$0xf]
      %v423 = vld [vmem:[%s165 + $0x18] sm:$0xf]
      %v424 = vld [vmem:[%s165 + $0x1c] sm:$0xf]
      %v425 = vld [vmem:[%s165 + $0x20] sm:$0xf]
      %v426 = vld [vmem:[%s165 + $0x24] sm:$0x1]
      %s427 = scalar_lea.vmem %s1, 4
      %v428 = vld [vmem:[%s427] sm:$0x3]
      %v439 = vunpack.c.l.b16 %v417
      %v440 = vunpack.c.l.b16 %v418
      %v441 = vunpack.c.l.b16 %v419
      %v442 = vunpack.c.l.b16 %v420
      %v443 = vunpack.c.l.b16 %v421
      %v444 = vunpack.c.l.b16 %v422
      %v445 = vunpack.c.l.b16 %v423
      %v446 = vunpack.c.l.b16 %v424
      %v447 = vunpack.c.l.b16 %v425
      %v448 = vunpack.c.l.b16 %v426
      %v449 = vpack.c.b16 %v440, %v439
      %v450 = vpack.c.b16 %v442, %v441
      %v451 = vpack.c.b16 %v444, %v443
      %v452 = vpack.c.b16 %v446, %v445
      %v453 = vpack.c.b16 %v448, %v447
      %vm454 = vsmask.f32 7424
      %v456 = vshrl.u32 %v449, 16
      %v458 = vshll.u32 %v449, 16
      %v460 = vrot.slane %v458, 1
      %v461 = vor.u32 %v456, %v460
      %v463 = vshll.u32 %v450, 16
      %v465 = vrot.slane %v463, 1
      %v466 = vsel %vm454, %v461, %v465
      %v467 = vshrl.u32 %v450, 16
      %v469 = vor.u32 %v467, %v465
      %v471 = vshll.u32 %v451, 16
      %v473 = vrot.slane %v471, 1
      %v474 = vsel %vm454, %v469, %v473
      %v475 = vshrl.u32 %v451, 16
      %v477 = vor.u32 %v475, %v473
      %v479 = vshll.u32 %v452, 16
      %v481 = vrot.slane %v479, 1
      %v482 = vsel %vm454, %v477, %v481
      %v483 = vshrl.u32 %v452, 16
      %v485 = vor.u32 %v483, %v481
      %v487 = vshll.u32 %v453, 16
      %v489 = vrot.slane %v487, 1
      %v490 = vsel %vm454, %v485, %v489
      %v491 = vshrl.u32 %v453, 16
      %v493 = vor.u32 %v491, %v489
      %v495 = vsel %vm224, %v466, 0
      %v498 = vsel %vm224, %v474, 0
      %v501 = vsel %vm224, %v482, 0
      %v504 = vsel %vm224, %v490, 0
      %v507 = vsel %vm224, %v493, 0
      %v510 = vsel %vm240, %v428, 0
      %512 = vmatpush.bf16.msra.mxu0 0
      %513 = vmatpush.bf16.msra.mxu0 0
      %514 = vmatpush.bf16.msra.mxu0 0
      %515 = vmatpush.bf16.msra.mxu0 0
      %516 = vmatpush.bf16.msra.mxu0 0
      %517 = vmatpush.bf16.msra.mxu0 0
      %518 = vmatpush.bf16.msra.mxu0 0
      %519 = vmatpush.bf16.msra.mxu0 %v510
      %520 = vmatmul.bf16.gmra.mxu0 %v495
      %v521 = vpop.f32.mrf.mxu0
      %v522 = vadd.f32 0.0, %v521
      %v523 = vpop.f32.mrf.mxu0
      %v524 = vadd.f32 0.0, %v523
      %525 = vmatmul.bf16.gmra.mxu0 %v498
      %v526 = vpop.f32.mrf.mxu0
      %v527 = vadd.f32 0.0, %v526
      %v528 = vpop.f32.mrf.mxu0
      %v529 = vadd.f32 0.0, %v528
      %530 = vmatmul.bf16.gmra.mxu0 %v501
      %v531 = vpop.f32.mrf.mxu0
      %v532 = vadd.f32 0.0, %v531
      %v533 = vpop.f32.mrf.mxu0
      %v534 = vadd.f32 0.0, %v533
      %535 = vmatmul.bf16.gmra.mxu0 %v504
      %v536 = vpop.f32.mrf.mxu0
      %v537 = vadd.f32 0.0, %v536
      %v538 = vpop.f32.mrf.mxu0
      %v539 = vadd.f32 0.0, %v538
      %540 = vmatmul.bf16.gmra.mxu0 %v507
      %v541 = vpop.f32.mrf.mxu0
      %v542 = vadd.f32 0.0, %v541
      %v543 = vpop.f32.mrf.mxu0
      %544 = vdwg.mxu0
      %v545 = vadd.f32 %v408, %v522
      %v546 = vadd.f32 %v409, %v524
      %v547 = vadd.f32 %v410, %v527
      %v548 = vadd.f32 %v411, %v529
      %v549 = vadd.f32 %v412, %v532
      %v550 = vadd.f32 %v413, %v534
      %v551 = vadd.f32 %v414, %v537
      %v552 = vadd.f32 %v415, %v539
      %v553 = vadd.f32 %v416, %v542
      %554 = vst.msk [vmem:[#allocation2] sm:$0xff] %vm172, %v545
      %555 = vst.msk [vmem:[#allocation2 + $0x8] sm:$0xff] %vm172, %v546
      %556 = vst.msk [vmem:[#allocation2 + $0x10] sm:$0xff] %vm172, %v547
      %557 = vst.msk [vmem:[#allocation2 + $0x18] sm:$0xff] %vm172, %v548
      %558 = vst.msk [vmem:[#allocation2 + $0x20] sm:$0xff] %vm172, %v549
      %559 = vst.msk [vmem:[#allocation2 + $0x28] sm:$0xff] %vm172, %v550
      %560 = vst.msk [vmem:[#allocation2 + $0x30] sm:$0xff] %vm172, %v551
      %561 = vst.msk [vmem:[#allocation2 + $0x38] sm:$0xff] %vm172, %v552
      %562 = vst.msk [vmem:[#allocation2 + $0x40] sm:$0xff] %vm172, %v553
      %v563 = vld [vmem:[#allocation2] sm:$0xff]
      %v564 = vld [vmem:[#allocation2 + $0x8] sm:$0xff]
      %v565 = vld [vmem:[#allocation2 + $0x10] sm:$0xff]
      %v566 = vld [vmem:[#allocation2 + $0x18] sm:$0xff]
      %v567 = vld [vmem:[#allocation2 + $0x20] sm:$0xff]
      %v568 = vld [vmem:[#allocation2 + $0x28] sm:$0xff]
      %v569 = vld [vmem:[#allocation2 + $0x30] sm:$0xff]
      %v570 = vld [vmem:[#allocation2 + $0x38] sm:$0xff]
      %v571 = vld [vmem:[#allocation2 + $0x40] sm:$0xff]
      %s572 = scalar_lea.vmem %s165, 88
      %v573 = vld [vmem:[%s572] sm:$0xf]
      %v574 = vld [vmem:[%s572 + $0x4] sm:$0xf]
      %v575 = vld [vmem:[%s572 + $0x8] sm:$0xf]
      %v576 = vld [vmem:[%s572 + $0xc] sm:$0xf]
      %v577 = vld [vmem:[%s572 + $0x10] sm:$0xf]
      %v578 = vld [vmem:[%s572 + $0x14] sm:$0xf]
      %v579 = vld [vmem:[%s572 + $0x18] sm:$0xf]
      %v580 = vld [vmem:[%s572 + $0x1c] sm:$0xf]
      %v581 = vld [vmem:[%s572 + $0x20] sm:$0xf]
      %s582 = scalar_lea.vmem %s1, 6
      %v583 = vld [vmem:[%s582] sm:$0x3]
      %v593 = vunpack.c.l.b16 %v573
      %v594 = vunpack.c.l.b16 %v574
      %v595 = vunpack.c.l.b16 %v575
      %v596 = vunpack.c.l.b16 %v576
      %v597 = vunpack.c.l.b16 %v577
      %v598 = vunpack.c.l.b16 %v578
      %v599 = vunpack.c.l.b16 %v579
      %v600 = vunpack.c.l.b16 %v580
      %v601 = vunpack.c.l.b16 %v581
      %v602 = vpack.c.b16 %v594, %v593
      %v603 = vpack.c.b16 %v596, %v595
      %v604 = vpack.c.b16 %v598, %v597
      %v605 = vpack.c.b16 %v600, %v599
      %v606 = vpack.c.b16 %v601, %v601
      %v608 = vsel %vm224, %v602, 0
      %v611 = vsel %vm224, %v603, 0
      %v614 = vsel %vm224, %v604, 0
      %v617 = vsel %vm224, %v605, 0
      %v620 = vsel %vm224, %v606, 0
      %v623 = vsel %vm240, %v583, 0
      %625 = vmatpush.bf16.msra.mxu0 0
      %626 = vmatpush.bf16.msra.mxu0 0
      %627 = vmatpush.bf16.msra.mxu0 0
      %628 = vmatpush.bf16.msra.mxu0 0
      %629 = vmatpush.bf16.msra.mxu0 0
      %630 = vmatpush.bf16.msra.mxu0 0
      %631 = vmatpush.bf16.msra.mxu0 0
      %632 = vmatpush.bf16.msra.mxu0 %v623
      %633 = vmatmul.bf16.gmra.mxu0 %v608
      %v634 = vpop.f32.mrf.mxu0
      %v635 = vadd.f32 0.0, %v634
      %v636 = vpop.f32.mrf.mxu0
      %v637 = vadd.f32 0.0, %v636
      %638 = vmatmul.bf16.gmra.mxu0 %v611
      %v639 = vpop.f32.mrf.mxu0
      %v640 = vadd.f32 0.0, %v639
      %v641 = vpop.f32.mrf.mxu0
      %v642 = vadd.f32 0.0, %v641
      %643 = vmatmul.bf16.gmra.mxu0 %v614
      %v644 = vpop.f32.mrf.mxu0
      %v645 = vadd.f32 0.0, %v644
      %v646 = vpop.f32.mrf.mxu0
      %v647 = vadd.f32 0.0, %v646
      %648 = vmatmul.bf16.gmra.mxu0 %v617
      %v649 = vpop.f32.mrf.mxu0
      %v650 = vadd.f32 0.0, %v649
      %v651 = vpop.f32.mrf.mxu0
      %v652 = vadd.f32 0.0, %v651
      %653 = vmatmul.bf16.gmra.mxu0 %v620
      %v654 = vpop.f32.mrf.mxu0
      %v655 = vadd.f32 0.0, %v654
      %v656 = vpop.f32.mrf.mxu0
      %657 = vdwg.mxu0
      %v658 = vadd.f32 %v563, %v635
      %v659 = vadd.f32 %v564, %v637
      %v660 = vadd.f32 %v565, %v640
      %v661 = vadd.f32 %v566, %v642
      %v662 = vadd.f32 %v567, %v645
      %v663 = vadd.f32 %v568, %v647
      %v664 = vadd.f32 %v569, %v650
      %v665 = vadd.f32 %v570, %v652
      %v666 = vadd.f32 %v571, %v655
      %667 = vst.msk [vmem:[#allocation2] sm:$0xff] %vm172, %v658
      %668 = vst.msk [vmem:[#allocation2 + $0x8] sm:$0xff] %vm172, %v659
      %669 = vst.msk [vmem:[#allocation2 + $0x10] sm:$0xff] %vm172, %v660
      %670 = vst.msk [vmem:[#allocation2 + $0x18] sm:$0xff] %vm172, %v661
      %671 = vst.msk [vmem:[#allocation2 + $0x20] sm:$0xff] %vm172, %v662
      %672 = vst.msk [vmem:[#allocation2 + $0x28] sm:$0xff] %vm172, %v663
      %673 = vst.msk [vmem:[#allocation2 + $0x30] sm:$0xff] %vm172, %v664
      %674 = vst.msk [vmem:[#allocation2 + $0x38] sm:$0xff] %vm172, %v665
      %675 = vst.msk [vmem:[#allocation2 + $0x40] sm:$0xff] %vm172, %v666
      %v676 = vld [vmem:[#allocation2] sm:$0xff]
      %v677 = vld [vmem:[#allocation2 + $0x8] sm:$0xff]
      %v678 = vld [vmem:[#allocation2 + $0x10] sm:$0xff]
      %v679 = vld [vmem:[#allocation2 + $0x18] sm:$0xff]
      %v680 = vld [vmem:[#allocation2 + $0x20] sm:$0xff]
      %v681 = vld [vmem:[#allocation2 + $0x28] sm:$0xff]
      %v682 = vld [vmem:[#allocation2 + $0x30] sm:$0xff]
      %v683 = vld [vmem:[#allocation2 + $0x38] sm:$0xff]
      %v684 = vld [vmem:[#allocation2 + $0x40] sm:$0xff]
      %s685 = scalar_lea.vmem %s165, 132
      %v686 = vld [vmem:[%s685] sm:$0xf]
      %v687 = vld [vmem:[%s685 + $0x4] sm:$0xf]
      %v688 = vld [vmem:[%s685 + $0x8] sm:$0xf]
      %v689 = vld [vmem:[%s685 + $0xc] sm:$0xf]
      %v690 = vld [vmem:[%s685 + $0x10] sm:$0xf]
      %v691 = vld [vmem:[%s685 + $0x14] sm:$0xf]
      %v692 = vld [vmem:[%s685 + $0x18] sm:$0xf]
      %v693 = vld [vmem:[%s685 + $0x1c] sm:$0xf]
      %v694 = vld [vmem:[%s685 + $0x20] sm:$0xf]
      %s695 = scalar_lea.vmem %s1, 8
      %v696 = vld [vmem:[%s695] sm:$0x3]
      %v706 = vunpack.c.l.b16 %v686
      %v707 = vunpack.c.l.b16 %v687
      %v708 = vunpack.c.l.b16 %v688
      %v709 = vunpack.c.l.b16 %v689
      %v710 = vunpack.c.l.b16 %v690
      %v711 = vunpack.c.l.b16 %v691
      %v712 = vunpack.c.l.b16 %v692
      %v713 = vunpack.c.l.b16 %v693
      %v714 = vunpack.c.l.b16 %v694
      %v715 = vpack.c.b16 %v707, %v706
      %v716 = vpack.c.b16 %v709, %v708
      %v717 = vpack.c.b16 %v711, %v710
      %v718 = vpack.c.b16 %v713, %v712
      %v719 = vpack.c.b16 %v714, %v714
      %v721 = vsel %vm224, %v715, 0
      %v724 = vsel %vm224, %v716, 0
      %v727 = vsel %vm224, %v717, 0
      %v730 = vsel %vm224, %v718, 0
      %v733 = vsel %vm224, %v719, 0
      %v736 = vsel %vm240, %v696, 0
      %738 = vmatpush.bf16.msra.mxu0 0
      %739 = vmatpush.bf16.msra.mxu0 0
      %740 = vmatpush.bf16.msra.mxu0 0
      %741 = vmatpush.bf16.msra.mxu0 0
      %742 = vmatpush.bf16.msra.mxu0 0
      %743 = vmatpush.bf16.msra.mxu0 0
      %744 = vmatpush.bf16.msra.mxu0 0
      %745 = vmatpush.bf16.msra.mxu0 %v736
      %746 = vmatmul.bf16.gmra.mxu0 %v721
      %v747 = vpop.f32.mrf.mxu0
      %v748 = vadd.f32 0.0, %v747
      %v749 = vpop.f32.mrf.mxu0
      %v750 = vadd.f32 0.0, %v749
      %751 = vmatmul.bf16.gmra.mxu0 %v724
      %v752 = vpop.f32.mrf.mxu0
      %v753 = vadd.f32 0.0, %v752
      %v754 = vpop.f32.mrf.mxu0
      %v755 = vadd.f32 0.0, %v754
      %756 = vmatmul.bf16.gmra.mxu0 %v727
      %v757 = vpop.f32.mrf.mxu0
      %v758 = vadd.f32 0.0, %v757
      %v759 = vpop.f32.mrf.mxu0
      %v760 = vadd.f32 0.0, %v759
      %761 = vmatmul.bf16.gmra.mxu0 %v730
      %v762 = vpop.f32.mrf.mxu0
      %v763 = vadd.f32 0.0, %v762
      %v764 = vpop.f32.mrf.mxu0
      %v765 = vadd.f32 0.0, %v764
      %766 = vmatmul.bf16.gmra.mxu0 %v733
      %v767 = vpop.f32.mrf.mxu0
      %v768 = vadd.f32 0.0, %v767
      %v769 = vpop.f32.mrf.mxu0
      %770 = vdwg.mxu0
      %v771 = vadd.f32 %v676, %v748
      %v772 = vadd.f32 %v677, %v750
      %v773 = vadd.f32 %v678, %v753
      %v774 = vadd.f32 %v679, %v755
      %v775 = vadd.f32 %v680, %v758
      %v776 = vadd.f32 %v681, %v760
      %v777 = vadd.f32 %v682, %v763
      %v778 = vadd.f32 %v683, %v765
      %v779 = vadd.f32 %v684, %v768
      %780 = vst.msk [vmem:[#allocation2] sm:$0xff] %vm172, %v771
      %781 = vst.msk [vmem:[#allocation2 + $0x8] sm:$0xff] %vm172, %v772
      %782 = vst.msk [vmem:[#allocation2 + $0x10] sm:$0xff] %vm172, %v773
      %783 = vst.msk [vmem:[#allocation2 + $0x18] sm:$0xff] %vm172, %v774
      %784 = vst.msk [vmem:[#allocation2 + $0x20] sm:$0xff] %vm172, %v775
      %785 = vst.msk [vmem:[#allocation2 + $0x28] sm:$0xff] %vm172, %v776
      %786 = vst.msk [vmem:[#allocation2 + $0x30] sm:$0xff] %vm172, %v777
      %787 = vst.msk [vmem:[#allocation2 + $0x38] sm:$0xff] %vm172, %v778
      %788 = vst.msk [vmem:[#allocation2 + $0x40] sm:$0xff] %vm172, %v779
      %v789 = vld [vmem:[#allocation2] sm:$0xff]
      %v790 = vld [vmem:[#allocation2 + $0x8] sm:$0xff]
      %v791 = vld [vmem:[#allocation2 + $0x10] sm:$0xff]
      %v792 = vld [vmem:[#allocation2 + $0x18] sm:$0xff]
      %v793 = vld [vmem:[#allocation2 + $0x20] sm:$0xff]
      %v794 = vld [vmem:[#allocation2 + $0x28] sm:$0xff]
      %v795 = vld [vmem:[#allocation2 + $0x30] sm:$0xff]
      %v796 = vld [vmem:[#allocation2 + $0x38] sm:$0xff]
      %v797 = vld [vmem:[#allocation2 + $0x40] sm:$0xff]
      %v798 = vld [vmem:[%s572] sm:$0xf]
      %v799 = vld [vmem:[%s572 + $0x4] sm:$0xf]
      %v800 = vld [vmem:[%s572 + $0x8] sm:$0xf]
      %v801 = vld [vmem:[%s572 + $0xc] sm:$0xf]
      %v802 = vld [vmem:[%s572 + $0x10] sm:$0xf]
      %v803 = vld [vmem:[%s572 + $0x14] sm:$0xf]
      %v804 = vld [vmem:[%s572 + $0x18] sm:$0xf]
      %v805 = vld [vmem:[%s572 + $0x1c] sm:$0xf]
      %v806 = vld [vmem:[%s572 + $0x20] sm:$0xf]
      %v807 = vld [vmem:[%s572 + $0x24] sm:$0x1]
      %s808 = scalar_lea.vmem %s1, 10
      %v809 = vld [vmem:[%s808] sm:$0x3]
      %v820 = vunpack.c.l.b16 %v798
      %v821 = vunpack.c.l.b16 %v799
      %v822 = vunpack.c.l.b16 %v800
      %v823 = vunpack.c.l.b16 %v801
      %v824 = vunpack.c.l.b16 %v802
      %v825 = vunpack.c.l.b16 %v803
      %v826 = vunpack.c.l.b16 %v804
      %v827 = vunpack.c.l.b16 %v805
      %v828 = vunpack.c.l.b16 %v806
      %v829 = vunpack.c.l.b16 %v807
      %v830 = vpack.c.b16 %v821, %v820
      %v831 = vpack.c.b16 %v823, %v822
      %v832 = vpack.c.b16 %v825, %v824
      %v833 = vpack.c.b16 %v827, %v826
      %v834 = vpack.c.b16 %v829, %v828
      %v836 = vshrl.u32 %v830, 16
      %v838 = vshll.u32 %v830, 16
      %v840 = vrot.slane %v838, 1
      %v841 = vor.u32 %v836, %v840
      %v843 = vshll.u32 %v831, 16
      %v845 = vrot.slane %v843, 1
      %v846 = vsel %vm454, %v841, %v845
      %v847 = vshrl.u32 %v831, 16
      %v849 = vor.u32 %v847, %v845
      %v851 = vshll.u32 %v832, 16
      %v853 = vrot.slane %v851, 1
      %v854 = vsel %vm454, %v849, %v853
      %v855 = vshrl.u32 %v832, 16
      %v857 = vor.u32 %v855, %v853
      %v859 = vshll.u32 %v833, 16
      %v861 = vrot.slane %v859, 1
      %v862 = vsel %vm454, %v857, %v861
      %v863 = vshrl.u32 %v833, 16
      %v865 = vor.u32 %v863, %v861
      %v867 = vshll.u32 %v834, 16
      %v869 = vrot.slane %v867, 1
      %v870 = vsel %vm454, %v865, %v869
      %v871 = vshrl.u32 %v834, 16
      %v873 = vor.u32 %v871, %v869
      %v875 = vsel %vm224, %v846, 0
      %v878 = vsel %vm224, %v854, 0
      %v881 = vsel %vm224, %v862, 0
      %v884 = vsel %vm224, %v870, 0
      %v887 = vsel %vm224, %v873, 0
      %v890 = vsel %vm240, %v809, 0
      %892 = vmatpush.bf16.msra.mxu0 0
      %893 = vmatpush.bf16.msra.mxu0 0
      %894 = vmatpush.bf16.msra.mxu0 0
      %895 = vmatpush.bf16.msra.mxu0 0
      %896 = vmatpush.bf16.msra.mxu0 0
      %897 = vmatpush.bf16.msra.mxu0 0
      %898 = vmatpush.bf16.msra.mxu0 0
      %899 = vmatpush.bf16.msra.mxu0 %v890
      %900 = vmatmul.bf16.gmra.mxu0 %v875
      %v901 = vpop.f32.mrf.mxu0
      %v902 = vadd.f32 0.0, %v901
      %v903 = vpop.f32.mrf.mxu0
      %v904 = vadd.f32 0.0, %v903
      %905 = vmatmul.bf16.gmra.mxu0 %v878
      %v906 = vpop.f32.mrf.mxu0
      %v907 = vadd.f32 0.0, %v906
      %v908 = vpop.f32.mrf.mxu0
      %v909 = vadd.f32 0.0, %v908
      %910 = vmatmul.bf16.gmra.mxu0 %v881
      %v911 = vpop.f32.mrf.mxu0
      %v912 = vadd.f32 0.0, %v911
      %v913 = vpop.f32.mrf.mxu0
      %v914 = vadd.f32 0.0, %v913
      %915 = vmatmul.bf16.gmra.mxu0 %v884
      %v916 = vpop.f32.mrf.mxu0
      %v917 = vadd.f32 0.0, %v916
      %v918 = vpop.f32.mrf.mxu0
      %v919 = vadd.f32 0.0, %v918
      %920 = vmatmul.bf16.gmra.mxu0 %v887
      %v921 = vpop.f32.mrf.mxu0
      %v922 = vadd.f32 0.0, %v921
      %v923 = vpop.f32.mrf.mxu0
      %924 = vdwg.mxu0
      %v925 = vadd.f32 %v789, %v902
      %v926 = vadd.f32 %v790, %v904
      %v927 = vadd.f32 %v791, %v907
      %v928 = vadd.f32 %v792, %v909
      %v929 = vadd.f32 %v793, %v912
      %v930 = vadd.f32 %v794, %v914
      %v931 = vadd.f32 %v795, %v917
      %v932 = vadd.f32 %v796, %v919
      %v933 = vadd.f32 %v797, %v922
      %934 = vst.msk [vmem:[#allocation2] sm:$0xff] %vm172, %v925
      %935 = vst.msk [vmem:[#allocation2 + $0x8] sm:$0xff] %vm172, %v926
      %936 = vst.msk [vmem:[#allocation2 + $0x10] sm:$0xff] %vm172, %v927
      %937 = vst.msk [vmem:[#allocation2 + $0x18] sm:$0xff] %vm172, %v928
      %938 = vst.msk [vmem:[#allocation2 + $0x20] sm:$0xff] %vm172, %v929
      %939 = vst.msk [vmem:[#allocation2 + $0x28] sm:$0xff] %vm172, %v930
      %940 = vst.msk [vmem:[#allocation2 + $0x30] sm:$0xff] %vm172, %v931
      %941 = vst.msk [vmem:[#allocation2 + $0x38] sm:$0xff] %vm172, %v932
      %942 = vst.msk [vmem:[#allocation2 + $0x40] sm:$0xff] %vm172, %v933
      %v943 = vld [vmem:[#allocation2] sm:$0xff]
      %v944 = vld [vmem:[#allocation2 + $0x8] sm:$0xff]
      %v945 = vld [vmem:[#allocation2 + $0x10] sm:$0xff]
      %v946 = vld [vmem:[#allocation2 + $0x18] sm:$0xff]
      %v947 = vld [vmem:[#allocation2 + $0x20] sm:$0xff]
      %v948 = vld [vmem:[#allocation2 + $0x28] sm:$0xff]
      %v949 = vld [vmem:[#allocation2 + $0x30] sm:$0xff]
      %v950 = vld [vmem:[#allocation2 + $0x38] sm:$0xff]
      %v951 = vld [vmem:[#allocation2 + $0x40] sm:$0xff]
      %v952 = vld [vmem:[%s165 + $0x4] sm:$0xf]
      %v953 = vld [vmem:[%s165 + $0x8] sm:$0xf]
      %v954 = vld [vmem:[%s165 + $0xc] sm:$0xf]
      %v955 = vld [vmem:[%s165 + $0x10] sm:$0xf]
      %v956 = vld [vmem:[%s165 + $0x14] sm:$0xf]
      %v957 = vld [vmem:[%s165 + $0x18] sm:$0xf]
      %v958 = vld [vmem:[%s165 + $0x1c] sm:$0xf]
      %v959 = vld [vmem:[%s165 + $0x20] sm:$0xf]
      %v960 = vld [vmem:[%s165 + $0x24] sm:$0xf]
      %v961 = vld [vmem:[%s165 + $0x28] sm:$0x1]
      %s962 = scalar_lea.vmem %s1, 12
      %v963 = vld [vmem:[%s962] sm:$0x3]
      %v974 = vunpack.c.l.b16 %v952
      %v975 = vunpack.c.l.b16 %v953
      %v976 = vunpack.c.l.b16 %v954
      %v977 = vunpack.c.l.b16 %v955
      %v978 = vunpack.c.l.b16 %v956
      %v979 = vunpack.c.l.b16 %v957
      %v980 = vunpack.c.l.b16 %v958
      %v981 = vunpack.c.l.b16 %v959
      %v982 = vunpack.c.l.b16 %v960
      %v983 = vunpack.c.l.b16 %v961
      %v984 = vpack.c.b16 %v975, %v974
      %v985 = vpack.c.b16 %v977, %v976
      %v986 = vpack.c.b16 %v979, %v978
      %v987 = vpack.c.b16 %v981, %v980
      %v988 = vpack.c.b16 %v983, %v982
      %v990 = vshrl.u32 %v984, 16
      %v992 = vshll.u32 %v984, 16
      %v994 = vrot.slane %v992, 1
      %v995 = vor.u32 %v990, %v994
      %v997 = vshll.u32 %v985, 16
      %v999 = vrot.slane %v997, 1
      %v1000 = vsel %vm454, %v995, %v999
      %v1001 = vshrl.u32 %v985, 16
      %v1003 = vor.u32 %v1001, %v999
      %v1005 = vshll.u32 %v986, 16
      %v1007 = vrot.slane %v1005, 1
      %v1008 = vsel %vm454, %v1003, %v1007
      %v1009 = vshrl.u32 %v986, 16
      %v1011 = vor.u32 %v1009, %v1007
      %v1013 = vshll.u32 %v987, 16
      %v1015 = vrot.slane %v1013, 1
      %v1016 = vsel %vm454, %v1011, %v1015
      %v1017 = vshrl.u32 %v987, 16
      %v1019 = vor.u32 %v1017, %v1015
      %v1021 = vshll.u32 %v988, 16
      %v1023 = vrot.slane %v1021, 1
      %v1024 = vsel %vm454, %v1019, %v1023
      %v1025 = vshrl.u32 %v988, 16
      %v1027 = vor.u32 %v1025, %v1023
      %v1029 = vsel %vm224, %v1000, 0
      %v1032 = vsel %vm224, %v1008, 0
      %v1035 = vsel %vm224, %v1016, 0
      %v1038 = vsel %vm224, %v1024, 0
      %v1041 = vsel %vm224, %v1027, 0
      %v1044 = vsel %vm240, %v963, 0
      %1046 = vmatpush.bf16.msra.mxu0 0
      %1047 = vmatpush.bf16.msra.mxu0 0
      %1048 = vmatpush.bf16.msra.mxu0 0
      %1049 = vmatpush.bf16.msra.mxu0 0
      %1050 = vmatpush.bf16.msra.mxu0 0
      %1051 = vmatpush.bf16.msra.mxu0 0
      %1052 = vmatpush.bf16.msra.mxu0 0
      %1053 = vmatpush.bf16.msra.mxu0 %v1044
      %1054 = vmatmul.bf16.gmra.mxu0 %v1029
      %v1055 = vpop.f32.mrf.mxu0
      %v1056 = vadd.f32 0.0, %v1055
      %v1057 = vpop.f32.mrf.mxu0
      %v1058 = vadd.f32 0.0, %v1057
      %1059 = vmatmul.bf16.gmra.mxu0 %v1032
      %v1060 = vpop.f32.mrf.mxu0
      %v1061 = vadd.f32 0.0, %v1060
      %v1062 = vpop.f32.mrf.mxu0
      %v1063 = vadd.f32 0.0, %v1062
      %1064 = vmatmul.bf16.gmra.mxu0 %v1035
      %v1065 = vpop.f32.mrf.mxu0
      %v1066 = vadd.f32 0.0, %v1065
      %v1067 = vpop.f32.mrf.mxu0
      %v1068 = vadd.f32 0.0, %v1067
      %1069 = vmatmul.bf16.gmra.mxu0 %v1038
      %v1070 = vpop.f32.mrf.mxu0
      %v1071 = vadd.f32 0.0, %v1070
      %v1072 = vpop.f32.mrf.mxu0
      %v1073 = vadd.f32 0.0, %v1072
      %1074 = vmatmul.bf16.gmra.mxu0 %v1041
      %v1075 = vpop.f32.mrf.mxu0
      %v1076 = vadd.f32 0.0, %v1075
      %v1077 = vpop.f32.mrf.mxu0
      %1078 = vdwg.mxu0
      %v1079 = vadd.f32 %v943, %v1056
      %v1080 = vadd.f32 %v944, %v1058
      %v1081 = vadd.f32 %v945, %v1061
      %v1082 = vadd.f32 %v946, %v1063
      %v1083 = vadd.f32 %v947, %v1066
      %v1084 = vadd.f32 %v948, %v1068
      %v1085 = vadd.f32 %v949, %v1071
      %v1086 = vadd.f32 %v950, %v1073
      %v1087 = vadd.f32 %v951, %v1076
      %1088 = vst.msk [vmem:[#allocation2] sm:$0xff] %vm172, %v1079
      %1089 = vst.msk [vmem:[#allocation2 + $0x8] sm:$0xff] %vm172, %v1080
      %1090 = vst.msk [vmem:[#allocation2 + $0x10] sm:$0xff] %vm172, %v1081
      %1091 = vst.msk [vmem:[#allocation2 + $0x18] sm:$0xff] %vm172, %v1082
      %1092 = vst.msk [vmem:[#allocation2 + $0x20] sm:$0xff] %vm172, %v1083
      %1093 = vst.msk [vmem:[#allocation2 + $0x28] sm:$0xff] %vm172, %v1084
      %1094 = vst.msk [vmem:[#allocation2 + $0x30] sm:$0xff] %vm172, %v1085
      %1095 = vst.msk [vmem:[#allocation2 + $0x38] sm:$0xff] %vm172, %v1086
      %1096 = vst.msk [vmem:[#allocation2 + $0x40] sm:$0xff] %vm172, %v1087
      %v1097 = vld [vmem:[#allocation2] sm:$0xff]
      %v1098 = vld [vmem:[#allocation2 + $0x8] sm:$0xff]
      %v1099 = vld [vmem:[#allocation2 + $0x10] sm:$0xff]
      %v1100 = vld [vmem:[#allocation2 + $0x18] sm:$0xff]
      %v1101 = vld [vmem:[#allocation2 + $0x20] sm:$0xff]
      %v1102 = vld [vmem:[#allocation2 + $0x28] sm:$0xff]
      %v1103 = vld [vmem:[#allocation2 + $0x30] sm:$0xff]
      %v1104 = vld [vmem:[#allocation2 + $0x38] sm:$0xff]
      %v1105 = vld [vmem:[#allocation2 + $0x40] sm:$0xff]
      %v1106 = vld [vmem:[%s304 + $0x4] sm:$0xf]
      %v1107 = vld [vmem:[%s304 + $0x8] sm:$0xf]
      %v1108 = vld [vmem:[%s304 + $0xc] sm:$0xf]
      %v1109 = vld [vmem:[%s304 + $0x10] sm:$0xf]
      %v1110 = vld [vmem:[%s304 + $0x14] sm:$0xf]
      %v1111 = vld [vmem:[%s304 + $0x18] sm:$0xf]
      %v1112 = vld [vmem:[%s304 + $0x1c] sm:$0xf]
      %v1113 = vld [vmem:[%s304 + $0x20] sm:$0xf]
      %v1114 = vld [vmem:[%s304 + $0x24] sm:$0xf]
      %v1115 = vld [vmem:[%s304 + $0x28] sm:$0x1]
      %s1116 = scalar_lea.vmem %s1, 14
      %v1117 = vld [vmem:[%s1116] sm:$0x3]
      %v1128 = vunpack.c.l.b16 %v1106
      %v1129 = vunpack.c.l.b16 %v1107
      %v1130 = vunpack.c.l.b16 %v1108
      %v1131 = vunpack.c.l.b16 %v1109
      %v1132 = vunpack.c.l.b16 %v1110
      %v1133 = vunpack.c.l.b16 %v1111
      %v1134 = vunpack.c.l.b16 %v1112
      %v1135 = vunpack.c.l.b16 %v1113
      %v1136 = vunpack.c.l.b16 %v1114
      %v1137 = vunpack.c.l.b16 %v1115
      %v1138 = vpack.c.b16 %v1129, %v1128
      %v1139 = vpack.c.b16 %v1131, %v1130
      %v1140 = vpack.c.b16 %v1133, %v1132
      %v1141 = vpack.c.b16 %v1135, %v1134
      %v1142 = vpack.c.b16 %v1137, %v1136
      %v1144 = vshrl.u32 %v1138, 16
      %v1146 = vshll.u32 %v1138, 16
      %v1148 = vrot.slane %v1146, 1
      %v1149 = vor.u32 %v1144, %v1148
      %v1151 = vshll.u32 %v1139, 16
      %v1153 = vrot.slane %v1151, 1
      %v1154 = vsel %vm454, %v1149, %v1153
      %v1155 = vshrl.u32 %v1139, 16
      %v1157 = vor.u32 %v1155, %v1153
      %v1159 = vshll.u32 %v1140, 16
      %v1161 = vrot.slane %v1159, 1
      %v1162 = vsel %vm454, %v1157, %v1161
      %v1163 = vshrl.u32 %v1140, 16
      %v1165 = vor.u32 %v1163, %v1161
      %v1167 = vshll.u32 %v1141, 16
      %v1169 = vrot.slane %v1167, 1
      %v1170 = vsel %vm454, %v1165, %v1169
      %v1171 = vshrl.u32 %v1141, 16
      %v1173 = vor.u32 %v1171, %v1169
      %v1175 = vshll.u32 %v1142, 16
      %v1177 = vrot.slane %v1175, 1
      %v1178 = vsel %vm454, %v1173, %v1177
      %v1179 = vshrl.u32 %v1142, 16
      %v1181 = vor.u32 %v1179, %v1177
      %v1183 = vsel %vm224, %v1154, 0
      %v1186 = vsel %vm224, %v1162, 0
      %v1189 = vsel %vm224, %v1170, 0
      %v1192 = vsel %vm224, %v1178, 0
      %v1195 = vsel %vm224, %v1181, 0
      %v1198 = vsel %vm240, %v1117, 0
      %1200 = vmatpush.bf16.msra.mxu0 0
      %1201 = vmatpush.bf16.msra.mxu0 0
      %1202 = vmatpush.bf16.msra.mxu0 0
      %1203 = vmatpush.bf16.msra.mxu0 0
      %1204 = vmatpush.bf16.msra.mxu0 0
      %1205 = vmatpush.bf16.msra.mxu0 0
      %1206 = vmatpush.bf16.msra.mxu0 0
      %1207 = vmatpush.bf16.msra.mxu0 %v1198
      %1208 = vmatmul.bf16.gmra.mxu0 %v1183
      %v1209 = vpop.f32.mrf.mxu0
      %v1210 = vadd.f32 0.0, %v1209
      %v1211 = vpop.f32.mrf.mxu0
      %v1212 = vadd.f32 0.0, %v1211
      %1213 = vmatmul.bf16.gmra.mxu0 %v1186
      %v1214 = vpop.f32.mrf.mxu0
      %v1215 = vadd.f32 0.0, %v1214
      %v1216 = vpop.f32.mrf.mxu0
      %v1217 = vadd.f32 0.0, %v1216
      %1218 = vmatmul.bf16.gmra.mxu0 %v1189
      %v1219 = vpop.f32.mrf.mxu0
      %v1220 = vadd.f32 0.0, %v1219
      %v1221 = vpop.f32.mrf.mxu0
      %v1222 = vadd.f32 0.0, %v1221
      %1223 = vmatmul.bf16.gmra.mxu0 %v1192
      %v1224 = vpop.f32.mrf.mxu0
      %v1225 = vadd.f32 0.0, %v1224
      %v1226 = vpop.f32.mrf.mxu0
      %v1227 = vadd.f32 0.0, %v1226
      %1228 = vmatmul.bf16.gmra.mxu0 %v1195
      %v1229 = vpop.f32.mrf.mxu0
      %v1230 = vadd.f32 0.0, %v1229
      %v1231 = vpop.f32.mrf.mxu0
      %1232 = vdwg.mxu0
      %v1233 = vadd.f32 %v1097, %v1210
      %v1234 = vadd.f32 %v1098, %v1212
      %v1235 = vadd.f32 %v1099, %v1215
      %v1236 = vadd.f32 %v1100, %v1217
      %v1237 = vadd.f32 %v1101, %v1220
      %v1238 = vadd.f32 %v1102, %v1222
      %v1239 = vadd.f32 %v1103, %v1225
      %v1240 = vadd.f32 %v1104, %v1227
      %v1241 = vadd.f32 %v1105, %v1230
      %1242 = vst.msk [vmem:[#allocation2] sm:$0xff] %vm172, %v1233
      %1243 = vst.msk [vmem:[#allocation2 + $0x8] sm:$0xff] %vm172, %v1234
      %1244 = vst.msk [vmem:[#allocation2 + $0x10] sm:$0xff] %vm172, %v1235
      %1245 = vst.msk [vmem:[#allocation2 + $0x18] sm:$0xff] %vm172, %v1236
      %1246 = vst.msk [vmem:[#allocation2 + $0x20] sm:$0xff] %vm172, %v1237
      %1247 = vst.msk [vmem:[#allocation2 + $0x28] sm:$0xff] %vm172, %v1238
      %1248 = vst.msk [vmem:[#allocation2 + $0x30] sm:$0xff] %vm172, %v1239
      %1249 = vst.msk [vmem:[#allocation2 + $0x38] sm:$0xff] %vm172, %v1240
      %1250 = vst.msk [vmem:[#allocation2 + $0x40] sm:$0xff] %vm172, %v1241
      %v1251 = vld [vmem:[#allocation2] sm:$0xff]
      %v1252 = vld [vmem:[#allocation2 + $0x8] sm:$0xff]
      %v1253 = vld [vmem:[#allocation2 + $0x10] sm:$0xff]
      %v1254 = vld [vmem:[#allocation2 + $0x18] sm:$0xff]
      %v1255 = vld [vmem:[#allocation2 + $0x20] sm:$0xff]
      %v1256 = vld [vmem:[#allocation2 + $0x28] sm:$0xff]
      %v1257 = vld [vmem:[#allocation2 + $0x30] sm:$0xff]
      %v1258 = vld [vmem:[#allocation2 + $0x38] sm:$0xff]
      %v1259 = vld [vmem:[#allocation2 + $0x40] sm:$0xff]
      %v1260 = vld [vmem:[%s165 + $0x4] sm:$0xe]
      %v1261 = vld [vmem:[%s165 + $0x8] sm:$0xf]
      %v1262 = vld [vmem:[%s165 + $0xc] sm:$0xf]
      %v1263 = vld [vmem:[%s165 + $0x10] sm:$0xf]
      %v1264 = vld [vmem:[%s165 + $0x14] sm:$0xf]
      %v1265 = vld [vmem:[%s165 + $0x18] sm:$0xf]
      %v1266 = vld [vmem:[%s165 + $0x1c] sm:$0xf]
      %v1267 = vld [vmem:[%s165 + $0x20] sm:$0xf]
      %v1268 = vld [vmem:[%s165 + $0x24] sm:$0xf]
      %v1269 = vld [vmem:[%s165 + $0x28] sm:$0x1]
      %s1270 = scalar_lea.vmem %s1, 16
      %v1271 = vld [vmem:[%s1270] sm:$0x3]
      %v1282 = vunpack.c.l.b16 %v1260
      %v1283 = vunpack.c.l.b16 %v1261
      %v1284 = vunpack.c.l.b16 %v1262
      %v1285 = vunpack.c.l.b16 %v1263
      %v1286 = vunpack.c.l.b16 %v1264
      %v1287 = vunpack.c.l.b16 %v1265
      %v1288 = vunpack.c.l.b16 %v1266
      %v1289 = vunpack.c.l.b16 %v1267
      %v1290 = vunpack.c.l.b16 %v1268
      %v1291 = vunpack.c.l.b16 %v1269
      %v1292 = vpack.c.b16 %v1283, %v1282
      %v1293 = vpack.c.b16 %v1285, %v1284
      %v1294 = vpack.c.b16 %v1287, %v1286
      %v1295 = vpack.c.b16 %v1289, %v1288
      %v1296 = vpack.c.b16 %v1291, %v1290
      %vm1297 = vcmask 1046528
      %v1298 = vrot.slane %v1292, 1
      %v1299 = vrot.slane %v1293, 1
      %v1300 = vsel %vm1297, %v1298, %v1299
      %v1301 = vrot.slane %v1294, 1
      %v1302 = vsel %vm1297, %v1299, %v1301
      %v1303 = vrot.slane %v1295, 1
      %v1304 = vsel %vm1297, %v1301, %v1303
      %v1305 = vrot.slane %v1296, 1
      %v1306 = vsel %vm1297, %v1303, %v1305
      %v1308 = vsel %vm224, %v1300, 0
      %v1311 = vsel %vm224, %v1302, 0
      %v1314 = vsel %vm224, %v1304, 0
      %v1317 = vsel %vm224, %v1306, 0
      %v1320 = vsel %vm224, %v1305, 0
      %v1323 = vsel %vm240, %v1271, 0
      %1325 = vmatpush.bf16.msra.mxu0 0
      %1326 = vmatpush.bf16.msra.mxu0 0
      %1327 = vmatpush.bf16.msra.mxu0 0
      %1328 = vmatpush.bf16.msra.mxu0 0
      %1329 = vmatpush.bf16.msra.mxu0 0
      %1330 = vmatpush.bf16.msra.mxu0 0
      %1331 = vmatpush.bf16.msra.mxu0 0
      %1332 = vmatpush.bf16.msra.mxu0 %v1323
      %1333 = vmatmul.bf16.gmra.mxu0 %v1308
      %v1334 = vpop.f32.mrf.mxu0
      %v1335 = vadd.f32 0.0, %v1334
      %v1336 = vpop.f32.mrf.mxu0
      %v1337 = vadd.f32 0.0, %v1336
      %1338 = vmatmul.bf16.gmra.mxu0 %v1311
      %v1339 = vpop.f32.mrf.mxu0
      %v1340 = vadd.f32 0.0, %v1339
      %v1341 = vpop.f32.mrf.mxu0
      %v1342 = vadd.f32 0.0, %v1341
      %1343 = vmatmul.bf16.gmra.mxu0 %v1314
      %v1344 = vpop.f32.mrf.mxu0
      %v1345 = vadd.f32 0.0, %v1344
      %v1346 = vpop.f32.mrf.mxu0
      %v1347 = vadd.f32 0.0, %v1346
      %1348 = vmatmul.bf16.gmra.mxu0 %v1317
      %v1349 = vpop.f32.mrf.mxu0
      %v1350 = vadd.f32 0.0, %v1349
      %v1351 = vpop.f32.mrf.mxu0
      %v1352 = vadd.f32 0.0, %v1351
      %1353 = vmatmul.bf16.gmra.mxu0 %v1320
      %v1354 = vpop.f32.mrf.mxu0
      %v1355 = vadd.f32 0.0, %v1354
      %v1356 = vpop.f32.mrf.mxu0
      %1357 = vdwg.mxu0
      %v1358 = vadd.f32 %v1251, %v1335
      %v1359 = vadd.f32 %v1252, %v1337
      %v1360 = vadd.f32 %v1253, %v1340
      %v1361 = vadd.f32 %v1254, %v1342
      %v1362 = vadd.f32 %v1255, %v1345
      %v1363 = vadd.f32 %v1256, %v1347
      %v1364 = vadd.f32 %v1257, %v1350
      %v1365 = vadd.f32 %v1258, %v1352
      %v1366 = vadd.f32 %v1259, %v1355
      %1367 = vst.msk [vmem:[#allocation2] sm:$0xff] %vm172, %v1358
      %1368 = vst.msk [vmem:[#allocation2 + $0x8] sm:$0xff] %vm172, %v1359
      %1369 = vst.msk [vmem:[#allocation2 + $0x10] sm:$0xff] %vm172, %v1360
      %1370 = vst.msk [vmem:[#allocation2 + $0x18] sm:$0xff] %vm172, %v1361
      %1371 = vst.msk [vmem:[#allocation2 + $0x20] sm:$0xff] %vm172, %v1362
      %1372 = vst.msk [vmem:[#allocation2 + $0x28] sm:$0xff] %vm172, %v1363
      %1373 = vst.msk [vmem:[#allocation2 + $0x30] sm:$0xff] %vm172, %v1364
      %1374 = vst.msk [vmem:[#allocation2 + $0x38] sm:$0xff] %vm172, %v1365
      %1375 = vst.msk [vmem:[#allocation2 + $0x40] sm:$0xff] %vm172, %v1366
      %v1376 = vld [vmem:[#allocation2] sm:$0xff]
      %v1377 = vld [vmem:[#allocation2 + $0x8] sm:$0xff]
      %v1378 = vld [vmem:[#allocation2 + $0x10] sm:$0xff]
      %v1379 = vld [vmem:[#allocation2 + $0x18] sm:$0xff]
      %v1380 = vld [vmem:[#allocation2 + $0x20] sm:$0xff]
      %v1381 = vld [vmem:[#allocation2 + $0x28] sm:$0xff]
      %v1382 = vld [vmem:[#allocation2 + $0x30] sm:$0xff]
      %v1383 = vld [vmem:[#allocation2 + $0x38] sm:$0xff]
      %v1384 = vld [vmem:[#allocation2 + $0x40] sm:$0xff]
      %v1385 = vld [vmem:[%s2] sm:$0x1]
      %v1387 = vperm.slane %v1385, 0
      %v1389 = vadd.f32 %v1376, %v1387
      %v1390 = vadd.f32 %v1377, %v1387
      %v1391 = vadd.f32 %v1378, %v1387
      %v1392 = vadd.f32 %v1379, %v1387
      %v1393 = vadd.f32 %v1380, %v1387
      %v1394 = vadd.f32 %v1381, %v1387
      %v1395 = vadd.f32 %v1382, %v1387
      %v1396 = vadd.f32 %v1383, %v1387
      %v1397 = vadd.f32 %v1384, %v1387
      %v1398 = vmax.f32 %v1389, 0.0
      %v1399 = vmax.f32 %v1390, 0.0
      %v1400 = vmax.f32 %v1391, 0.0
      %v1401 = vmax.f32 %v1392, 0.0
      %v1402 = vmax.f32 %v1393, 0.0
      %v1403 = vmax.f32 %v1394, 0.0
      %v1404 = vmax.f32 %v1395, 0.0
      %v1405 = vmax.f32 %v1396, 0.0
      %v1406 = vmax.f32 %v1397, 0.0
      %v1407 = vpack.c.bf16 %v1398, %v1398
      %v1408 = vpack.c.bf16 %v1399, %v1399
      %v1409 = vpack.c.bf16 %v1400, %v1400
      %v1410 = vpack.c.bf16 %v1401, %v1401
      %v1411 = vpack.c.bf16 %v1402, %v1402
      %v1412 = vpack.c.bf16 %v1403, %v1403
      %v1413 = vpack.c.bf16 %v1404, %v1404
      %v1414 = vpack.c.bf16 %v1405, %v1405
      %v1415 = vpack.c.bf16 %v1406, %v1406
      %vm1416 = vcmask 60416
      %1417 = vst.msk [vmem:[%s170] sm:$0xf] %vm1416, %v1407
      %1418 = vst.msk [vmem:[%s170 + $0x4] sm:$0xf] %vm1416, %v1408
      %1419 = vst.msk [vmem:[%s170 + $0x8] sm:$0xf] %vm1416, %v1409
      %1420 = vst.msk [vmem:[%s170 + $0xc] sm:$0xf] %vm1416, %v1410
      %1421 = vst.msk [vmem:[%s170 + $0x10] sm:$0xf] %vm1416, %v1411
      %1422 = vst.msk [vmem:[%s170 + $0x14] sm:$0xf] %vm1416, %v1412
      %1423 = vst.msk [vmem:[%s170 + $0x18] sm:$0xf] %vm1416, %v1413
      %1424 = vst.msk [vmem:[%s170 + $0x1c] sm:$0xf] %vm1416, %v1414
      %1425 = vst.msk [vmem:[%s170 + $0x20] sm:$0xf] %vm1416, %v1415
      %p1426 = scmp.lt.s32.totalorder %s14, 1
      %s1427 = scalar_select %p1426, %s14, 1
      %s1428 = smul.addr %s1427, 9
      %s1429 = smul.addr %s1428, 4
      %s1430 = scalar_lea.vmem %s3, %s1429
      // Predicated region
      $region33: #{seg_detector_forward.2} parent=31 // pred_check
        %p1431 = pneg %p100
      $region34: #{seg_detector_forward.2} parent=31 // pred_check_branch
        %1433 = sbr.rel (%p1431) target = $region36
      $region35: #{seg_detector_forward.2} parent=31 // pred_region
        _
      $region36: #{seg_detector_forward.2} parent=31 // pred_fallthru
        _
    $region32: #{seg_detector_forward.2} parent=5 // pred_fallthru
      _
    %p1434 = scmp.le.s32.totalorder 2, %s9
    // Predicated region
    $region37: #{seg_detector_forward.2} parent=5 // pred_check
      %p1435 = pneg %p1434
    $region38: #{seg_detector_forward.2} parent=5 // pred_check_branch
      %1437 = sbr.rel (%p1435) target = $region40
    $region39: #{seg_detector_forward.2} parent=5 // pred_region
      %s1438 = ssub.s32 %s9, 2
      // Predicated region
      $region41: #{seg_detector_forward.2} parent=39 // pred_check
        %p1439 = pneg %p106
      $region42: #{seg_detector_forward.2} parent=39 // pred_check_branch
        %1441 = sbr.rel (%p1439) target = $region44
      $region43: #{seg_detector_forward.2} parent=39 // pred_region
        %p1442 = scmp.lt.s32.totalorder %s15, 1
        %s1443 = scalar_select %p1442, %s15, 1
        %s1444 = smul.addr %s1443, 9
        %s1445 = smul.addr %s1444, 4
        %s1446 = scalar_lea.vmem %s3, %s1445
      $region44: #{seg_detector_forward.2} parent=39 // pred_fallthru
        _
    $region40: #{seg_detector_forward.2} parent=5 // pred_fallthru
      _
  $region6: #{seg_detector_forward.2} parent=0 // loop_footer
    %s13 = sadd.s32 1, %s9
  $region7: #{seg_detector_forward.2} parent=0 // loop_footer_branch
    %8 = sbr.rel target = $region3
  $region8: #{seg_detector_forward.2} parent=0 // loop_exit
    _

// kernel: seg_detector_forward.3
$region0: #{seg_detector_forward.3}
  #allocation0 [shape = 'u32[]', space=smem, size = 0x4, offset = 0x4, fixed_abs, tag = 'smem constant byte address 0x4 - core index']
  #allocation1 [shape = 'u32[72,128]{1,0:T(1,128)}', space=vmem, size = 0x9000, scoped, tag = 'internal scratch']
  #allocation2 [shape = 'f32[24,16]{1,0:T(8,128)}', space=vmem, size = 0x3000, scoped, tag = 'scratch operand']
  #allocation3 [shape = 'bf16[40,16]{1,0:T(8,128)(2,1)}', space=vmem, size = 0x2800, scoped, tag = 'scratch operand']
  #allocation4 [shape = 'f32[24,8]{1,0:T(8,128)}', space=vmem, size = 0x3000, scoped, tag = 'scratch operand']
  %s0 = inlined_call_operand.vmem [shape: bf16[2,4,32,8], index: 0, kind: input, shape index: {}]
  %s1 = inlined_call_operand.vmem [shape: bf16[9,8,16], index: 1, kind: input, shape index: {}]
  %s2 = inlined_call_operand.vmem [shape: f32[1,16], index: 2, kind: input, shape index: {}]
  %s3 = inlined_call_operand.vmem [shape: bf16[9,16,8], index: 3, kind: input, shape index: {}]
  %s4 = inlined_call_operand.vmem [shape: f32[1,8], index: 4, kind: input, shape index: {}]
  %s5 = inlined_call_operand.vmem [shape: bf16[8,8], index: 5, kind: input, shape index: {}]
  %s6 = inlined_call_operand.vmem [shape: f32[1,8], index: 6, kind: input, shape index: {}]
  %s7 = inlined_call_operand.vmem [shape: f32[2,24,1], index: 7, kind: output, shape index: {}]
  %s8 = sld [smem:[#allocation0]]
  $region61: #{seg_detector_forward.3} parent=0
    _
  %s10 = ssub.s32 1, %s8
  %s11 = scalar_select 0, %s10, %s8
  loop: start=0, step=1, limit=4
  $region2: #{seg_detector_forward.3} parent=0 // loop_pre_header
    _
  $region3: #{seg_detector_forward.3} parent=0 // loop_header
    %s13 = sphi 0, %s17
    %p14 = scmp.ge.s32.totalorder %s13, 4
    %s23 = sphi 0, %s25
    %s26 = sphi 0, %s23
    %s27 = sphi 0, %s26
    %s43 = sphi 0, %s27
    %s47 = sphi 0, %s47
    %s49 = sphi 0, %s47
    %s50 = sphi 0, %s49
    %s64 = sphi 0, %s50
    %s68 = sphi 0, %s68
    %s70 = sphi 0, %s68
    %s71 = sphi 0, %s70
    %s85 = sphi 0, %s71
    %s89 = sphi 0, %s89
    %s91 = sphi 0, %s89
    %s92 = sphi 0, %s91
    %s106 = sphi 0, %s92
    %s110 = sphi 0, %s110
    %s112 = sphi 0, %s110
    %s113 = sphi 0, %s112
    %s127 = sphi 0, %s113
    %s131 = sphi 0, %s131
    %s133 = sphi 0, %s131
    %s134 = sphi 0, %s133
    %s148 = sphi 0, %s134
    %s152 = sphi 0, %s152
    %s154 = sphi 0, %s152
    %s155 = sphi 0, %s154
    %s169 = sphi 0, %s155
    %s175 = sphi 0, %s177
    %s178 = sphi 0, %s175
    %s179 = sphi 0, %s178
    %s195 = sphi 0, %s179
  $region4: #{seg_detector_forward.3} parent=0 // loop_header_branch
    %16 = sbr.rel (%p14) target = $region8
  $region5: #{seg_detector_forward.3} parent=0 // loop_body
    %s18 = ssub.s32 %s13, 1
    %s19 = ssub.s32 %s13, 2
    %s20 = sadd.s32 %s13, 1
    %s21 = ssub.s32 %s13, %s20
    %p22 = scmp.eq.s32.totalorder %s21, 0
    %s24 = sadd.s32 %s23, 1
    %s25 = scalar_select %p22, %s23, %s24
    %p28 = pneg %p22
    %p29 = scmp.eq.s32.totalorder %s13, 1
    %p30 = por %p28, %p29
    %p31 = scmp.ne.s32.totalorder %s23, %s26
    %p32 = scmp.eq.s32.totalorder %s13, 0
    %p33 = por %p31, %p32
    %p34 = scmp.ne.s32.totalorder %s23, %s26
    %p35 = scmp.eq.s32.totalorder %s18, 1
    %p36 = por %p34, %p35
    %p37 = scmp.ne.s32.totalorder %s26, %s27
    %p38 = scmp.eq.s32.totalorder %s18, 0
    %p39 = por %p37, %p38
    %p40 = scmp.ne.s32.totalorder %s26, %s27
    %p41 = scmp.eq.s32.totalorder %s19, 1
    %p42 = por %p40, %p41
    %p44 = scmp.ne.s32.totalorder %s27, %s43
    %p45 = scmp.eq.s32.totalorder %s19, 0
    %p46 = por %p44, %p45
    %s48 = sadd.s32 %s47, 1
    %p51 = scmp.eq.s32.totalorder %s13, 1
    %p52 = scmp.ne.s32.totalorder %s47, %s49
    %p53 = scmp.eq.s32.totalorder %s13, 0
    %p54 = por %p52, %p53
    %p55 = scmp.ne.s32.totalorder %s47, %s49
    %p56 = scmp.eq.s32.totalorder %s18, 1
    %p57 = por %p55, %p56
    %p58 = scmp.ne.s32.totalorder %s49, %s50
    %p59 = scmp.eq.s32.totalorder %s18, 0
    %p60 = por %p58, %p59
    %p61 = scmp.ne.s32.totalorder %s49, %s50
    %p62 = scmp.eq.s32.totalorder %s19, 1
    %p63 = por %p61, %p62
    %p65 = scmp.ne.s32.totalorder %s50, %s64
    %p66 = scmp.eq.s32.totalorder %s19, 0
    %p67 = por %p65, %p66
    %s69 = sadd.s32 %s68, 1
    %p72 = scmp.eq.s32.totalorder %s13, 1
    %p73 = scmp.ne.s32.totalorder %s68, %s70
    %p74 = scmp.eq.s32.totalorder %s13, 0
    %p75 = por %p73, %p74
    %p76 = scmp.ne.s32.totalorder %s68, %s70
    %p77 = scmp.eq.s32.totalorder %s18, 1
    %p78 = por %p76, %p77
    %p79 = scmp.ne.s32.totalorder %s70, %s71
    %p80 = scmp.eq.s32.totalorder %s18, 0
    %p81 = por %p79, %p80
    %p82 = scmp.ne.s32.totalorder %s70, %s71
    %p83 = scmp.eq.s32.totalorder %s19, 1
    %p84 = por %p82, %p83
    %p86 = scmp.ne.s32.totalorder %s71, %s85
    %p87 = scmp.eq.s32.totalorder %s19, 0
    %p88 = por %p86, %p87
    %s90 = sadd.s32 %s89, 1
    %p93 = scmp.eq.s32.totalorder %s13, 1
    %p94 = scmp.ne.s32.totalorder %s89, %s91
    %p95 = scmp.eq.s32.totalorder %s13, 0
    %p96 = por %p94, %p95
    %p97 = scmp.ne.s32.totalorder %s89, %s91
    %p98 = scmp.eq.s32.totalorder %s18, 1
    %p99 = por %p97, %p98
    %p100 = scmp.ne.s32.totalorder %s91, %s92
    %p101 = scmp.eq.s32.totalorder %s18, 0
    %p102 = por %p100, %p101
    %p103 = scmp.ne.s32.totalorder %s91, %s92
    %p104 = scmp.eq.s32.totalorder %s19, 1
    %p105 = por %p103, %p104
    %p107 = scmp.ne.s32.totalorder %s92, %s106
    %p108 = scmp.eq.s32.totalorder %s19, 0
    %p109 = por %p107, %p108
    %s111 = sadd.s32 %s110, 1
    %p114 = scmp.eq.s32.totalorder %s13, 1
    %p115 = scmp.ne.s32.totalorder %s110, %s112
    %p116 = scmp.eq.s32.totalorder %s13, 0
    %p117 = por %p115, %p116
    %p118 = scmp.ne.s32.totalorder %s110, %s112
    %p119 = scmp.eq.s32.totalorder %s18, 1
    %p120 = por %p118, %p119
    %p121 = scmp.ne.s32.totalorder %s112, %s113
    %p122 = scmp.eq.s32.totalorder %s18, 0
    %p123 = por %p121, %p122
    %p124 = scmp.ne.s32.totalorder %s112, %s113
    %p125 = scmp.eq.s32.totalorder %s19, 1
    %p126 = por %p124, %p125
    %p128 = scmp.ne.s32.totalorder %s113, %s127
    %p129 = scmp.eq.s32.totalorder %s19, 0
    %p130 = por %p128, %p129
    %s132 = sadd.s32 %s131, 1
    %p135 = scmp.eq.s32.totalorder %s13, 1
    %p136 = scmp.ne.s32.totalorder %s131, %s133
    %p137 = scmp.eq.s32.totalorder %s13, 0
    %p138 = por %p136, %p137
    %p139 = scmp.ne.s32.totalorder %s131, %s133
    %p140 = scmp.eq.s32.totalorder %s18, 1
    %p141 = por %p139, %p140
    %p142 = scmp.ne.s32.totalorder %s133, %s134
    %p143 = scmp.eq.s32.totalorder %s18, 0
    %p144 = por %p142, %p143
    %p145 = scmp.ne.s32.totalorder %s133, %s134
    %p146 = scmp.eq.s32.totalorder %s19, 1
    %p147 = por %p145, %p146
    %p149 = scmp.ne.s32.totalorder %s134, %s148
    %p150 = scmp.eq.s32.totalorder %s19, 0
    %p151 = por %p149, %p150
    %s153 = sadd.s32 %s152, 1
    %p156 = scmp.eq.s32.totalorder %s13, 1
    %p157 = scmp.ne.s32.totalorder %s152, %s154
    %p158 = scmp.eq.s32.totalorder %s13, 0
    %p159 = por %p157, %p158
    %p160 = scmp.ne.s32.totalorder %s152, %s154
    %p161 = scmp.eq.s32.totalorder %s18, 1
    %p162 = por %p160, %p161
    %p163 = scmp.ne.s32.totalorder %s154, %s155
    %p164 = scmp.eq.s32.totalorder %s18, 0
    %p165 = por %p163, %p164
    %p166 = scmp.ne.s32.totalorder %s154, %s155
    %p167 = scmp.eq.s32.totalorder %s19, 1
    %p168 = por %p166, %p167
    %p170 = scmp.ne.s32.totalorder %s155, %s169
    %p171 = scmp.eq.s32.totalorder %s19, 0
    %p172 = por %p170, %p171
    %s173 = ssub.s32 %s13, %s20
    %p174 = scmp.eq.s32.totalorder %s173, 0
    %s176 = sadd.s32 %s175, 1
    %s177 = scalar_select %p174, %s175, %s176
    %p180 = pneg %p174
    %p181 = scmp.eq.s32.totalorder %s13, 1
    %p182 = por %p180, %p181
    %p183 = scmp.ne.s32.totalorder %s175, %s178
    %p184 = scmp.eq.s32.totalorder %s13, 0
    %p185 = por %p183, %p184
    %p186 = scmp.ne.s32.totalorder %s175, %s178
    %p187 = scmp.eq.s32.totalorder %s18, 1
    %p188 = por %p186, %p187
    %p189 = scmp.ne.s32.totalorder %s178, %s179
    %p190 = scmp.eq.s32.totalorder %s18, 0
    %p191 = por %p189, %p190
    %p192 = scmp.ne.s32.totalorder %s178, %s179
    %p193 = scmp.eq.s32.totalorder %s19, 1
    %p194 = por %p192, %p193
    %p196 = scmp.ne.s32.totalorder %s179, %s195
    %p197 = scmp.eq.s32.totalorder %s19, 0
    %p198 = por %p196, %p197
    %p199 = scmp.le.s32.totalorder 1, %s13
    %p200 = scmp.lt.s32.totalorder %s13, 3
    %p201 = pnand %p199, %p200
    %p202 = pneg %p201
    // Predicated region
    $region9: #{seg_detector_forward.3} parent=5 // pred_check
      _
    $region10: #{seg_detector_forward.3} parent=5 // pred_check_branch
      %204 = sbr.rel (%p201) target = $region12
    $region11: #{seg_detector_forward.3} parent=5 // pred_region
      %s205 = ssub.s32 %s13, 1
      // Predicated region
      $region13: #{seg_detector_forward.3} parent=11 // pred_check
        %p206 = pneg %p60
      $region14: #{seg_detector_forward.3} parent=11 // pred_check_branch
        %208 = sbr.rel (%p206) target = $region16
      $region15: #{seg_detector_forward.3} parent=11 // pred_region
        _
      $region16: #{seg_detector_forward.3} parent=11 // pred_fallthru
        _
      // Predicated region
      $region17: #{seg_detector_forward.3} parent=11 // pred_check
        %p209 = pneg %p81
      $region18: #{seg_detector_forward.3} parent=11 // pred_check_branch
        %211 = sbr.rel (%p209) target = $region20
      $region19: #{seg_detector_forward.3} parent=11 // pred_region
        _
      $region20: #{seg_detector_forward.3} parent=11 // pred_fallthru
        _
      // Predicated region
      $region21: #{seg_detector_forward.3} parent=11 // pred_check
        %p212 = pneg %p102
      $region22: #{seg_detector_forward.3} parent=11 // pred_check_branch
        %214 = sbr.rel (%p212) target = $region24
      $region23: #{seg_detector_forward.3} parent=11 // pred_region
        _
      $region24: #{seg_detector_forward.3} parent=11 // pred_fallthru
        _
      // Predicated region
      $region25: #{seg_detector_forward.3} parent=11 // pred_check
        %p215 = pneg %p123
      $region26: #{seg_detector_forward.3} parent=11 // pred_check_branch
        %217 = sbr.rel (%p215) target = $region28
      $region27: #{seg_detector_forward.3} parent=11 // pred_region
        _
      $region28: #{seg_detector_forward.3} parent=11 // pred_fallthru
        _
      // Predicated region
      $region29: #{seg_detector_forward.3} parent=11 // pred_check
        %p218 = pneg %p144
      $region30: #{seg_detector_forward.3} parent=11 // pred_check_branch
        %220 = sbr.rel (%p218) target = $region32
      $region31: #{seg_detector_forward.3} parent=11 // pred_region
        _
      $region32: #{seg_detector_forward.3} parent=11 // pred_fallthru
        _
      // Predicated region
      $region33: #{seg_detector_forward.3} parent=11 // pred_check
        %p221 = pneg %p165
      $region34: #{seg_detector_forward.3} parent=11 // pred_check_branch
        %223 = sbr.rel (%p221) target = $region36
      $region35: #{seg_detector_forward.3} parent=11 // pred_region
        _
      $region36: #{seg_detector_forward.3} parent=11 // pred_fallthru
        _
    $region12: #{seg_detector_forward.3} parent=5 // pred_fallthru
      _
    %p224 = scmp.lt.s32.totalorder %s13, 2
    // Predicated region
    $region37: #{seg_detector_forward.3} parent=5 // pred_check
      %p225 = pneg %p224
    $region38: #{seg_detector_forward.3} parent=5 // pred_check_branch
      %227 = sbr.rel (%p225) target = $region40
    $region39: #{seg_detector_forward.3} parent=5 // pred_region
      // Predicated region
      $region41: #{seg_detector_forward.3} parent=39 // pred_check
        %p228 = pneg %p33
      $region42: #{seg_detector_forward.3} parent=39 // pred_check_branch
        %230 = sbr.rel (%p228) target = $region44
      $region43: #{seg_detector_forward.3} parent=39 // pred_region
        %p231 = scmp.lt.s32.totalorder %s13, 1
        %s232 = scalar_select %p231, %s13, 1
        %s233 = smul.addr %s232, 16
        %s234 = smul.addr %s233, 4
        %s235 = scalar_lea.vmem %s0, %s234
      $region44: #{seg_detector_forward.3} parent=39 // pred_fallthru
        _
    $region40: #{seg_detector_forward.3} parent=5 // pred_fallthru
      _
    %p236 = scmp.le.s32.totalorder 1, %s13
    %p237 = scmp.lt.s32.totalorder %s13, 3
    %p238 = pnand %p236, %p237
    %p239 = pneg %p238
    // Predicated region
    $region45: #{seg_detector_forward.3} parent=5 // pred_check
      _
    $region46: #{seg_detector_forward.3} parent=5 // pred_check_branch
      %241 = sbr.rel (%p238) target = $region48
    $region47: #{seg_detector_forward.3} parent=5 // pred_region
      %s242 = ssub.s32 %s13, 1
      %p243 = scmp.lt.s32.totalorder %s18, 1
      %s244 = scalar_select %p243, %s18, 1
      %s245 = smul.addr %s244, 16
      %s246 = smul.addr %s245, 4
      %s247 = scalar_lea.vmem %s0, %s246
      %p248 = pneg %p39
      %p249 = pneg %p36
      %p250 = pneg %p60
      %p251 = pneg %p57
      %p252 = pneg %p81
      %p253 = pneg %p78
      %p254 = pneg %p102
      %p255 = pneg %p99
      %p256 = pneg %p123
      %p257 = pneg %p120
      %p258 = pneg %p144
      %p259 = pneg %p141
      %p260 = pneg %p165
      %p261 = pneg %p162
      %p262 = pneg %p191
      %p263 = pneg %p188
      %p264 = scmp.lt.s32.totalorder %s18, 1
      %s265 = scalar_select %p264, %s18, 1
      %s266 = smul.addr %s265, 3
      %s267 = smul.addr %s266, 8
      %s268 = scalar_lea.vmem %s7, %s267
      %p269 = scmp.lt.s32.totalorder %s18, 1
      %s270 = scalar_select %p269, %s18, 1
      %s271 = smul.addr %s270, 16
      %s272 = smul.addr %s271, 4
      %s273 = scalar_lea.vmem %s0, %s272
      %p274 = scmp.lt.s32.totalorder %s18, 1
      %s275 = scalar_select %p274, %s18, 1
      %s276 = smul.addr %s275, 3
      %s277 = smul.addr %s276, 8
      %s278 = scalar_lea.vmem %s7, %s277
      %vm280 = vcmask 130048
      %281 = vst.msk [vmem:[#allocation2] sm:$0xff] %vm280, 0.0
      %282 = vst.msk [vmem:[#allocation2 + $0x8] sm:$0xff] %vm280, 0.0
      %283 = vst.msk [vmem:[#allocation2 + $0x10] sm:$0xff] %vm280, 0.0
      %v284 = vld [vmem:[#allocation2] sm:$0xff]
      %v285 = vld [vmem:[#allocation2 + $0x8] sm:$0xff]
      %v286 = vld [vmem:[#allocation2 + $0x10] sm:$0xff]
      %v287 = vld [vmem:[%s273] sm:$0xf]
      %v288 = vld [vmem:[%s273 + $0x4] sm:$0xf]
      %v289 = vld [vmem:[%s273 + $0x8] sm:$0xf]
      %v290 = vld [vmem:[%s1] sm:$0xf]
      %v294 = vunpack.c.l.b16 %v287
      %v295 = vunpack.c.l.b16 %v288
      %v296 = vunpack.c.l.b16 %v289
      %v297 = vpack.c.b16 %v295, %v294
      %v298 = vpack.c.b16 %v296, %v296
      %vm299 = vcmask 64512
      %v301 = vsel %vm299, %v297, 0
      %v304 = vsel %vm299, %v298, 0
      %vm306 = vcmask 1043456
      %v308 = vsel %vm306, %v290, 0
      %310 = vmatpush.bf16.msra.mxu0 0
      %311 = vmatpush.bf16.msra.mxu0 0
      %312 = vmatpush.bf16.msra.mxu0 0
      %313 = vmatpush.bf16.msra.mxu0 0
      %314 = vmatpush.bf16.msra.mxu0 0
      %315 = vmatpush.bf16.msra.mxu0 0
      %316 = vmatpush.bf16.msra.mxu0 0
      %317 = vmatpush.bf16.msra.mxu0 %v308
      %318 = vmatmul.bf16.gmra.mxu0 %v301
      %v319 = vpop.f32.mrf.mxu0
      %v320 = vadd.f32 0.0, %v319
      %v321 = vpop.f32.mrf.mxu0
      %v322 = vadd.f32 0.0, %v321
      %323 = vmatmul.bf16.gmra.mxu0 %v304
      %v324 = vpop.f32.mrf.mxu0
      %v325 = vadd.f32 0.0, %v324
      %v326 = vpop.f32.mrf.mxu0
      %327 = vdwg.mxu0
      %v328 = vadd.f32 %v284, %v320
      %v329 = vadd.f32 %v285, %v322
      %v330 = vadd.f32 %v286, %v325
      %331 = vst.msk [vmem:[#allocation2] sm:$0xff] %vm280, %v328
      %332 = vst.msk [vmem:[#allocation2 + $0x8] sm:$0xff] %vm280, %v329
      %333 = vst.msk [vmem:[#allocation2 + $0x10] sm:$0xff] %vm280, %v330
      %v334 = vld [vmem:[#allocation2] sm:$0xff]
      %v335 = vld [vmem:[#allocation2 + $0x8] sm:$0xff]
      %v336 = vld [vmem:[#allocation2 + $0x10] sm:$0xff]
      %s337 = scalar_lea.vmem %s273, 16
      %v338 = vld [vmem:[%s337] sm:$0xf]
      %v339 = vld [vmem:[%s337 + $0x4] sm:$0xf]
      %v340 = vld [vmem:[%s337 + $0x8] sm:$0xf]
      %s341 = scalar_lea.vmem %s1, 4
      %v342 = vld [vmem:[%s341] sm:$0xf]
      %v346 = vunpack.c.l.b16 %v338
      %v347 = vunpack.c.l.b16 %v339
      %v348 = vunpack.c.l.b16 %v340
      %v349 = vpack.c.b16 %v347, %v346
      %v350 = vpack.c.b16 %v348, %v348
      %v352 = vsel %vm299, %v349, 0
      %v355 = vsel %vm299, %v350, 0
      %v358 = vsel %vm306, %v342, 0
      %360 = vmatpush.bf16.msra.mxu0 0
      %361 = vmatpush.bf16.msra.mxu0 0
      %362 = vmatpush.bf16.msra.mxu0 0
      %363 = vmatpush.bf16.msra.mxu0 0
      %364 = vmatpush.bf16.msra.mxu0 0
      %365 = vmatpush.bf16.msra.mxu0 0
      %366 = vmatpush.bf16.msra.mxu0 0
      %367 = vmatpush.bf16.msra.mxu0 %v358
      %368 = vmatmul.bf16.gmra.mxu0 %v352
      %v369 = vpop.f32.mrf.mxu0
      %v370 = vadd.f32 0.0, %v369
      %v371 = vpop.f32.mrf.mxu0
      %v372 = vadd.f32 0.0, %v371
      %373 = vmatmul.bf16.gmra.mxu0 %v355
      %v374 = vpop.f32.mrf.mxu0
      %v375 = vadd.f32 0.0, %v374
      %v376 = vpop.f32.mrf.mxu0
      %377 = vdwg.mxu0
      %v378 = vadd.f32 %v334, %v370
      %v379 = vadd.f32 %v335, %v372
      %v380 = vadd.f32 %v336, %v375
      %381 = vst.msk [vmem:[#allocation2] sm:$0xff] %vm280, %v378
      %382 = vst.msk [vmem:[#allocation2 + $0x8] sm:$0xff] %vm280, %v379
      %383 = vst.msk [vmem:[#allocation2 + $0x10] sm:$0xff] %vm280, %v380
      %v384 = vld [vmem:[#allocation2] sm:$0xff]
      %v385 = vld [vmem:[#allocation2 + $0x8] sm:$0xff]
      %v386 = vld [vmem:[#allocation2 + $0x10] sm:$0xff]
      %v387 = vld [vmem:[%s273] sm:$0xf]
      %v388 = vld [vmem:[%s273 + $0x4] sm:$0xf]
      %v389 = vld [vmem:[%s273 + $0x8] sm:$0xf]
      %v390 = vld [vmem:[%s273 + $0xc] sm:$0x1]
      %s391 = scalar_lea.vmem %s1, 8
      %v392 = vld [vmem:[%s391] sm:$0xf]
      %v397 = vunpack.c.l.b16 %v387
      %v398 = vunpack.c.l.b16 %v388
      %v399 = vunpack.c.l.b16 %v389
      %v400 = vunpack.c.l.b16 %v390
      %v401 = vpack.c.b16 %v398, %v397
      %v402 = vpack.c.b16 %v400, %v399
      %vm403 = vsmask.f32 7424
      %v405 = vshrl.u32 %v401, 16
      %v407 = vshll.u32 %v401, 16
      %v409 = vrot.slane %v407, 1
      %v410 = vor.u32 %v405, %v409
      %v412 = vshll.u32 %v402, 16
      %v414 = vrot.slane %v412, 1
      %v415 = vsel %vm403, %v410, %v414
      %v416 = vshrl.u32 %v402, 16
      %v418 = vor.u32 %v416, %v414
      %v420 = vsel %vm299, %v415, 0
      %v423 = vsel %vm299, %v418, 0
      %v426 = vsel %vm306, %v392, 0
      %428 = vmatpush.bf16.msra.mxu0 0
      %429 = vmatpush.bf16.msra.mxu0 0
      %430 = vmatpush.bf16.msra.mxu0 0
      %431 = vmatpush.bf16.msra.mxu0 0
      %432 = vmatpush.bf16.msra.mxu0 0
      %433 = vmatpush.bf16.msra.mxu0 0
      %434 = vmatpush.bf16.msra.mxu0 0
      %435 = vmatpush.bf16.msra.mxu0 %v426
      %436 = vmatmul.bf16.gmra.mxu0 %v420
      %v437 = vpop.f32.mrf.mxu0
      %v438 = vadd.f32 0.0, %v437
      %v439 = vpop.f32.mrf.mxu0
      %v440 = vadd.f32 0.0, %v439
      %441 = vmatmul.bf16.gmra.mxu0 %v423
      %v442 = vpop.f32.mrf.mxu0
      %v443 = vadd.f32 0.0, %v442
      %v444 = vpop.f32.mrf.mxu0
      %445 = vdwg.mxu0
      %v446 = vadd.f32 %v384, %v438
      %v447 = vadd.f32 %v385, %v440
      %v448 = vadd.f32 %v386, %v443
      %449 = vst.msk [vmem:[#allocation2] sm:$0xff] %vm280, %v446
      %450 = vst.msk [vmem:[#allocation2 + $0x8] sm:$0xff] %vm280, %v447
      %451 = vst.msk [vmem:[#allocation2 + $0x10] sm:$0xff] %vm280, %v448
      %v452 = vld [vmem:[#allocation2] sm:$0xff]
      %v453 = vld [vmem:[#allocation2 + $0x8] sm:$0xff]
      %v454 = vld [vmem:[#allocation2 + $0x10] sm:$0xff]
      %s455 = scalar_lea.vmem %s273, 32
      %v456 = vld [vmem:[%s455] sm:$0xf]
      %v457 = vld [vmem:[%s455 + $0x4] sm:$0xf]
      %v458 = vld [vmem:[%s455 + $0x8] sm:$0xf]
      %s459 = scalar_lea.vmem %s1, 12
      %v460 = vld [vmem:[%s459] sm:$0xf]
      %v464 = vunpack.c.l.b16 %v456
      %v465 = vunpack.c.l.b16 %v457
      %v466 = vunpack.c.l.b16 %v458
      %v467 = vpack.c.b16 %v465, %v464
      %v468 = vpack.c.b16 %v466, %v466
      %v470 = vsel %vm299, %v467, 0
      %v473 = vsel %vm299, %v468, 0
      %v476 = vsel %vm306, %v460, 0
      %478 = vmatpush.bf16.msra.mxu0 0
      %479 = vmatpush.bf16.msra.mxu0 0
      %480 = vmatpush.bf16.msra.mxu0 0
      %481 = vmatpush.bf16.msra.mxu0 0
      %482 = vmatpush.bf16.msra.mxu0 0
      %483 = vmatpush.bf16.msra.mxu0 0
      %484 = vmatpush.bf16.msra.mxu0 0
      %485 = vmatpush.bf16.msra.mxu0 %v476
      %486 = vmatmul.bf16.gmra.mxu0 %v470
      %v487 = vpop.f32.mrf.mxu0
      %v488 = vadd.f32 0.0, %v487
      %v489 = vpop.f32.mrf.mxu0
      %v490 = vadd.f32 0.0, %v489
      %491 = vmatmul.bf16.gmra.mxu0 %v473
      %v492 = vpop.f32.mrf.mxu0
      %v493 = vadd.f32 0.0, %v492
      %v494 = vpop.f32.mrf.mxu0
      %495 = vdwg.mxu0
      %v496 = vadd.f32 %v452, %v488
      %v497 = vadd.f32 %v453, %v490
      %v498 = vadd.f32 %v454, %v493
      %499 = vst.msk [vmem:[#allocation2] sm:$0xff] %vm280, %v496
      %500 = vst.msk [vmem:[#allocation2 + $0x8] sm:$0xff] %vm280, %v497
      %501 = vst.msk [vmem:[#allocation2 + $0x10] sm:$0xff] %vm280, %v498
      %v502 = vld [vmem:[#allocation2] sm:$0xff]
      %v503 = vld [vmem:[#allocation2 + $0x8] sm:$0xff]
      %v504 = vld [vmem:[#allocation2 + $0x10] sm:$0xff]
      %s505 = scalar_lea.vmem %s273, 48
      %v506 = vld [vmem:[%s505] sm:$0xf]
      %v507 = vld [vmem:[%s505 + $0x4] sm:$0xf]
      %v508 = vld [vmem:[%s505 + $0x8] sm:$0xf]
      %s509 = scalar_lea.vmem %s1, 16
      %v510 = vld [vmem:[%s509] sm:$0xf]
      %v514 = vunpack.c.l.b16 %v506
      %v515 = vunpack.c.l.b16 %v507
      %v516 = vunpack.c.l.b16 %v508
      %v517 = vpack.c.b16 %v515, %v514
      %v518 = vpack.c.b16 %v516, %v516
      %v520 = vsel %vm299, %v517, 0
      %v523 = vsel %vm299, %v518, 0
      %v526 = vsel %vm306, %v510, 0
      %528 = vmatpush.bf16.msra.mxu0 0
      %529 = vmatpush.bf16.msra.mxu0 0
      %530 = vmatpush.bf16.msra.mxu0 0
      %531 = vmatpush.bf16.msra.mxu0 0
      %532 = vmatpush.bf16.msra.mxu0 0
      %533 = vmatpush.bf16.msra.mxu0 0
      %534 = vmatpush.bf16.msra.mxu0 0
      %535 = vmatpush.bf16.msra.mxu0 %v526
      %536 = vmatmul.bf16.gmra.mxu0 %v520
      %v537 = vpop.f32.mrf.mxu0
      %v538 = vadd.f32 0.0, %v537
      %v539 = vpop.f32.mrf.mxu0
      %v540 = vadd.f32 0.0, %v539
      %541 = vmatmul.bf16.gmra.mxu0 %v523
      %v542 = vpop.f32.mrf.mxu0
      %v543 = vadd.f32 0.0, %v542
      %v544 = vpop.f32.mrf.mxu0
      %545 = vdwg.mxu0
      %v546 = vadd.f32 %v502, %v538
      %v547 = vadd.f32 %v503, %v540
      %v548 = vadd.f32 %v504, %v543
      %549 = vst.msk [vmem:[#allocation2] sm:$0xff] %vm280, %v546
      %550 = vst.msk [vmem:[#allocation2 + $0x8] sm:$0xff] %vm280, %v547
      %551 = vst.msk [vmem:[#allocation2 + $0x10] sm:$0xff] %vm280, %v548
      %v552 = vld [vmem:[#allocation2] sm:$0xff]
      %v553 = vld [vmem:[#allocation2 + $0x8] sm:$0xff]
      %v554 = vld [vmem:[#allocation2 + $0x10] sm:$0xff]
      %v555 = vld [vmem:[%s455] sm:$0xf]
      %v556 = vld [vmem:[%s455 + $0x4] sm:$0xf]
      %v557 = vld [vmem:[%s455 + $0x8] sm:$0xf]
      %v558 = vld [vmem:[%s455 + $0xc] sm:$0x1]
      %s559 = scalar_lea.vmem %s1, 20
      %v560 = vld [vmem:[%s559] sm:$0xf]
      %v565 = vunpack.c.l.b16 %v555
      %v566 = vunpack.c.l.b16 %v556
      %v567 = vunpack.c.l.b16 %v557
      %v568 = vunpack.c.l.b16 %v558
      %v569 = vpack.c.b16 %v566, %v565
      %v570 = vpack.c.b16 %v568, %v567
      %v572 = vshrl.u32 %v569, 16
      %v574 = vshll.u32 %v569, 16
      %v576 = vrot.slane %v574, 1
      %v577 = vor.u32 %v572, %v576
      %v579 = vshll.u32 %v570, 16
      %v581 = vrot.slane %v579, 1
      %v582 = vsel %vm403, %v577, %v581
      %v583 = vshrl.u32 %v570, 16
      %v585 = vor.u32 %v583, %v581
      %v587 = vsel %vm299, %v582, 0
      %v590 = vsel %vm299, %v585, 0
      %v593 = vsel %vm306, %v560, 0
      %595 = vmatpush.bf16.msra.mxu0 0
      %596 = vmatpush.bf16.msra.mxu0 0
      %597 = vmatpush.bf16.msra.mxu0 0
      %598 = vmatpush.bf16.msra.mxu0 0
      %599 = vmatpush.bf16.msra.mxu0 0
      %600 = vmatpush.bf16.msra.mxu0 0
      %601 = vmatpush.bf16.msra.mxu0 0
      %602 = vmatpush.bf16.msra.mxu0 %v593
      %603 = vmatmul.bf16.gmra.mxu0 %v587
      %v604 = vpop.f32.mrf.mxu0
      %v605 = vadd.f32 0.0, %v604
      %v606 = vpop.f32.mrf.mxu0
      %v607 = vadd.f32 0.0, %v606
      %608 = vmatmul.bf16.gmra.mxu0 %v590
      %v609 = vpop.f32.mrf.mxu0
      %v610 = vadd.f32 0.0, %v609
      %v611 = vpop.f32.mrf.mxu0
      %612 = vdwg.mxu0
      %v613 = vadd.f32 %v552, %v605
      %v614 = vadd.f32 %v553, %v607
      %v615 = vadd.f32 %v554, %v610
      %616 = vst.msk [vmem:[#allocation2] sm:$0xff] %vm280, %v613
      %617 = vst.msk [vmem:[#allocation2 + $0x8] sm:$0xff] %vm280, %v614
      %618 = vst.msk [vmem:[#allocation2 + $0x10] sm:$0xff] %vm280, %v615
      %v619 = vld [vmem:[#allocation2] sm:$0xff]
      %v620 = vld [vmem:[#allocation2 + $0x8] sm:$0xff]
      %v621 = vld [vmem:[#allocation2 + $0x10] sm:$0xff]
      %v622 = vld [vmem:[%s273] sm:$0x8]
      %v623 = vld [vmem:[%s273 + $0x4] sm:$0xf]
      %v624 = vld [vmem:[%s273 + $0x8] sm:$0xf]
      %v625 = vld [vmem:[%s273 + $0xc] sm:$0x7]
      %s626 = scalar_lea.vmem %s1, 24
      %v627 = vld [vmem:[%s626] sm:$0xf]
      %v632 = vunpack.c.l.b16 %v622
      %v633 = vunpack.c.l.b16 %v623
      %v634 = vunpack.c.l.b16 %v624
      %v635 = vunpack.c.l.b16 %v625
      %v636 = vpack.c.b16 %v633, %v632
      %v637 = vpack.c.b16 %v635, %v634
      %vm638 = vcmask 1044480
      %v639 = vrot.slane %v636, 3
      %v640 = vrot.slane %v637, 3
      %v641 = vsel %vm638, %v639, %v640
      %v643 = vsel %vm299, %v641, 0
      %v646 = vsel %vm299, %v640, 0
      %v649 = vsel %vm306, %v627, 0
      %651 = vmatpush.bf16.msra.mxu0 0
      %652 = vmatpush.bf16.msra.mxu0 0
      %653 = vmatpush.bf16.msra.mxu0 0
      %654 = vmatpush.bf16.msra.mxu0 0
      %655 = vmatpush.bf16.msra.mxu0 0
      %656 = vmatpush.bf16.msra.mxu0 0
      %657 = vmatpush.bf16.msra.mxu0 0
      %658 = vmatpush.bf16.msra.mxu0 %v649
      %659 = vmatmul.bf16.gmra.mxu0 %v643
      %v660 = vpop.f32.mrf.mxu0
      %v661 = vadd.f32 0.0, %v660
      %v662 = vpop.f32.mrf.mxu0
      %v663 = vadd.f32 0.0, %v662
      %664 = vmatmul.bf16.gmra.mxu0 %v646
      %v665 = vpop.f32.mrf.mxu0
      %v666 = vadd.f32 0.0, %v665
      %v667 = vpop.f32.mrf.mxu0
      %668 = vdwg.mxu0
      %v669 = vadd.f32 %v619, %v661
      %v670 = vadd.f32 %v620, %v663
      %v671 = vadd.f32 %v621, %v666
      %672 = vst.msk [vmem:[#allocation2] sm:$0xff] %vm280, %v669
      %673 = vst.msk [vmem:[#allocation2 + $0x8] sm:$0xff] %vm280, %v670
      %674 = vst.msk [vmem:[#allocation2 + $0x10] sm:$0xff] %vm280, %v671
      %v675 = vld [vmem:[#allocation2] sm:$0xff]
      %v676 = vld [vmem:[#allocation2 + $0x8] sm:$0xff]
      %v677 = vld [vmem:[#allocation2 + $0x10] sm:$0xff]
      %v678 = vld [vmem:[%s337] sm:$0x8]
      %v679 = vld [vmem:[%s337 + $0x4] sm:$0xf]
      %v680 = vld [vmem:[%s337 + $0x8] sm:$0xf]
      %v681 = vld [vmem:[%s337 + $0xc] sm:$0x7]
      %s682 = scalar_lea.vmem %s1, 28
      %v683 = vld [vmem:[%s682] sm:$0xf]
      %v688 = vunpack.c.l.b16 %v678
      %v689 = vunpack.c.l.b16 %v679
      %v690 = vunpack.c.l.b16 %v680
      %v691 = vunpack.c.l.b16 %v681
      %v692 = vpack.c.b16 %v689, %v688
      %v693 = vpack.c.b16 %v691, %v690
      %v694 = vrot.slane %v692, 3
      %v695 = vrot.slane %v693, 3
      %v696 = vsel %vm638, %v694, %v695
      %v698 = vsel %vm299, %v696, 0
      %v701 = vsel %vm299, %v695, 0
      %v704 = vsel %vm306, %v683, 0
      %706 = vmatpush.bf16.msra.mxu0 0
      %707 = vmatpush.bf16.msra.mxu0 0
      %708 = vmatpush.bf16.msra.mxu0 0
      %709 = vmatpush.bf16.msra.mxu0 0
      %710 = vmatpush.bf16.msra.mxu0 0
      %711 = vmatpush.bf16.msra.mxu0 0
      %712 = vmatpush.bf16.msra.mxu0 0
      %713 = vmatpush.bf16.msra.mxu0 %v704
      %714 = vmatmul.bf16.gmra.mxu0 %v698
      %v715 = vpop.f32.mrf.mxu0
      %v716 = vadd.f32 0.0, %v715
      %v717 = vpop.f32.mrf.mxu0
      %v718 = vadd.f32 0.0, %v717
      %719 = vmatmul.bf16.gmra.mxu0 %v701
      %v720 = vpop.f32.mrf.mxu0
      %v721 = vadd.f32 0.0, %v720
      %v722 = vpop.f32.mrf.mxu0
      %723 = vdwg.mxu0
      %v724 = vadd.f32 %v675, %v716
      %v725 = vadd.f32 %v676, %v718
      %v726 = vadd.f32 %v677, %v721
      %727 = vst.msk [vmem:[#allocation2] sm:$0xff] %vm280, %v724
      %728 = vst.msk [vmem:[#allocation2 + $0x8] sm:$0xff] %vm280, %v725
      %729 = vst.msk [vmem:[#allocation2 + $0x10] sm:$0xff] %vm280, %v726
      %v730 = vld [vmem:[#allocation2] sm:$0xff]
      %v731 = vld [vmem:[#allocation2 + $0x8] sm:$0xff]
      %v732 = vld [vmem:[#allocation2 + $0x10] sm:$0xff]
      %v733 = vld [vmem:[%s273] sm:$0x8]
      %v734 = vld [vmem:[%s273 + $0x4] sm:$0xf]
      %v735 = vld [vmem:[%s273 + $0x8] sm:$0xf]
      %v736 = vld [vmem:[%s273 + $0xc] sm:$0xf]
      %s737 = scalar_lea.vmem %s1, 32
      %v738 = vld [vmem:[%s737] sm:$0xf]
      %v743 = vunpack.c.l.b16 %v733
      %v744 = vunpack.c.l.b16 %v734
      %v745 = vunpack.c.l.b16 %v735
      %v746 = vunpack.c.l.b16 %v736
      %v747 = vpack.c.b16 %v744, %v743
      %v748 = vpack.c.b16 %v746, %v745
      %vm749 = vsmask.f32 4352
      %v751 = vshrl.u32 %v747, 16
      %v753 = vrot.slane %v751, 3
      %v754 = vshll.u32 %v747, 16
      %v756 = vrot.slane %v754, 4
      %v757 = vor.u32 %v753, %v756
      %v759 = vshrl.u32 %v748, 16
      %v761 = vrot.slane %v759, 3
      %v762 = vshll.u32 %v748, 16
      %v764 = vrot.slane %v762, 4
      %v765 = vor.u32 %v761, %v764
      %v766 = vsel %vm749, %v757, %v765
      %v768 = vsel %vm299, %v766, 0
      %v771 = vsel %vm299, %v765, 0
      %v774 = vsel %vm306, %v738, 0
      %776 = vmatpush.bf16.msra.mxu0 0
      %777 = vmatpush.bf16.msra.mxu0 0
      %778 = vmatpush.bf16.msra.mxu0 0
      %779 = vmatpush.bf16.msra.mxu0 0
      %780 = vmatpush.bf16.msra.mxu0 0
      %781 = vmatpush.bf16.msra.mxu0 0
      %782 = vmatpush.bf16.msra.mxu0 0
      %783 = vmatpush.bf16.msra.mxu0 %v774
      %784 = vmatmul.bf16.gmra.mxu0 %v768
      %v785 = vpop.f32.mrf.mxu0
      %v786 = vadd.f32 0.0, %v785
      %v787 = vpop.f32.mrf.mxu0
      %v788 = vadd.f32 0.0, %v787
      %789 = vmatmul.bf16.gmra.mxu0 %v771
      %v790 = vpop.f32.mrf.mxu0
      %v791 = vadd.f32 0.0, %v790
      %v792 = vpop.f32.mrf.mxu0
      %793 = vdwg.mxu0
      %v794 = vadd.f32 %v730, %v786
      %v795 = vadd.f32 %v731, %v788
      %v796 = vadd.f32 %v732, %v791
      %797 = vst.msk [vmem:[#allocation2] sm:$0xff] %vm280, %v794
      %798 = vst.msk [vmem:[#allocation2 + $0x8] sm:$0xff] %vm280, %v795
      %799 = vst.msk [vmem:[#allocation2 + $0x10] sm:$0xff] %vm280, %v796
      %v800 = vld [vmem:[#allocation2] sm:$0xff]
      %v801 = vld [vmem:[#allocation2 + $0x8] sm:$0xff]
      %v802 = vld [vmem:[#allocation2 + $0x10] sm:$0xff]
      %v803 = vld [vmem:[%s2] sm:$0x1]
      %v805 = vperm.slane %v803, 0
      %v807 = vadd.f32 %v800, %v805
      %v808 = vadd.f32 %v801, %v805
      %v809 = vadd.f32 %v802, %v805
      %v810 = vmax.f32 %v807, 0.0
      %v811 = vmax.f32 %v808, 0.0
      %v812 = vmax.f32 %v809, 0.0
      %v813 = vlaneseq
      %v814 = vshrl.u32 %v813, 7
      %v815 = vadd.s32 %v814, 8
      %v816 = vadd.s32 %v814, 16
      %vm817 = vcmp.lt.s32.totalorder %v814, 0
      %v818 = vsub.s32 0, %v814
      %v819 = vsel %vm817, %v818, %v814
      %v820 = vand.u32 %v819, 65535
      %v821 = vshrl.u32 %v819, 16
      %v823 = vmul.u32 %v820, 43691
      %v824 = vmul.u32 %v820, 43690
      %v825 = vmul.u32 %v821, 43691
      %v826 = vmul.u32 %v821, 43690
      %v827 = vshll.u32 %v824, 16
      %v828 = vshrl.u32 %v824, 16
      %v829 = vshll.u32 %v825, 16
      %v830 = vshrl.u32 %v825, 16
      %vm831 = vc.u32 %v823, %v827
      %v832 = vsel %vm831, 1, 0
      %v833 = vadd.s32 %v823, %v827
      %v834 = vadd.s32 %v826, %v832
      %vm835 = vc.u32 %v833, %v829
      %v836 = vsel %vm835, 1, 0
      %v837 = vadd.s32 %v833, %v829
      %v838 = vadd.s32 %v834, %v836
      %v839 = vadd.s32 %v838, %v828
      %v840 = vadd.s32 %v839, %v830
      %v841 = vshrl.u32 %v840, 2
      %v842 = vmul.u32 %v841, 6
      %v843 = vsub.s32 %v819, %v842
      %v844 = vsub.s32 0, %v843
      %v845 = vsel %vm817, %v844, %v843
      %vm846 = vcmp.lt.s32.totalorder %v815, 0
      %v847 = vsub.s32 0, %v815
      %v848 = vsel %vm846, %v847, %v815
      %v849 = vand.u32 %v848, 65535
      %v850 = vshrl.u32 %v848, 16
      %v852 = vmul.u32 %v849, 43691
      %v853 = vmul.u32 %v849, 43690
      %v854 = vmul.u32 %v850, 43691
      %v855 = vmul.u32 %v850, 43690
      %v856 = vshll.u32 %v853, 16
      %v857 = vshrl.u32 %v853, 16
      %v858 = vshll.u32 %v854, 16
      %v859 = vshrl.u32 %v854, 16
      %vm860 = vc.u32 %v852, %v856
      %v861 = vsel %vm860, 1, 0
      %v862 = vadd.s32 %v852, %v856
      %v863 = vadd.s32 %v855, %v861
      %vm864 = vc.u32 %v862, %v858
      %v865 = vsel %vm864, 1, 0
      %v866 = vadd.s32 %v862, %v858
      %v867 = vadd.s32 %v863, %v865
      %v868 = vadd.s32 %v867, %v857
      %v869 = vadd.s32 %v868, %v859
      %v870 = vshrl.u32 %v869, 2
      %v871 = vmul.u32 %v870, 6
      %v872 = vsub.s32 %v848, %v871
      %v873 = vsub.s32 0, %v872
      %v874 = vsel %vm846, %v873, %v872
      %vm875 = vcmp.lt.s32.totalorder %v816, 0
      %v876 = vsub.s32 0, %v816
      %v877 = vsel %vm875, %v876, %v816
      %v878 = vand.u32 %v877, 65535
      %v879 = vshrl.u32 %v877, 16
      %v881 = vmul.u32 %v878, 43691
      %v882 = vmul.u32 %v878, 43690
      %v883 = vmul.u32 %v879, 43691
      %v884 = vmul.u32 %v879, 43690
      %v885 = vshll.u32 %v882, 16
      %v886 = vshrl.u32 %v882, 16
      %v887 = vshll.u32 %v883, 16
      %v888 = vshrl.u32 %v883, 16
      %vm889 = vc.u32 %v881, %v885
      %v890 = vsel %vm889, 1, 0
      %v891 = vadd.s32 %v881, %v885
      %v892 = vadd.s32 %v884, %v890
      %vm893 = vc.u32 %v891, %v887
      %v894 = vsel %vm893, 1, 0
      %v895 = vadd.s32 %v891, %v887
      %v896 = vadd.s32 %v892, %v894
      %v897 = vadd.s32 %v896, %v886
      %v898 = vadd.s32 %v897, %v888
      %v899 = vshrl.u32 %v898, 2
      %v900 = vmul.u32 %v899, 6
      %v901 = vsub.s32 %v877, %v900
      %v902 = vsub.s32 0, %v901
      %v903 = vsel %vm875, %v902, %v901
      %vm904 = vcmp.ne.s32.totalorder %v845, 0
      %vm905 = vcmp.ne.s32.totalorder %v874, 0
      %vm906 = vcmp.ne.s32.totalorder %v903, 0
      %vm907 = vcmp.lt.s32.totalorder %v845, 0
      %vm908 = vcmp.lt.s32.totalorder %v874, 0
      %vm909 = vcmp.lt.s32.totalorder %v903, 0
      %vm910 = vmand %vm907, %vm904
      %vm911 = vmand %vm908, %vm905
      %vm912 = vmand %vm909, %vm906
      %v913 = vadd.s32 %v845, 6
      %v914 = vadd.s32 %v874, 6
      %v915 = vadd.s32 %v903, 6
      %v916 = vsel %vm910, %v913, %v845
      %v917 = vsel %vm911, %v914, %v874
      %v918 = vsel %vm912, %v915, %v903
      %vm919 = vcmp.lt.s32.totalorder %v916, 4
      %vm920 = vcmp.lt.s32.totalorder %v917, 4
      %vm921 = vcmp.lt.s32.totalorder %v918, 4
      %v922 = vsel %vm919, %v810, 0.0
      %v923 = vsel %vm920, %v811, 0.0
      %v924 = vsel %vm921, %v812, 0.0
      %v925 = vpack.c.bf16 %v922, %v922
      %v926 = vpack.c.bf16 %v923, %v923
      %v927 = vpack.c.bf16 %v924, %v924
      %vm928 = vcmask 125952
      %929 = vst.msk [vmem:[#allocation3] sm:$0xf] %vm928, 0
      %930 = vst.msk [vmem:[#allocation3 + $0x4] sm:$0xf] %vm928, 0
      %931 = vst.msk [vmem:[#allocation3 + $0x8] sm:$0xf] %vm928, 0
      %932 = vst.msk [vmem:[#allocation3 + $0xc] sm:$0xf] %vm928, 0
      %933 = vst.msk [vmem:[#allocation3 + $0x10] sm:$0xf] %vm928, 0
      %934 = vst.msk [vmem:[#allocation3 + $0x4] sm:$0xf] %vm928, %v925
      %935 = vst.msk [vmem:[#allocation3 + $0x8] sm:$0xf] %vm928, %v926
      %936 = vst.msk [vmem:[#allocation3 + $0xc] sm:$0xf] %vm928, %v927
      %937 = vst.msk [vmem:[#allocation4] sm:$0xff] %vm299, 0.0
      %938 = vst.msk [vmem:[#allocation4 + $0x8] sm:$0xff] %vm299, 0.0
      %939 = vst.msk [vmem:[#allocation4 + $0x10] sm:$0xff] %vm299, 0.0
      %v940 = vld [vmem:[#allocation4] sm:$0xff]
      %v941 = vld [vmem:[#allocation4 + $0x8] sm:$0xff]
      %v942 = vld [vmem:[#allocation4 + $0x10] sm:$0xff]
      %v943 = vld [vmem:[#allocation3] sm:$0xf]
      %v944 = vld [vmem:[#allocation3 + $0x4] sm:$0xf]
      %v945 = vld [vmem:[#allocation3 + $0x8] sm:$0xf]
      %v946 = vld [vmem:[#allocation3 + $0xc] sm:$0x1]
      %v947 = vld [vmem:[%s3] sm:$0xf]
      %v948 = vld [vmem:[%s3 + $0x4] sm:$0xf]
      %v953 = vunpack.c.l.b16 %v943
      %v954 = vunpack.c.l.b16 %v944
      %v955 = vunpack.c.l.b16 %v945
      %v956 = vunpack.c.l.b16 %v946
      %v957 = vpack.c.b16 %v954, %v953
      %v958 = vpack.c.b16 %v956, %v955
      %v960 = vshrl.u32 %v957, 16
      %v962 = vshll.u32 %v957, 16
      %v964 = vrot.slane %v962, 1
      %v965 = vor.u32 %v960, %v964
      %v967 = vshll.u32 %v958, 16
      %v969 = vrot.slane %v967, 1
      %v970 = vsel %vm403, %v965, %v969
      %v971 = vshrl.u32 %v958, 16
      %v973 = vor.u32 %v971, %v969
      %v976 = vunpack.c.l.b16 %v947
      %v977 = vunpack.c.l.b16 %v948
      %v978 = vpack.c.b16 %v977, %v976
      %v981 = vsel %vm280, %v970, 0
      %v984 = vsel %vm280, %v973, 0
      %986 = vmatpush.bf16.msra.mxu0 0
      %987 = vmatpush.bf16.msra.mxu0 0
      %988 = vmatpush.bf16.msra.mxu0 0
      %989 = vmatpush.bf16.msra.mxu0 0
      %990 = vmatpush.bf16.msra.mxu0 0
      %991 = vmatpush.bf16.msra.mxu0 0
      %992 = vmatpush.bf16.msra.mxu0 0
      %993 = vmatpush.bf16.msra.mxu0 %v978
      %994 = vmatmul.bf16.gmra.mxu0 %v981
      %v995 = vpop.f32.mrf.mxu0
      %v996 = vadd.f32 0.0, %v995
      %v997 = vpop.f32.mrf.mxu0
      %v998 = vadd.f32 0.0, %v997
      %999 = vmatmul.bf16.gmra.mxu0 %v984
      %v1000 = vpop.f32.mrf.mxu0
      %v1001 = vadd.f32 0.0, %v1000
      %v1002 = vpop.f32.mrf.mxu0
      %1003 = vdwg.mxu0
      %v1004 = vadd.f32 %v940, %v996
      %v1005 = vadd.f32 %v941, %v998
      %v1006 = vadd.f32 %v942, %v1001
      %1007 = vst.msk [vmem:[#allocation4] sm:$0xff] %vm299, %v1004
      %1008 = vst.msk [vmem:[#allocation4 + $0x8] sm:$0xff] %vm299, %v1005
      %1009 = vst.msk [vmem:[#allocation4 + $0x10] sm:$0xff] %vm299, %v1006
      %v1010 = vld [vmem:[#allocation4] sm:$0xff]
      %v1011 = vld [vmem:[#allocation4 + $0x8] sm:$0xff]
      %v1012 = vld [vmem:[#allocation4 + $0x10] sm:$0xff]
      %v1013 = vld [vmem:[#allocation3] sm:$0xe]
      %v1014 = vld [vmem:[#allocation3 + $0x4] sm:$0xf]
      %v1015 = vld [vmem:[#allocation3 + $0x8] sm:$0xf]
      %v1016 = vld [vmem:[#allocation3 + $0xc] sm:$0x1]
      %s1017 = scalar_lea.vmem %s3, 8
      %v1018 = vld [vmem:[%s1017] sm:$0xf]
      %v1019 = vld [vmem:[%s1017 + $0x4] sm:$0xf]
      %v1024 = vunpack.c.l.b16 %v1013
      %v1025 = vunpack.c.l.b16 %v1014
      %v1026 = vunpack.c.l.b16 %v1015
      %v1027 = vunpack.c.l.b16 %v1016
      %v1028 = vpack.c.b16 %v1025, %v1024
      %v1029 = vpack.c.b16 %v1027, %v1026
      %vm1030 = vcmask 1046528
      %v1031 = vrot.slane %v1028, 1
      %v1032 = vrot.slane %v1029, 1
      %v1033 = vsel %vm1030, %v1031, %v1032
      %v1036 = vunpack.c.l.b16 %v1018
      %v1037 = vunpack.c.l.b16 %v1019
      %v1038 = vpack.c.b16 %v1037, %v1036
      %v1041 = vsel %vm280, %v1033, 0
      %v1044 = vsel %vm280, %v1032, 0
      %1046 = vmatpush.bf16.msra.mxu0 0
      %1047 = vmatpush.bf16.msra.mxu0 0
      %1048 = vmatpush.bf16.msra.mxu0 0
      %1049 = vmatpush.bf16.msra.mxu0 0
      %1050 = vmatpush.bf16.msra.mxu0 0
      %1051 = vmatpush.bf16.msra.mxu0 0
      %1052 = vmatpush.bf16.msra.mxu0 0
      %1053 = vmatpush.bf16.msra.mxu0 %v1038
      %1054 = vmatmul.bf16.gmra.mxu0 %v1041
      %v1055 = vpop.f32.mrf.mxu0
      %v1056 = vadd.f32 0.0, %v1055
      %v1057 = vpop.f32.mrf.mxu0
      %v1058 = vadd.f32 0.0, %v1057
      %1059 = vmatmul.bf16.gmra.mxu0 %v1044
      %v1060 = vpop.f32.mrf.mxu0
      %v1061 = vadd.f32 0.0, %v1060
      %v1062 = vpop.f32.mrf.mxu0
      %1063 = vdwg.mxu0
      %v1064 = vadd.f32 %v1010, %v1056
      %v1065 = vadd.f32 %v1011, %v1058
      %v1066 = vadd.f32 %v1012, %v1061
      %1067 = vst.msk [vmem:[#allocation4] sm:$0xff] %vm299, %v1064
      %1068 = vst.msk [vmem:[#allocation4 + $0x8] sm:$0xff] %vm299, %v1065
      %1069 = vst.msk [vmem:[#allocation4 + $0x10] sm:$0xff] %vm299, %v1066
      %v1070 = vld [vmem:[#allocation4] sm:$0xff]
      %v1071 = vld [vmem:[#allocation4 + $0x8] sm:$0xff]
      %v1072 = vld [vmem:[#allocation4 + $0x10] sm:$0xff]
      %v1073 = vld [vmem:[#allocation3] sm:$0xe]
      %v1074 = vld [vmem:[#allocation3 + $0x4] sm:$0xf]
      %v1075 = vld [vmem:[#allocation3 + $0x8] sm:$0xf]
      %v1076 = vld [vmem:[#allocation3 + $0xc] sm:$0x3]
      %s1077 = scalar_lea.vmem %s3, 16
      %v1078 = vld [vmem:[%s1077] sm:$0xf]
      %v1079 = vld [vmem:[%s1077 + $0x4] sm:$0xf]
      %v1084 = vunpack.c.l.b16 %v1073
      %v1085 = vunpack.c.l.b16 %v1074
      %v1086 = vunpack.c.l.b16 %v1075
      %v1087 = vunpack.c.l.b16 %v1076
      %v1088 = vpack.c.b16 %v1085, %v1084
      %v1089 = vpack.c.b16 %v1087, %v1086
      %vm1090 = vsmask.f32 6400
      %v1092 = vshrl.u32 %v1088, 16
      %v1094 = vrot.slane %v1092, 1
      %v1095 = vshll.u32 %v1088, 16
      %v1097 = vrot.slane %v1095, 2
      %v1098 = vor.u32 %v1094, %v1097
      %v1100 = vshrl.u32 %v1089, 16
      %v1102 = vrot.slane %v1100, 1
      %v1103 = vshll.u32 %v1089, 16
      %v1105 = vrot.slane %v1103, 2
      %v1106 = vor.u32 %v1102, %v1105
      %v1107 = vsel %vm1090, %v1098, %v1106
      %v1110 = vunpack.c.l.b16 %v1078
      %v1111 = vunpack.c.l.b16 %v1079
      %v1112 = vpack.c.b16 %v1111, %v1110
      %v1115 = vsel %vm280, %v1107, 0
      %v1118 = vsel %vm280, %v1106, 0
      %1120 = vmatpush.bf16.msra.mxu0 0
      %1121 = vmatpush.bf16.msra.mxu0 0
      %1122 = vmatpush.bf16.msra.mxu0 0
      %1123 = vmatpush.bf16.msra.mxu0 0
      %1124 = vmatpush.bf16.msra.mxu0 0
      %1125 = vmatpush.bf16.msra.mxu0 0
      %1126 = vmatpush.bf16.msra.mxu0 0
      %1127 = vmatpush.bf16.msra.mxu0 %v1112
      %1128 = vmatmul.bf16.gmra.mxu0 %v1115
      %v1129 = vpop.f32.mrf.mxu0
      %v1130 = vadd.f32 0.0, %v1129
      %v1131 = vpop.f32.mrf.mxu0
      %v1132 = vadd.f32 0.0, %v1131
      %1133 = vmatmul.bf16.gmra.mxu0 %v1118
      %v1134 = vpop.f32.mrf.mxu0
      %v1135 = vadd.f32 0.0, %v1134
      %v1136 = vpop.f32.mrf.mxu0
      %1137 = vdwg.mxu0
      %v1138 = vadd.f32 %v1070, %v1130
      %v1139 = vadd.f32 %v1071, %v1132
      %v1140 = vadd.f32 %v1072, %v1135
      %1141 = vst.msk [vmem:[#allocation4] sm:$0xff] %vm299, %v1138
      %1142 = vst.msk [vmem:[#allocation4 + $0x8] sm:$0xff] %vm299, %v1139
      %1143 = vst.msk [vmem:[#allocation4 + $0x10] sm:$0xff] %vm299, %v1140
      %v1144 = vld [vmem:[#allocation4] sm:$0xff]
      %v1145 = vld [vmem:[#allocation4 + $0x8] sm:$0xff]
      %v1146 = vld [vmem:[#allocation4 + $0x10] sm:$0xff]
      %v1147 = vld [vmem:[#allocation3] sm:$0x8]
      %v1148 = vld [vmem:[#allocation3 + $0x4] sm:$0xf]
      %v1149 = vld [vmem:[#allocation3 + $0x8] sm:$0xf]
      %v1150 = vld [vmem:[#allocation3 + $0xc] sm:$0xf]
      %s1151 = scalar_lea.vmem %s3, 24
      %v1152 = vld [vmem:[%s1151] sm:$0xf]
      %v1153 = vld [vmem:[%s1151 + $0x4] sm:$0xf]
      %v1158 = vunpack.c.l.b16 %v1147
      %v1159 = vunpack.c.l.b16 %v1148
      %v1160 = vunpack.c.l.b16 %v1149
      %v1161 = vunpack.c.l.b16 %v1150
      %v1162 = vpack.c.b16 %v1159, %v1158
      %v1163 = vpack.c.b16 %v1161, %v1160
      %v1165 = vshrl.u32 %v1162, 16
      %v1167 = vrot.slane %v1165, 3
      %v1168 = vshll.u32 %v1162, 16
      %v1170 = vrot.slane %v1168, 4
      %v1171 = vor.u32 %v1167, %v1170
      %v1173 = vshrl.u32 %v1163, 16
      %v1175 = vrot.slane %v1173, 3
      %v1176 = vshll.u32 %v1163, 16
      %v1178 = vrot.slane %v1176, 4
      %v1179 = vor.u32 %v1175, %v1178
      %v1180 = vsel %vm749, %v1171, %v1179
      %v1183 = vunpack.c.l.b16 %v1152
      %v1184 = vunpack.c.l.b16 %v1153
      %v1185 = vpack.c.b16 %v1184, %v1183
      %v1188 = vsel %vm280, %v1180, 0
      %v1191 = vsel %vm280, %v1179, 0
      %1193 = vmatpush.bf16.msra.mxu0 0
      %1194 = vmatpush.bf16.msra.mxu0 0
      %1195 = vmatpush.bf16.msra.mxu0 0
      %1196 = vmatpush.bf16.msra.mxu0 0
      %1197 = vmatpush.bf16.msra.mxu0 0
      %1198 = vmatpush.bf16.msra.mxu0 0
      %1199 = vmatpush.bf16.msra.mxu0 0
      %1200 = vmatpush.bf16.msra.mxu0 %v1185
      %1201 = vmatmul.bf16.gmra.mxu0 %v1188
      %v1202 = vpop.f32.mrf.mxu0
      %v1203 = vadd.f32 0.0, %v1202
      %v1204 = vpop.f32.mrf.mxu0
      %v1205 = vadd.f32 0.0, %v1204
      %1206 = vmatmul.bf16.gmra.mxu0 %v1191
      %v1207 = vpop.f32.mrf.mxu0
      %v1208 = vadd.f32 0.0, %v1207
      %v1209 = vpop.f32.mrf.mxu0
      %1210 = vdwg.mxu0
      %v1211 = vadd.f32 %v1144, %v1203
      %v1212 = vadd.f32 %v1145, %v1205
      %v1213 = vadd.f32 %v1146, %v1208
      %1214 = vst.msk [vmem:[#allocation4] sm:$0xff] %vm299, %v1211
      %1215 = vst.msk [vmem:[#allocation4 + $0x8] sm:$0xff] %vm299, %v1212
      %1216 = vst.msk [vmem:[#allocation4 + $0x10] sm:$0xff] %vm299, %v1213
      %v1217 = vld [vmem:[#allocation4] sm:$0xff]
      %v1218 = vld [vmem:[#allocation4 + $0x8] sm:$0xff]
      %v1219 = vld [vmem:[#allocation4 + $0x10] sm:$0xff]
      %v1220 = vld [vmem:[#allocation3 + $0x4] sm:$0xf]
      %v1221 = vld [vmem:[#allocation3 + $0x8] sm:$0xf]
      %v1222 = vld [vmem:[#allocation3 + $0xc] sm:$0xf]
      %s1223 = scalar_lea.vmem %s3, 32
      %v1224 = vld [vmem:[%s1223] sm:$0xf]
      %v1225 = vld [vmem:[%s1223 + $0x4] sm:$0xf]
      %v1229 = vunpack.c.l.b16 %v1220
      %v1230 = vunpack.c.l.b16 %v1221
      %v1231 = vunpack.c.l.b16 %v1222
      %v1232 = vpack.c.b16 %v1230, %v1229
      %v1233 = vpack.c.b16 %v1231, %v1231
      %v1236 = vunpack.c.l.b16 %v1224
      %v1237 = vunpack.c.l.b16 %v1225
      %v1238 = vpack.c.b16 %v1237, %v1236
      %v1241 = vsel %vm280, %v1232, 0
      %v1244 = vsel %vm280, %v1233, 0
      %1246 = vmatpush.bf16.msra.mxu0 0
      %1247 = vmatpush.bf16.msra.mxu0 0
      %1248 = vmatpush.bf16.msra.mxu0 0
      %1249 = vmatpush.bf16.msra.mxu0 0
      %1250 = vmatpush.bf16.msra.mxu0 0
      %1251 = vmatpush.bf16.msra.mxu0 0
      %1252 = vmatpush.bf16.msra.mxu0 0
      %1253 = vmatpush.bf16.msra.mxu0 %v1238
      %1254 = vmatmul.bf16.gmra.mxu0 %v1241
      %v1255 = vpop.f32.mrf.mxu0
      %v1256 = vadd.f32 0.0, %v1255
      %v1257 = vpop.f32.mrf.mxu0
      %v1258 = vadd.f32 0.0, %v1257
      %1259 = vmatmul.bf16.gmra.mxu0 %v1244
      %v1260 = vpop.f32.mrf.mxu0
      %v1261 = vadd.f32 0.0, %v1260
      %v1262 = vpop.f32.mrf.mxu0
      %1263 = vdwg.mxu0
      %v1264 = vadd.f32 %v1217, %v1256
      %v1265 = vadd.f32 %v1218, %v1258
      %v1266 = vadd.f32 %v1219, %v1261
      %1267 = vst.msk [vmem:[#allocation4] sm:$0xff] %vm299, %v1264
      %1268 = vst.msk [vmem:[#allocation4 + $0x8] sm:$0xff] %vm299, %v1265
      %1269 = vst.msk [vmem:[#allocation4 + $0x10] sm:$0xff] %vm299, %v1266
      %v1270 = vld [vmem:[#allocation4] sm:$0xff]
      %v1271 = vld [vmem:[#allocation4 + $0x8] sm:$0xff]
      %v1272 = vld [vmem:[#allocation4 + $0x10] sm:$0xff]
      %v1273 = vld [vmem:[#allocation3 + $0x4] sm:$0xf]
      %v1274 = vld [vmem:[#allocation3 + $0x8] sm:$0xf]
      %v1275 = vld [vmem:[#allocation3 + $0xc] sm:$0xf]
      %v1276 = vld [vmem:[#allocation3 + $0x10] sm:$0x1]
      %s1277 = scalar_lea.vmem %s3, 40
      %v1278 = vld [vmem:[%s1277] sm:$0xf]
      %v1279 = vld [vmem:[%s1277 + $0x4] sm:$0xf]
      %v1284 = vunpack.c.l.b16 %v1273
      %v1285 = vunpack.c.l.b16 %v1274
      %v1286 = vunpack.c.l.b16 %v1275
      %v1287 = vunpack.c.l.b16 %v1276
      %v1288 = vpack.c.b16 %v1285, %v1284
      %v1289 = vpack.c.b16 %v1287, %v1286
      %v1291 = vshrl.u32 %v1288, 16
      %v1293 = vshll.u32 %v1288, 16
      %v1295 = vrot.slane %v1293, 1
      %v1296 = vor.u32 %v1291, %v1295
      %v1298 = vshll.u32 %v1289, 16
      %v1300 = vrot.slane %v1298, 1
      %v1301 = vsel %vm403, %v1296, %v1300
      %v1302 = vshrl.u32 %v1289, 16
      %v1304 = vor.u32 %v1302, %v1300
      %v1307 = vunpack.c.l.b16 %v1278
      %v1308 = vunpack.c.l.b16 %v1279
      %v1309 = vpack.c.b16 %v1308, %v1307
      %v1312 = vsel %vm280, %v1301, 0
      %v1315 = vsel %vm280, %v1304, 0
      %1317 = vmatpush.bf16.msra.mxu0 0
      %1318 = vmatpush.bf16.msra.mxu0 0
      %1319 = vmatpush.bf16.msra.mxu0 0
      %1320 = vmatpush.bf16.msra.mxu0 0
      %1321 = vmatpush.bf16.msra.mxu0 0
      %1322 = vmatpush.bf16.msra.mxu0 0
      %1323 = vmatpush.bf16.msra.mxu0 0
      %1324 = vmatpush.bf16.msra.mxu0 %v1309
      %1325 = vmatmul.bf16.gmra.mxu0 %v1312
      %v1326 = vpop.f32.mrf.mxu0
      %v1327 = vadd.f32 0.0, %v1326
      %v1328 = vpop.f32.mrf.mxu0
      %v1329 = vadd.f32 0.0, %v1328
      %1330 = vmatmul.bf16.gmra.mxu0 %v1315
      %v1331 = vpop.f32.mrf.mxu0
      %v1332 = vadd.f32 0.0, %v1331
      %v1333 = vpop.f32.mrf.mxu0
      %1334 = vdwg.mxu0
      %v1335 = vadd.f32 %v1270, %v1327
      %v1336 = vadd.f32 %v1271, %v1329
      %v1337 = vadd.f32 %v1272, %v1332
      %1338 = vst.msk [vmem:[#allocation4] sm:$0xff] %vm299, %v1335
      %1339 = vst.msk [vmem:[#allocation4 + $0x8] sm:$0xff] %vm299, %v1336
      %1340 = vst.msk [vmem:[#allocation4 + $0x10] sm:$0xff] %vm299, %v1337
      %v1341 = vld [vmem:[#allocation4] sm:$0xff]
      %v1342 = vld [vmem:[#allocation4 + $0x8] sm:$0xff]
      %v1343 = vld [vmem:[#allocation4 + $0x10] sm:$0xff]
      %v1344 = vld [vmem:[#allocation3 + $0x4] sm:$0xc]
      %v1345 = vld [vmem:[#allocation3 + $0x8] sm:$0xf]
      %v1346 = vld [vmem:[#allocation3 + $0xc] sm:$0xf]
      %v1347 = vld [vmem:[#allocation3 + $0x10] sm:$0x7]
      %s1348 = scalar_lea.vmem %s3, 48
      %v1349 = vld [vmem:[%s1348] sm:$0xf]
      %v1350 = vld [vmem:[%s1348 + $0x4] sm:$0xf]
      %v1355 = vunpack.c.l.b16 %v1344
      %v1356 = vunpack.c.l.b16 %v1345
      %v1357 = vunpack.c.l.b16 %v1346
      %v1358 = vunpack.c.l.b16 %v1347
      %v1359 = vpack.c.b16 %v1356, %v1355
      %v1360 = vpack.c.b16 %v1358, %v1357
      %vm1361 = vsmask.f32 5376
      %v1363 = vshrl.u32 %v1359, 16
      %v1365 = vrot.slane %v1363, 2
      %v1366 = vshll.u32 %v1359, 16
      %v1368 = vrot.slane %v1366, 3
      %v1369 = vor.u32 %v1365, %v1368
      %v1371 = vshrl.u32 %v1360, 16
      %v1373 = vrot.slane %v1371, 2
      %v1374 = vshll.u32 %v1360, 16
      %v1376 = vrot.slane %v1374, 3
      %v1377 = vor.u32 %v1373, %v1376
      %v1378 = vsel %vm1361, %v1369, %v1377
      %v1381 = vunpack.c.l.b16 %v1349
      %v1382 = vunpack.c.l.b16 %v1350
      %v1383 = vpack.c.b16 %v1382, %v1381
      %v1386 = vsel %vm280, %v1378, 0
      %v1389 = vsel %vm280, %v1377, 0
      %1391 = vmatpush.bf16.msra.mxu0 0
      %1392 = vmatpush.bf16.msra.mxu0 0
      %1393 = vmatpush.bf16.msra.mxu0 0
      %1394 = vmatpush.bf16.msra.mxu0 0
      %1395 = vmatpush.bf16.msra.mxu0 0
      %1396 = vmatpush.bf16.msra.mxu0 0
      %1397 = vmatpush.bf16.msra.mxu0 0
      %1398 = vmatpush.bf16.msra.mxu0 %v1383
      %1399 = vmatmul.bf16.gmra.mxu0 %v1386
      %v1400 = vpop.f32.mrf.mxu0
      %v1401 = vadd.f32 0.0, %v1400
      %v1402 = vpop.f32.mrf.mxu0
      %v1403 = vadd.f32 0.0, %v1402
      %1404 = vmatmul.bf16.gmra.mxu0 %v1389
      %v1405 = vpop.f32.mrf.mxu0
      %v1406 = vadd.f32 0.0, %v1405
      %v1407 = vpop.f32.mrf.mxu0
      %1408 = vdwg.mxu0
      %v1409 = vadd.f32 %v1341, %v1401
      %v1410 = vadd.f32 %v1342, %v1403
      %v1411 = vadd.f32 %v1343, %v1406
      %1412 = vst.msk [vmem:[#allocation4] sm:$0xff] %vm299, %v1409
      %1413 = vst.msk [vmem:[#allocation4 + $0x8] sm:$0xff] %vm299, %v1410
      %1414 = vst.msk [vmem:[#allocation4 + $0x10] sm:$0xff] %vm299, %v1411
      %v1415 = vld [vmem:[#allocation4] sm:$0xff]
      %v1416 = vld [vmem:[#allocation4 + $0x8] sm:$0xff]
      %v1417 = vld [vmem:[#allocation4 + $0x10] sm:$0xff]
      %v1418 = vld [vmem:[#allocation3 + $0x4] sm:$0x8]
      %v1419 = vld [vmem:[#allocation3 + $0x8] sm:$0xf]
      %v1420 = vld [vmem:[#allocation3 + $0xc] sm:$0xf]
      %v1421 = vld [vmem:[#allocation3 + $0x10] sm:$0x7]
      %s1422 = scalar_lea.vmem %s3, 56
      %v1423 = vld [vmem:[%s1422] sm:$0xf]
      %v1424 = vld [vmem:[%s1422 + $0x4] sm:$0xf]
      %v1429 = vunpack.c.l.b16 %v1418
      %v1430 = vunpack.c.l.b16 %v1419
      %v1431 = vunpack.c.l.b16 %v1420
      %v1432 = vunpack.c.l.b16 %v1421
      %v1433 = vpack.c.b16 %v1430, %v1429
      %v1434 = vpack.c.b16 %v1432, %v1431
      %v1435 = vrot.slane %v1433, 3
      %v1436 = vrot.slane %v1434, 3
      %v1437 = vsel %vm638, %v1435, %v1436
      %v1440 = vunpack.c.l.b16 %v1423
      %v1441 = vunpack.c.l.b16 %v1424
      %v1442 = vpack.c.b16 %v1441, %v1440
      %v1445 = vsel %vm280, %v1437, 0
      %v1448 = vsel %vm280, %v1436, 0
      %1450 = vmatpush.bf16.msra.mxu0 0
      %1451 = vmatpush.bf16.msra.mxu0 0
      %1452 = vmatpush.bf16.msra.mxu0 0
      %1453 = vmatpush.bf16.msra.mxu0 0
      %1454 = vmatpush.bf16.msra.mxu0 0
      %1455 = vmatpush.bf16.msra.mxu0 0
      %1456 = vmatpush.bf16.msra.mxu0 0
      %1457 = vmatpush.bf16.msra.mxu0 %v1442
      %1458 = vmatmul.bf16.gmra.mxu0 %v1445
      %v1459 = vpop.f32.mrf.mxu0
      %v1460 = vadd.f32 0.0, %v1459
      %v1461 = vpop.f32.mrf.mxu0
      %v1462 = vadd.f32 0.0, %v1461
      %1463 = vmatmul.bf16.gmra.mxu0 %v1448
      %v1464 = vpop.f32.mrf.mxu0
      %v1465 = vadd.f32 0.0, %v1464
      %v1466 = vpop.f32.mrf.mxu0
      %1467 = vdwg.mxu0
      %v1468 = vadd.f32 %v1415, %v1460
      %v1469 = vadd.f32 %v1416, %v1462
      %v1470 = vadd.f32 %v1417, %v1465
      %1471 = vst.msk [vmem:[#allocation4] sm:$0xff] %vm299, %v1468
      %1472 = vst.msk [vmem:[#allocation4 + $0x8] sm:$0xff] %vm299, %v1469
      %1473 = vst.msk [vmem:[#allocation4 + $0x10] sm:$0xff] %vm299, %v1470
      %v1474 = vld [vmem:[#allocation4] sm:$0xff]
      %v1475 = vld [vmem:[#allocation4 + $0x8] sm:$0xff]
      %v1476 = vld [vmem:[#allocation4 + $0x10] sm:$0xff]
      %v1477 = vld [vmem:[#allocation3 + $0x4] sm:$0x8]
      %v1478 = vld [vmem:[#allocation3 + $0x8] sm:$0xf]
      %v1479 = vld [vmem:[#allocation3 + $0xc] sm:$0xf]
      %v1480 = vld [vmem:[#allocation3 + $0x10] sm:$0xf]
      %s1481 = scalar_lea.vmem %s3, 64
      %v1482 = vld [vmem:[%s1481] sm:$0xf]
      %v1483 = vld [vmem:[%s1481 + $0x4] sm:$0xf]
      %v1488 = vunpack.c.l.b16 %v1477
      %v1489 = vunpack.c.l.b16 %v1478
      %v1490 = vunpack.c.l.b16 %v1479
      %v1491 = vunpack.c.l.b16 %v1480
      %v1492 = vpack.c.b16 %v1489, %v1488
      %v1493 = vpack.c.b16 %v1491, %v1490
      %v1495 = vshrl.u32 %v1492, 16
      %v1497 = vrot.slane %v1495, 3
      %v1498 = vshll.u32 %v1492, 16
      %v1500 = vrot.slane %v1498, 4
      %v1501 = vor.u32 %v1497, %v1500
      %v1503 = vshrl.u32 %v1493, 16
      %v1505 = vrot.slane %v1503, 3
      %v1506 = vshll.u32 %v1493, 16
      %v1508 = vrot.slane %v1506, 4
      %v1509 = vor.u32 %v1505, %v1508
      %v1510 = vsel %vm749, %v1501, %v1509
      %v1513 = vunpack.c.l.b16 %v1482
      %v1514 = vunpack.c.l.b16 %v1483
      %v1515 = vpack.c.b16 %v1514, %v1513
      %v1518 = vsel %vm280, %v1510, 0
      %v1521 = vsel %vm280, %v1509, 0
      %1523 = vmatpush.bf16.msra.mxu0 0
      %1524 = vmatpush.bf16.msra.mxu0 0
      %1525 = vmatpush.bf16.msra.mxu0 0
      %1526 = vmatpush.bf16.msra.mxu0 0
      %1527 = vmatpush.bf16.msra.mxu0 0
      %1528 = vmatpush.bf16.msra.mxu0 0
      %1529 = vmatpush.bf16.msra.mxu0 0
      %1530 = vmatpush.bf16.msra.mxu0 %v1515
      %1531 = vmatmul.bf16.gmra.mxu0 %v1518
      %v1532 = vpop.f32.mrf.mxu0
      %v1533 = vadd.f32 0.0, %v1532
      %v1534 = vpop.f32.mrf.mxu0
      %v1535 = vadd.f32 0.0, %v1534
      %1536 = vmatmul.bf16.gmra.mxu0 %v1521
      %v1537 = vpop.f32.mrf.mxu0
      %v1538 = vadd.f32 0.0, %v1537
      %v1539 = vpop.f32.mrf.mxu0
      %1540 = vdwg.mxu0
      %v1541 = vadd.f32 %v1474, %v1533
      %v1542 = vadd.f32 %v1475, %v1535
      %v1543 = vadd.f32 %v1476, %v1538
      %1544 = vst.msk [vmem:[#allocation4] sm:$0xff] %vm299, %v1541
      %1545 = vst.msk [vmem:[#allocation4 + $0x8] sm:$0xff] %vm299, %v1542
      %1546 = vst.msk [vmem:[#allocation4 + $0x10] sm:$0xff] %vm299, %v1543
      %v1547 = vld [vmem:[#allocation4] sm:$0xff]
      %v1548 = vld [vmem:[#allocation4 + $0x8] sm:$0xff]
      %v1549 = vld [vmem:[#allocation4 + $0x10] sm:$0xff]
      %v1550 = vld [vmem:[%s4] sm:$0x1]
      %v1552 = vperm.slane %v1550, 0
      %v1554 = vadd.f32 %v1547, %v1552
      %v1555 = vadd.f32 %v1548, %v1552
      %v1556 = vadd.f32 %v1549, %v1552
      %v1557 = vmax.f32 %v1554, 0.0
      %v1558 = vmax.f32 %v1555, 0.0
      %v1559 = vmax.f32 %v1556, 0.0
      %v1560 = vpack.c.bf16 %v1558, %v1557
      %v1561 = vpack.c.bf16 %v1559, %v1559
      %v1562 = vld [vmem:[%s5] sm:$0xf]
      %v1563 = vld [vmem:[%s6] sm:$0x1]
      %v1565 = vperm.slane %v1563, 0
      %v1568 = vsel %vm299, %v1560, 0
      %v1571 = vsel %vm299, %v1561, 0
      %v1574 = vsel %vm306, %v1562, 0
      %1576 = vmatpush.bf16.msra.mxu0 0
      %1577 = vmatpush.bf16.msra.mxu0 0
      %1578 = vmatpush.bf16.msra.mxu0 0
      %1579 = vmatpush.bf16.msra.mxu0 0
      %1580 = vmatpush.bf16.msra.mxu0 0
      %1581 = vmatpush.bf16.msra.mxu0 0
      %1582 = vmatpush.bf16.msra.mxu0 0
      %1583 = vmatpush.bf16.msra.mxu0 %v1574
      %1584 = vmatmul.bf16.gmra.mxu0 %v1568
      %v1585 = vpop.f32.mrf.mxu0
      %v1586 = vadd.f32 %v1565, %v1585
      %v1587 = vpop.f32.mrf.mxu0
      %v1588 = vadd.f32 %v1565, %v1587
      %1589 = vmatmul.bf16.gmra.mxu0 %v1571
      %v1590 = vpop.f32.mrf.mxu0
      %v1591 = vadd.f32 %v1565, %v1590
      %v1592 = vpop.f32.mrf.mxu0
      %1593 = vdwg.mxu0
      %v1594 = vsub.f32 0.0, %v1586
      %v1595 = vsub.f32 0.0, %v1588
      %v1596 = vsub.f32 0.0, %v1591
      %v1597 = vmul.f32 %v1594, 1.442695
      %v1598 = vpow.pop %v1597
      %v1599 = vmul.f32 %v1595, 1.442695
      %v1600 = vpow.pop %v1599
      %v1601 = vmul.f32 %v1596, 1.442695
      %v1602 = vpow.pop %v1601
      %v1603 = vadd.f32 %v1598, 1.0
      %v1604 = vadd.f32 %v1600, 1.0
      %v1605 = vadd.f32 %v1602, 1.0
      %v1606 = vrcp.pop %v1603
      %v1607 = vmul.f32 %v1603, %v1606
      %v1608 = vsub.f32 1.0, %v1607
      %v1609 = vmul.f32 %v1606, %v1608
      %v1610 = vadd.f32 %v1606, %v1609
      %vm1611 = vweird.f32 %v1603
      %vm1612 = vweird.f32 %v1606
      %vm1613 = vmor %vm1611, %vm1612
      %v1614 = vsel %vm1613, %v1606, %v1610
      %v1615 = vand.u32 2147483647, %v1603
      %vm1616 = vcmp.eq.f32.partialorder %v1615, 8.507059e+37
      %v1617 = vand.u32 %v1603, 2147483648
      %v1618 = vor.u32 1.1754944e-38, %v1617
      %v1619 = vsel %vm1616, %v1618, %v1614
      %v1620 = vmul.f32 1.0, %v1619
      %v1621 = vrcp.pop %v1604
      %v1622 = vmul.f32 %v1604, %v1621
      %v1623 = vsub.f32 1.0, %v1622
      %v1624 = vmul.f32 %v1621, %v1623
      %v1625 = vadd.f32 %v1621, %v1624
      %vm1626 = vweird.f32 %v1604
      %vm1627 = vweird.f32 %v1621
      %vm1628 = vmor %vm1626, %vm1627
      %v1629 = vsel %vm1628, %v1621, %v1625
      %v1630 = vand.u32 2147483647, %v1604
      %vm1631 = vcmp.eq.f32.partialorder %v1630, 8.507059e+37
      %v1632 = vand.u32 %v1604, 2147483648
      %v1633 = vor.u32 1.1754944e-38, %v1632
      %v1634 = vsel %vm1631, %v1633, %v1629
      %v1635 = vmul.f32 1.0, %v1634
      %v1636 = vrcp.pop %v1605
      %v1637 = vmul.f32 %v1605, %v1636
      %v1638 = vsub.f32 1.0, %v1637
      %v1639 = vmul.f32 %v1636, %v1638
      %v1640 = vadd.f32 %v1636, %v1639
      %vm1641 = vweird.f32 %v1605
      %vm1642 = vweird.f32 %v1636
      %vm1643 = vmor %vm1641, %vm1642
      %v1644 = vsel %vm1643, %v1636, %v1640
      %v1645 = vand.u32 2147483647, %v1605
      %vm1646 = vcmp.eq.f32.partialorder %v1645, 8.507059e+37
      %v1647 = vand.u32 %v1605, 2147483648
      %v1648 = vor.u32 1.1754944e-38, %v1647
      %v1649 = vsel %vm1646, %v1648, %v1644
      %v1650 = vmul.f32 1.0, %v1649
      %vm1651 = vcmask 7168
      %1652 = vst.msk [vmem:[%s278] sm:$0xff] %vm1651, %v1620
      %1653 = vst.msk [vmem:[%s278 + $0x8] sm:$0xff] %vm1651, %v1635
      %1654 = vst.msk [vmem:[%s278 + $0x10] sm:$0xff] %vm1651, %v1650
      %p1655 = scmp.lt.s32.totalorder %s18, 1
      %s1656 = scalar_select %p1655, %s18, 1
      %s1657 = smul.addr %s1656, 3
      %s1658 = smul.addr %s1657, 8
      %s1659 = scalar_lea.vmem %s7, %s1658
      // Predicated region
      $region49: #{seg_detector_forward.3} parent=47 // pred_check
        %p1660 = pneg %p188
      $region50: #{seg_detector_forward.3} parent=47 // pred_check_branch
        %1662 = sbr.rel (%p1660) target = $region52
      $region51: #{seg_detector_forward.3} parent=47 // pred_region
        _
      $region52: #{seg_detector_forward.3} parent=47 // pred_fallthru
        _
    $region48: #{seg_detector_forward.3} parent=5 // pred_fallthru
      _
    %p1663 = scmp.le.s32.totalorder 2, %s13
    // Predicated region
    $region53: #{seg_detector_forward.3} parent=5 // pred_check
      %p1664 = pneg %p1663
    $region54: #{seg_detector_forward.3} parent=5 // pred_check_branch
      %1666 = sbr.rel (%p1664) target = $region56
    $region55: #{seg_detector_forward.3} parent=5 // pred_region
      %s1667 = ssub.s32 %s13, 2
      // Predicated region
      $region57: #{seg_detector_forward.3} parent=55 // pred_check
        %p1668 = pneg %p194
      $region58: #{seg_detector_forward.3} parent=55 // pred_check_branch
        %1670 = sbr.rel (%p1668) target = $region60
      $region59: #{seg_detector_forward.3} parent=55 // pred_region
        %p1671 = scmp.lt.s32.totalorder %s19, 1
        %s1672 = scalar_select %p1671, %s19, 1
        %s1673 = smul.addr %s1672, 3
        %s1674 = smul.addr %s1673, 8
        %s1675 = scalar_lea.vmem %s7, %s1674
      $region60: #{seg_detector_forward.3} parent=55 // pred_fallthru
        _
    $region56: #{seg_detector_forward.3} parent=5 // pred_fallthru
      _
  $region6: #{seg_detector_forward.3} parent=0 // loop_footer
    %s17 = sadd.s32 1, %s13
  $region7: #{seg_detector_forward.3} parent=0 // loop_footer_branch
    %12 = sbr.rel target = $region3
  $region8: #{seg_detector_forward.3} parent=0 // loop_exit
    _

</llo_original>
